<compile_context>
chip_gen: v7x
topology: tpu7x:2x2x1
jax: 0.10.0
libtpu: 0.0.40
codegen_flags: <defaults>
</compile_context>

<pallas_src>
import functools

import jax
import jax.numpy as jnp
from jax.experimental import pallas as pl
from jax.experimental.pallas import tpu as pltpu

GL = 128   # single 128-lane block holding all four gates (and the padded hidden state)


def _lstm_cell(g, c, H):
    """One LSTM cell update on a (BP, 128) packed-gate slab.

    Lane layout of g: [ i(H) | f(H) | o(H) | g_cell(H) | zeros ].
    Returns h_new, c_new with the valid state in lanes [0, H); lanes >= H hold bounded
    garbage that is nullified downstream by zero weight rows.
    """
    sig = jax.nn.sigmoid(g)                      # one EUP pass over the full vreg
    th = jnp.tanh(g)                             # one EUP pass over the full vreg
    i = sig                                      # i gate already aligned at lane 0
    f = pltpu.roll(sig, GL - H, axis=1)          # bring lanes [H, 2H) to lane 0  (XLU)
    o = pltpu.roll(sig, GL - 2 * H, axis=1)      # bring lanes [2H, 3H) to lane 0 (XLU)
    gc = pltpu.roll(th, GL - 3 * H, axis=1)      # bring lanes [3H, 4H) to lane 0 (XLU)
    c_new = f * c + i * gc
    h_new = o * jnp.tanh(c_new)
    return h_new, c_new


def _lstm_head_kernel(x2d_ref, wih1_ref, b1_ref, whh1_ref,
                      wih2_ref, whh2_ref, b2_ref,
                      wfc1_ref, bfc1_ref, wfc2_ref, bfc2_ref,
                      out_ref, *, H1, H2):
    BP = out_ref.shape[0]                        # batch padded to a multiple of 8 sublanes
    T = x2d_ref.shape[0] // BP

    # Hoisted layer-1 input projection over ALL timesteps (bias folded in): one MXU op, N=128.
    G1 = (jnp.dot(x2d_ref[...], wih1_ref[...], preferred_element_type=jnp.float32)
          + b1_ref[...])                                      # (T*BP, 128)

    whh1 = whh1_ref[...]                                      # (128, 128), resident
    wih2 = wih2_ref[...]                                      # (128, 128), resident
    whh2 = whh2_ref[...]                                      # (128, 128), resident
    b2 = jnp.broadcast_to(b2_ref[...], (BP, GL))              # broadcast hoisted out of loop

    h1 = jnp.zeros((BP, GL), jnp.float32)
    c1 = jnp.zeros((BP, GL), jnp.float32)
    h2 = jnp.zeros((BP, GL), jnp.float32)
    c2 = jnp.zeros((BP, GL), jnp.float32)

    # Fully-unrolled time loop (T=8, static): the scheduler can overlap layer-2(t-1) work with
    # layer-1(t) MXU/EUP latency.  For much larger T, switch to lax.fori_loop(..., unroll=True)
    # to bound vreg live ranges.
    for t in range(T):
        g1 = (G1[t * BP:(t + 1) * BP, :]                       # sublane-aligned 8-row slab
              + jnp.dot(h1, whh1, preferred_element_type=jnp.float32))
        h1, c1 = _lstm_cell(g1, c1, H1)
        # Layer 2: two independent K=128 dots (no concat, single MXU pass each on every gen).
        g2 = (jnp.dot(h1, wih2, preferred_element_type=jnp.float32)
              + jnp.dot(h2, whh2, preferred_element_type=jnp.float32)
              + b2)
        h2, c2 = _lstm_cell(g2, c2, H2)

    # FC head on the last layer-2 hidden state; all shapes 128-padded -> clean aligned dots.
    z = jnp.dot(h2, wfc1_ref[...], preferred_element_type=jnp.float32) + bfc1_ref[...]
    z = jnp.maximum(z, 0.0)                                    # ReLU (padded lanes stay 0)
    z = jnp.dot(z, wfc2_ref[...], preferred_element_type=jnp.float32) + bfc2_ref[...]
    out_ref[...] = jax.nn.sigmoid(z)                           # (BP, 128); real output in lane 0


def sliding_window_lstm(x, kernel_params, hidden_size1=16, hidden_size2=10):
    """x: (B, T, input_size) float32. Returns (B, 1) float32."""
    B, T, F = x.shape
    BP = ((B + 7) // 8) * 8                                    # pad batch to 8 sublanes
    x = jnp.pad(x, ((0, BP - B), (0, 0), (0, 0)))
    # Time-major flatten so the hoisted projection consumes x in one matmul and each per-step
    # slab of G1 is a contiguous, sublane-aligned 8-row block.
    x2d = jnp.transpose(x, (1, 0, 2)).reshape(T * BP, F)

    kernel = functools.partial(_lstm_head_kernel, H1=hidden_size1, H2=hidden_size2)
    n_in = 1 + len(kernel_params)
    out = pl.pallas_call(
        kernel,
        out_shape=jax.ShapeDtypeStruct((BP, GL), jnp.float32),
        in_specs=[pl.BlockSpec(memory_space=pltpu.MemorySpace.VMEM)] * n_in,
        out_specs=pl.BlockSpec(memory_space=pltpu.MemorySpace.VMEM),
    )(x2d, *kernel_params)
    return out[:B, :1]


def init_params(key, input_size=32, hidden_size1=16, hidden_size2=10):
    """Deterministic PyTorch-style uniform init. Weights pre-transposed to (in, out)."""
    ks = jax.random.split(key, 12)

    def u(k, shape, bound):
        return jax.random.uniform(k, shape, jnp.float32, -bound, bound)

    k1 = 1.0 / jnp.sqrt(hidden_size1)
    k2 = 1.0 / jnp.sqrt(hidden_size2)
    kf1 = 1.0 / jnp.sqrt(hidden_size2)
    kf2 = 1.0 / jnp.sqrt(5.0)

    # LSTM1: torch W_ih (4H1, F), W_hh (4H1, H1), biases (4H1,) ; gate order (i, f, g, o)
    w_ih1 = u(ks[0], (4 * hidden_size1, input_size), k1).T            # (F, 4H1)
    w_hh1 = u(ks[1], (4 * hidden_size1, hidden_size1), k1).T          # (H1, 4H1)
    b1 = (u(ks[2], (4 * hidden_size1,), k1)
          + u(ks[3], (4 * hidden_size1,), k1)).reshape(1, -1)         # (1, 4H1) = b_ih + b_hh

    # LSTM2
    w_ih2 = u(ks[4], (4 * hidden_size2, hidden_size1), k2).T          # (H1, 4H2)
    w_hh2 = u(ks[5], (4 * hidden_size2, hidden_size2), k2).T          # (H2, 4H2)
    b2 = (u(ks[6], (4 * hidden_size2,), k2)
          + u(ks[7], (4 * hidden_size2,), k2)).reshape(1, -1)         # (1, 4H2)

    # fc1: torch (5, H2) ; fc2: torch (1, 5)
    w_fc1 = u(ks[8], (5, hidden_size2), kf1).T                        # (H2, 5)
    b_fc1 = u(ks[9], (5,), kf1).reshape(1, -1)                        # (1, 5)
    w_fc2 = u(ks[10], (1, 5), kf2).T                                  # (5, 1)
    b_fc2 = u(ks[11], (1,), kf2).reshape(1, -1)                       # (1, 1)

    return (w_ih1, w_hh1, b1, w_ih2, w_hh2, b2, w_fc1, b_fc1, w_fc2, b_fc2)


def prepare_params(params):
    """Host-side, one-time re-layout to the kernel's packed/padded format.

    Gate columns are permuted from torch order (i, f, g, o) to (i, f, o, g) and all four gates
    are packed into ONE 128-lane block at lane offsets 0, H, 2H, 3H (lanes >= 4H are zero).
    Hidden-dim rows are zero-padded to 128 so garbage in padded h/c lanes is nullified.
    The FC head is padded to (128, 128) / (1, 128) so both head dots are clean aligned MXU ops.
    """
    (w_ih1, w_hh1, b1, w_ih2, w_hh2, b2, w_fc1, b_fc1, w_fc2, b_fc2) = params
    H1 = w_hh1.shape[0]
    H2 = w_hh2.shape[0]

    def pack_gates(w, H):
        # w: (in, 4H) with torch gate order (i, f, g, o) along columns.
        i = w[:, 0 * H:1 * H]
        f = w[:, 1 * H:2 * H]
        g = w[:, 2 * H:3 * H]
        o = w[:, 3 * H:4 * H]
        packed = jnp.concatenate([i, f, o, g], axis=1)                 # (in, 4H)
        return jnp.pad(packed, ((0, 0), (0, GL - 4 * H)))              # (in, 128)

    def pad_rows(w, rows=GL):
        return jnp.pad(w, ((0, rows - w.shape[0]), (0, 0)))

    def pad_2d(w):
        return jnp.pad(w, ((0, GL - w.shape[0]), (0, GL - w.shape[1])))

    wih1_k = pack_gates(w_ih1, H1)                        # (F, 128)
    b1_k = pack_gates(b1, H1)                             # (1, 128)
    whh1_k = pad_rows(pack_gates(w_hh1, H1))              # (128, 128), rows >= H1 zero

    wih2_k = pad_rows(pack_gates(w_ih2, H2))              # (128, 128), rows >= H1 zero
    whh2_k = pad_rows(pack_gates(w_hh2, H2))              # (128, 128), rows >= H2 zero
    b2_k = pack_gates(b2, H2)                             # (1, 128)

    wfc1_k = pad_2d(w_fc1)                                # (128, 128), rows >= H2 zero
    bfc1_k = jnp.pad(b_fc1, ((0, 0), (0, GL - b_fc1.shape[1])))        # (1, 128)
    wfc2_k = pad_2d(w_fc2)                                # (128, 128), rows >= 5 zero
    bfc2_k = jnp.pad(b_fc2, ((0, 0), (0, GL - b_fc2.shape[1])))        # (1, 128)

    return (wih1_k, b1_k, whh1_k, wih2_k, whh2_k, b2_k, wfc1_k, bfc1_k, wfc2_k, bfc2_k)


def _reference(x, params):
    """Pure-JAX reference (mirrors PyTorch semantics) for a sanity check."""
    (w_ih1, w_hh1, b1, w_ih2, w_hh2, b2, w_fc1, b_fc1, w_fc2, b_fc2) = params
    B, T, _ = x.shape
    H1 = w_hh1.shape[0]
    H2 = w_hh2.shape[0]

    def cell(x_t, h, c, wih, whh, b, H):
        g = x_t @ wih + h @ whh + b
        i = jax.nn.sigmoid(g[:, :H])
        f = jax.nn.sigmoid(g[:, H:2 * H])
        gg = jnp.tanh(g[:, 2 * H:3 * H])
        o = jax.nn.sigmoid(g[:, 3 * H:])
        c = f * c + i * gg
        h = o * jnp.tanh(c)
        return h, c

    h1 = jnp.zeros((B, H1)); c1 = jnp.zeros((B, H1))
    h2 = jnp.zeros((B, H2)); c2 = jnp.zeros((B, H2))
    for t in range(T):
        h1, c1 = cell(x[:, t, :], h1, c1, w_ih1, w_hh1, b1, H1)
        h2, c2 = cell(h1, h2, c2, w_ih2, w_hh2, b2, H2)
    z = jnp.maximum(h2 @ w_fc1 + b_fc1, 0.0)
    return jax.nn.sigmoid(z @ w_fc2 + b_fc2)


if __name__ == "__main__":
    B, T, F = 2, 8, 32
    key = jax.random.PRNGKey(0)
    kx, kp = jax.random.split(key)
    x = jax.random.normal(kx, (B, T, F), jnp.float32)
    raw_params = init_params(kp, input_size=F, hidden_size1=16, hidden_size2=10)
    kernel_params = prepare_params(raw_params)

    out = sliding_window_lstm(x, kernel_params, hidden_size1=16, hidden_size2=10)
    out = jax.block_until_ready(out)

    ref = _reference(x, raw_params)
    assert out.shape == (B, 1)
    assert jnp.allclose(out, ref, atol=1e-5, rtol=1e-5), (out, ref)
    print("KERNEL_OK")
</pallas_src>

<mosaic_0001>
module attributes {stable_mosaic.version = 11 : i64} {
  func.func @_lstm_head_kernel(%arg0: memref<64x32xf32, #tpu.memory_space<vmem>>, %arg1: memref<32x128xf32, #tpu.memory_space<vmem>>, %arg2: memref<1x128xf32, #tpu.memory_space<vmem>>, %arg3: memref<128x128xf32, #tpu.memory_space<vmem>>, %arg4: memref<128x128xf32, #tpu.memory_space<vmem>>, %arg5: memref<128x128xf32, #tpu.memory_space<vmem>>, %arg6: memref<1x128xf32, #tpu.memory_space<vmem>>, %arg7: memref<128x128xf32, #tpu.memory_space<vmem>>, %arg8: memref<1x128xf32, #tpu.memory_space<vmem>>, %arg9: memref<128x128xf32, #tpu.memory_space<vmem>>, %arg10: memref<1x128xf32, #tpu.memory_space<vmem>>, %arg11: memref<8x128xf32, #tpu.memory_space<vmem>>) attributes {dimension_semantics = [], scalar_prefetch = 0 : i64, scratch_operands = 0 : i64, tpu.core_type = #tpu.core_type<tc>} {
    %c0 = arith.constant 0 : index
    %c0_0 = arith.constant 0 : index
    %0 = vector.load %arg0[%c0, %c0_0] : memref<64x32xf32, #tpu.memory_space<vmem>>, vector<64x32xf32>
    %c0_1 = arith.constant 0 : index
    %c0_2 = arith.constant 0 : index
    %1 = vector.load %arg1[%c0_1, %c0_2] : memref<32x128xf32, #tpu.memory_space<vmem>>, vector<32x128xf32>
    %cst = arith.constant dense<0.000000e+00> : vector<64x128xf32>
    %2 = tpu.matmul %0, %1, %cst {dimension_numbers = #tpu.dot_dimension_numbers<[1], [0], [0], [1], [0, 0, 1, 1], [], []>} : vector<64x32xf32>, vector<32x128xf32>, vector<64x128xf32> -> vector<64x128xf32>
    %c0_3 = arith.constant 0 : index
    %c0_4 = arith.constant 0 : index
    %3 = vector.load %arg2[%c0_3, %c0_4] : memref<1x128xf32, #tpu.memory_space<vmem>>, vector<1x128xf32>
    %4 = vector.broadcast %3 : vector<1x128xf32> to vector<64x128xf32>
    %5 = arith.addf %2, %4 : vector<64x128xf32>
    %c0_5 = arith.constant 0 : index
    %c0_6 = arith.constant 0 : index
    %6 = vector.load %arg3[%c0_5, %c0_6] : memref<128x128xf32, #tpu.memory_space<vmem>>, vector<128x128xf32>
    %c0_7 = arith.constant 0 : index
    %c0_8 = arith.constant 0 : index
    %7 = vector.load %arg4[%c0_7, %c0_8] : memref<128x128xf32, #tpu.memory_space<vmem>>, vector<128x128xf32>
    %c0_9 = arith.constant 0 : index
    %c0_10 = arith.constant 0 : index
    %8 = vector.load %arg5[%c0_9, %c0_10] : memref<128x128xf32, #tpu.memory_space<vmem>>, vector<128x128xf32>
    %c0_11 = arith.constant 0 : index
    %c0_12 = arith.constant 0 : index
    %9 = vector.load %arg6[%c0_11, %c0_12] : memref<1x128xf32, #tpu.memory_space<vmem>>, vector<1x128xf32>
    %10 = vector.shape_cast %9 : vector<1x128xf32> to vector<1x128xf32>
    %11 = vector.broadcast %10 : vector<1x128xf32> to vector<8x128xf32>
    %cst_13 = arith.constant 0.000000e+00 : f32
    %12 = vector.broadcast %cst_13 : f32 to vector<8x128xf32>
    %cst_14 = arith.constant 0.000000e+00 : f32
    %13 = vector.broadcast %cst_14 : f32 to vector<8x128xf32>
    %cst_15 = arith.constant 0.000000e+00 : f32
    %14 = vector.broadcast %cst_15 : f32 to vector<8x128xf32>
    %cst_16 = arith.constant 0.000000e+00 : f32
    %15 = vector.broadcast %cst_16 : f32 to vector<8x128xf32>
    %16 = vector.extract_strided_slice %5 {offsets = [0, 0], sizes = [8, 128], strides = [1, 1]} : vector<64x128xf32> to vector<8x128xf32>
    %cst_17 = arith.constant dense<0.000000e+00> : vector<8x128xf32>
    %17 = tpu.matmul %12, %6, %cst_17 {dimension_numbers = #tpu.dot_dimension_numbers<[1], [0], [0], [1], [0, 0, 1, 1], [], []>} : vector<8x128xf32>, vector<128x128xf32>, vector<8x128xf32> -> vector<8x128xf32>
    %18 = arith.addf %16, %17 : vector<8x128xf32>
    %19 = arith.negf %18 : vector<8x128xf32>
    %20 = math.exp %19 : vector<8x128xf32>
    %cst_18 = arith.constant 1.000000e+00 : f32
    %21 = vector.broadcast %cst_18 : f32 to vector<8x128xf32>
    %22 = arith.addf %21, %20 : vector<8x128xf32>
    %23 = arith.divf %21, %22 : vector<8x128xf32>
    %24 = math.tanh %18 : vector<8x128xf32>
    %c112_i32 = arith.constant 112 : i32
    %25 = tpu.dynamic_rotate %23 by %c112_i32 dim 1 : vector<8x128xf32>, i32 -> vector<8x128xf32>
    %c96_i32 = arith.constant 96 : i32
    %26 = tpu.dynamic_rotate %23 by %c96_i32 dim 1 : vector<8x128xf32>, i32 -> vector<8x128xf32>
    %c80_i32 = arith.constant 80 : i32
    %27 = tpu.dynamic_rotate %24 by %c80_i32 dim 1 : vector<8x128xf32>, i32 -> vector<8x128xf32>
    %28 = arith.mulf %25, %13 : vector<8x128xf32>
    %29 = arith.mulf %23, %27 : vector<8x128xf32>
    %30 = arith.addf %28, %29 : vector<8x128xf32>
    %31 = math.tanh %30 : vector<8x128xf32>
    %32 = arith.mulf %26, %31 : vector<8x128xf32>
    %cst_19 = arith.constant dense<0.000000e+00> : vector<8x128xf32>
    %33 = tpu.matmul %32, %7, %cst_19 {dimension_numbers = #tpu.dot_dimension_numbers<[1], [0], [0], [1], [0, 0, 1, 1], [], []>} : vector<8x128xf32>, vector<128x128xf32>, vector<8x128xf32> -> vector<8x128xf32>
    %cst_20 = arith.constant dense<0.000000e+00> : vector<8x128xf32>
    %34 = tpu.matmul %14, %8, %cst_20 {dimension_numbers = #tpu.dot_dimension_numbers<[1], [0], [0], [1], [0, 0, 1, 1], [], []>} : vector<8x128xf32>, vector<128x128xf32>, vector<8x128xf32> -> vector<8x128xf32>
    %35 = arith.addf %33, %34 : vector<8x128xf32>
    %36 = arith.addf %35, %11 : vector<8x128xf32>
    %37 = arith.negf %36 : vector<8x128xf32>
    %38 = math.exp %37 : vector<8x128xf32>
    %cst_21 = arith.constant 1.000000e+00 : f32
    %39 = vector.broadcast %cst_21 : f32 to vector<8x128xf32>
    %40 = arith.addf %39, %38 : vector<8x128xf32>
    %41 = arith.divf %39, %40 : vector<8x128xf32>
    %42 = math.tanh %36 : vector<8x128xf32>
    %c118_i32 = arith.constant 118 : i32
    %43 = tpu.dynamic_rotate %41 by %c118_i32 dim 1 : vector<8x128xf32>, i32 -> vector<8x128xf32>
    %c108_i32 = arith.constant 108 : i32
    %44 = tpu.dynamic_rotate %41 by %c108_i32 dim 1 : vector<8x128xf32>, i32 -> vector<8x128xf32>
    %c98_i32 = arith.constant 98 : i32
    %45 = tpu.dynamic_rotate %42 by %c98_i32 dim 1 : vector<8x128xf32>, i32 -> vector<8x128xf32>
    %46 = arith.mulf %43, %15 : vector<8x128xf32>
    %47 = arith.mulf %41, %45 : vector<8x128xf32>
    %48 = arith.addf %46, %47 : vector<8x128xf32>
    %49 = math.tanh %48 : vector<8x128xf32>
    %50 = arith.mulf %44, %49 : vector<8x128xf32>
    %51 = vector.extract_strided_slice %5 {offsets = [8, 0], sizes = [8, 128], strides = [1, 1]} : vector<64x128xf32> to vector<8x128xf32>
    %cst_22 = arith.constant dense<0.000000e+00> : vector<8x128xf32>
    %52 = tpu.matmul %32, %6, %cst_22 {dimension_numbers = #tpu.dot_dimension_numbers<[1], [0], [0], [1], [0, 0, 1, 1], [], []>} : vector<8x128xf32>, vector<128x128xf32>, vector<8x128xf32> -> vector<8x128xf32>
    %53 = arith.addf %51, %52 : vector<8x128xf32>
    %54 = arith.negf %53 : vector<8x128xf32>
    %55 = math.exp %54 : vector<8x128xf32>
    %cst_23 = arith.constant 1.000000e+00 : f32
    %56 = vector.broadcast %cst_23 : f32 to vector<8x128xf32>
    %57 = arith.addf %56, %55 : vector<8x128xf32>
    %58 = arith.divf %56, %57 : vector<8x128xf32>
    %59 = math.tanh %53 : vector<8x128xf32>
    %c112_i32_24 = arith.constant 112 : i32
    %60 = tpu.dynamic_rotate %58 by %c112_i32_24 dim 1 : vector<8x128xf32>, i32 -> vector<8x128xf32>
    %c96_i32_25 = arith.constant 96 : i32
    %61 = tpu.dynamic_rotate %58 by %c96_i32_25 dim 1 : vector<8x128xf32>, i32 -> vector<8x128xf32>
    %c80_i32_26 = arith.constant 80 : i32
    %62 = tpu.dynamic_rotate %59 by %c80_i32_26 dim 1 : vector<8x128xf32>, i32 -> vector<8x128xf32>
    %63 = arith.mulf %60, %30 : vector<8x128xf32>
    %64 = arith.mulf %58, %62 : vector<8x128xf32>
    %65 = arith.addf %63, %64 : vector<8x128xf32>
    %66 = math.tanh %65 : vector<8x128xf32>
    %67 = arith.mulf %61, %66 : vector<8x128xf32>
    %cst_27 = arith.constant dense<0.000000e+00> : vector<8x128xf32>
    %68 = tpu.matmul %67, %7, %cst_27 {dimension_numbers = #tpu.dot_dimension_numbers<[1], [0], [0], [1], [0, 0, 1, 1], [], []>} : vector<8x128xf32>, vector<128x128xf32>, vector<8x128xf32> -> vector<8x128xf32>
    %cst_28 = arith.constant dense<0.000000e+00> : vector<8x128xf32>
    %69 = tpu.matmul %50, %8, %cst_28 {dimension_numbers = #tpu.dot_dimension_numbers<[1], [0], [0], [1], [0, 0, 1, 1], [], []>} : vector<8x128xf32>, vector<128x128xf32>, vector<8x128xf32> -> vector<8x128xf32>
    %70 = arith.addf %68, %69 : vector<8x128xf32>
    %71 = arith.addf %70, %11 : vector<8x128xf32>
    %72 = arith.negf %71 : vector<8x128xf32>
    %73 = math.exp %72 : vector<8x128xf32>
    %cst_29 = arith.constant 1.000000e+00 : f32
    %74 = vector.broadcast %cst_29 : f32 to vector<8x128xf32>
    %75 = arith.addf %74, %73 : vector<8x128xf32>
    %76 = arith.divf %74, %75 : vector<8x128xf32>
    %77 = math.tanh %71 : vector<8x128xf32>
    %c118_i32_30 = arith.constant 118 : i32
    %78 = tpu.dynamic_rotate %76 by %c118_i32_30 dim 1 : vector<8x128xf32>, i32 -> vector<8x128xf32>
    %c108_i32_31 = arith.constant 108 : i32
    %79 = tpu.dynamic_rotate %76 by %c108_i32_31 dim 1 : vector<8x128xf32>, i32 -> vector<8x128xf32>
    %c98_i32_32 = arith.constant 98 : i32
    %80 = tpu.dynamic_rotate %77 by %c98_i32_32 dim 1 : vector<8x128xf32>, i32 -> vector<8x128xf32>
    %81 = arith.mulf %78, %48 : vector<8x128xf32>
    %82 = arith.mulf %76, %80 : vector<8x128xf32>
    %83 = arith.addf %81, %82 : vector<8x128xf32>
    %84 = math.tanh %83 : vector<8x128xf32>
    %85 = arith.mulf %79, %84 : vector<8x128xf32>
    %86 = vector.extract_strided_slice %5 {offsets = [16, 0], sizes = [8, 128], strides = [1, 1]} : vector<64x128xf32> to vector<8x128xf32>
    %cst_33 = arith.constant dense<0.000000e+00> : vector<8x128xf32>
    %87 = tpu.matmul %67, %6, %cst_33 {dimension_numbers = #tpu.dot_dimension_numbers<[1], [0], [0], [1], [0, 0, 1, 1], [], []>} : vector<8x128xf32>, vector<128x128xf32>, vector<8x128xf32> -> vector<8x128xf32>
    %88 = arith.addf %86, %87 : vector<8x128xf32>
    %89 = arith.negf %88 : vector<8x128xf32>
    %90 = math.exp %89 : vector<8x128xf32>
    %cst_34 = arith.constant 1.000000e+00 : f32
    %91 = vector.broadcast %cst_34 : f32 to vector<8x128xf32>
    %92 = arith.addf %91, %90 : vector<8x128xf32>
    %93 = arith.divf %91, %92 : vector<8x128xf32>
    %94 = math.tanh %88 : vector<8x128xf32>
    %c112_i32_35 = arith.constant 112 : i32
    %95 = tpu.dynamic_rotate %93 by %c112_i32_35 dim 1 : vector<8x128xf32>, i32 -> vector<8x128xf32>
    %c96_i32_36 = arith.constant 96 : i32
    %96 = tpu.dynamic_rotate %93 by %c96_i32_36 dim 1 : vector<8x128xf32>, i32 -> vector<8x128xf32>
    %c80_i32_37 = arith.constant 80 : i32
    %97 = tpu.dynamic_rotate %94 by %c80_i32_37 dim 1 : vector<8x128xf32>, i32 -> vector<8x128xf32>
    %98 = arith.mulf %95, %65 : vector<8x128xf32>
    %99 = arith.mulf %93, %97 : vector<8x128xf32>
    %100 = arith.addf %98, %99 : vector<8x128xf32>
    %101 = math.tanh %100 : vector<8x128xf32>
    %102 = arith.mulf %96, %101 : vector<8x128xf32>
    %cst_38 = arith.constant dense<0.000000e+00> : vector<8x128xf32>
    %103 = tpu.matmul %102, %7, %cst_38 {dimension_numbers = #tpu.dot_dimension_numbers<[1], [0], [0], [1], [0, 0, 1, 1], [], []>} : vector<8x128xf32>, vector<128x128xf32>, vector<8x128xf32> -> vector<8x128xf32>
    %cst_39 = arith.constant dense<0.000000e+00> : vector<8x128xf32>
    %104 = tpu.matmul %85, %8, %cst_39 {dimension_numbers = #tpu.dot_dimension_numbers<[1], [0], [0], [1], [0, 0, 1, 1], [], []>} : vector<8x128xf32>, vector<128x128xf32>, vector<8x128xf32> -> vector<8x128xf32>
    %105 = arith.addf %103, %104 : vector<8x128xf32>
    %106 = arith.addf %105, %11 : vector<8x128xf32>
    %107 = arith.negf %106 : vector<8x128xf32>
    %108 = math.exp %107 : vector<8x128xf32>
    %cst_40 = arith.constant 1.000000e+00 : f32
    %109 = vector.broadcast %cst_40 : f32 to vector<8x128xf32>
    %110 = arith.addf %109, %108 : vector<8x128xf32>
    %111 = arith.divf %109, %110 : vector<8x128xf32>
    %112 = math.tanh %106 : vector<8x128xf32>
    %c118_i32_41 = arith.constant 118 : i32
    %113 = tpu.dynamic_rotate %111 by %c118_i32_41 dim 1 : vector<8x128xf32>, i32 -> vector<8x128xf32>
    %c108_i32_42 = arith.constant 108 : i32
    %114 = tpu.dynamic_rotate %111 by %c108_i32_42 dim 1 : vector<8x128xf32>, i32 -> vector<8x128xf32>
    %c98_i32_43 = arith.constant 98 : i32
    %115 = tpu.dynamic_rotate %112 by %c98_i32_43 dim 1 : vector<8x128xf32>, i32 -> vector<8x128xf32>
    %116 = arith.mulf %113, %83 : vector<8x128xf32>
    %117 = arith.mulf %111, %115 : vector<8x128xf32>
    %118 = arith.addf %116, %117 : vector<8x128xf32>
    %119 = math.tanh %118 : vector<8x128xf32>
    %120 = arith.mulf %114, %119 : vector<8x128xf32>
    %121 = vector.extract_strided_slice %5 {offsets = [24, 0], sizes = [8, 128], strides = [1, 1]} : vector<64x128xf32> to vector<8x128xf32>
    %cst_44 = arith.constant dense<0.000000e+00> : vector<8x128xf32>
    %122 = tpu.matmul %102, %6, %cst_44 {dimension_numbers = #tpu.dot_dimension_numbers<[1], [0], [0], [1], [0, 0, 1, 1], [], []>} : vector<8x128xf32>, vector<128x128xf32>, vector<8x128xf32> -> vector<8x128xf32>
    %123 = arith.addf %121, %122 : vector<8x128xf32>
    %124 = arith.negf %123 : vector<8x128xf32>
    %125 = math.exp %124 : vector<8x128xf32>
    %cst_45 = arith.constant 1.000000e+00 : f32
    %126 = vector.broadcast %cst_45 : f32 to vector<8x128xf32>
    %127 = arith.addf %126, %125 : vector<8x128xf32>
    %128 = arith.divf %126, %127 : vector<8x128xf32>
    %129 = math.tanh %123 : vector<8x128xf32>
    %c112_i32_46 = arith.constant 112 : i32
    %130 = tpu.dynamic_rotate %128 by %c112_i32_46 dim 1 : vector<8x128xf32>, i32 -> vector<8x128xf32>
    %c96_i32_47 = arith.constant 96 : i32
    %131 = tpu.dynamic_rotate %128 by %c96_i32_47 dim 1 : vector<8x128xf32>, i32 -> vector<8x128xf32>
    %c80_i32_48 = arith.constant 80 : i32
    %132 = tpu.dynamic_rotate %129 by %c80_i32_48 dim 1 : vector<8x128xf32>, i32 -> vector<8x128xf32>
    %133 = arith.mulf %130, %100 : vector<8x128xf32>
    %134 = arith.mulf %128, %132 : vector<8x128xf32>
    %135 = arith.addf %133, %134 : vector<8x128xf32>
    %136 = math.tanh %135 : vector<8x128xf32>
    %137 = arith.mulf %131, %136 : vector<8x128xf32>
    %cst_49 = arith.constant dense<0.000000e+00> : vector<8x128xf32>
    %138 = tpu.matmul %137, %7, %cst_49 {dimension_numbers = #tpu.dot_dimension_numbers<[1], [0], [0], [1], [0, 0, 1, 1], [], []>} : vector<8x128xf32>, vector<128x128xf32>, vector<8x128xf32> -> vector<8x128xf32>
    %cst_50 = arith.constant dense<0.000000e+00> : vector<8x128xf32>
    %139 = tpu.matmul %120, %8, %cst_50 {dimension_numbers = #tpu.dot_dimension_numbers<[1], [0], [0], [1], [0, 0, 1, 1], [], []>} : vector<8x128xf32>, vector<128x128xf32>, vector<8x128xf32> -> vector<8x128xf32>
    %140 = arith.addf %138, %139 : vector<8x128xf32>
    %141 = arith.addf %140, %11 : vector<8x128xf32>
    %142 = arith.negf %141 : vector<8x128xf32>
    %143 = math.exp %142 : vector<8x128xf32>
    %cst_51 = arith.constant 1.000000e+00 : f32
    %144 = vector.broadcast %cst_51 : f32 to vector<8x128xf32>
    %145 = arith.addf %144, %143 : vector<8x128xf32>
    %146 = arith.divf %144, %145 : vector<8x128xf32>
    %147 = math.tanh %141 : vector<8x128xf32>
    %c118_i32_52 = arith.constant 118 : i32
    %148 = tpu.dynamic_rotate %146 by %c118_i32_52 dim 1 : vector<8x128xf32>, i32 -> vector<8x128xf32>
    %c108_i32_53 = arith.constant 108 : i32
    %149 = tpu.dynamic_rotate %146 by %c108_i32_53 dim 1 : vector<8x128xf32>, i32 -> vector<8x128xf32>
    %c98_i32_54 = arith.constant 98 : i32
    %150 = tpu.dynamic_rotate %147 by %c98_i32_54 dim 1 : vector<8x128xf32>, i32 -> vector<8x128xf32>
    %151 = arith.mulf %148, %118 : vector<8x128xf32>
    %152 = arith.mulf %146, %150 : vector<8x128xf32>
    %153 = arith.addf %151, %152 : vector<8x128xf32>
    %154 = math.tanh %153 : vector<8x128xf32>
    %155 = arith.mulf %149, %154 : vector<8x128xf32>
    %156 = vector.extract_strided_slice %5 {offsets = [32, 0], sizes = [8, 128], strides = [1, 1]} : vector<64x128xf32> to vector<8x128xf32>
    %cst_55 = arith.constant dense<0.000000e+00> : vector<8x128xf32>
    %157 = tpu.matmul %137, %6, %cst_55 {dimension_numbers = #tpu.dot_dimension_numbers<[1], [0], [0], [1], [0, 0, 1, 1], [], []>} : vector<8x128xf32>, vector<128x128xf32>, vector<8x128xf32> -> vector<8x128xf32>
    %158 = arith.addf %156, %157 : vector<8x128xf32>
    %159 = arith.negf %158 : vector<8x128xf32>
    %160 = math.exp %159 : vector<8x128xf32>
    %cst_56 = arith.constant 1.000000e+00 : f32
    %161 = vector.broadcast %cst_56 : f32 to vector<8x128xf32>
    %162 = arith.addf %161, %160 : vector<8x128xf32>
    %163 = arith.divf %161, %162 : vector<8x128xf32>
    %164 = math.tanh %158 : vector<8x128xf32>
    %c112_i32_57 = arith.constant 112 : i32
    %165 = tpu.dynamic_rotate %163 by %c112_i32_57 dim 1 : vector<8x128xf32>, i32 -> vector<8x128xf32>
    %c96_i32_58 = arith.constant 96 : i32
    %166 = tpu.dynamic_rotate %163 by %c96_i32_58 dim 1 : vector<8x128xf32>, i32 -> vector<8x128xf32>
    %c80_i32_59 = arith.constant 80 : i32
    %167 = tpu.dynamic_rotate %164 by %c80_i32_59 dim 1 : vector<8x128xf32>, i32 -> vector<8x128xf32>
    %168 = arith.mulf %165, %135 : vector<8x128xf32>
    %169 = arith.mulf %163, %167 : vector<8x128xf32>
    %170 = arith.addf %168, %169 : vector<8x128xf32>
    %171 = math.tanh %170 : vector<8x128xf32>
    %172 = arith.mulf %166, %171 : vector<8x128xf32>
    %cst_60 = arith.constant dense<0.000000e+00> : vector<8x128xf32>
    %173 = tpu.matmul %172, %7, %cst_60 {dimension_numbers = #tpu.dot_dimension_numbers<[1], [0], [0], [1], [0, 0, 1, 1], [], []>} : vector<8x128xf32>, vector<128x128xf32>, vector<8x128xf32> -> vector<8x128xf32>
    %cst_61 = arith.constant dense<0.000000e+00> : vector<8x128xf32>
    %174 = tpu.matmul %155, %8, %cst_61 {dimension_numbers = #tpu.dot_dimension_numbers<[1], [0], [0], [1], [0, 0, 1, 1], [], []>} : vector<8x128xf32>, vector<128x128xf32>, vector<8x128xf32> -> vector<8x128xf32>
    %175 = arith.addf %173, %174 : vector<8x128xf32>
    %176 = arith.addf %175, %11 : vector<8x128xf32>
    %177 = arith.negf %176 : vector<8x128xf32>
    %178 = math.exp %177 : vector<8x128xf32>
    %cst_62 = arith.constant 1.000000e+00 : f32
    %179 = vector.broadcast %cst_62 : f32 to vector<8x128xf32>
    %180 = arith.addf %179, %178 : vector<8x128xf32>
    %181 = arith.divf %179, %180 : vector<8x128xf32>
    %182 = math.tanh %176 : vector<8x128xf32>
    %c118_i32_63 = arith.constant 118 : i32
    %183 = tpu.dynamic_rotate %181 by %c118_i32_63 dim 1 : vector<8x128xf32>, i32 -> vector<8x128xf32>
    %c108_i32_64 = arith.constant 108 : i32
    %184 = tpu.dynamic_rotate %181 by %c108_i32_64 dim 1 : vector<8x128xf32>, i32 -> vector<8x128xf32>
    %c98_i32_65 = arith.constant 98 : i32
    %185 = tpu.dynamic_rotate %182 by %c98_i32_65 dim 1 : vector<8x128xf32>, i32 -> vector<8x128xf32>
    %186 = arith.mulf %183, %153 : vector<8x128xf32>
    %187 = arith.mulf %181, %185 : vector<8x128xf32>
    %188 = arith.addf %186, %187 : vector<8x128xf32>
    %189 = math.tanh %188 : vector<8x128xf32>
    %190 = arith.mulf %184, %189 : vector<8x128xf32>
    %191 = vector.extract_strided_slice %5 {offsets = [40, 0], sizes = [8, 128], strides = [1, 1]} : vector<64x128xf32> to vector<8x128xf32>
    %cst_66 = arith.constant dense<0.000000e+00> : vector<8x128xf32>
    %192 = tpu.matmul %172, %6, %cst_66 {dimension_numbers = #tpu.dot_dimension_numbers<[1], [0], [0], [1], [0, 0, 1, 1], [], []>} : vector<8x128xf32>, vector<128x128xf32>, vector<8x128xf32> -> vector<8x128xf32>
    %193 = arith.addf %191, %192 : vector<8x128xf32>
    %194 = arith.negf %193 : vector<8x128xf32>
    %195 = math.exp %194 : vector<8x128xf32>
    %cst_67 = arith.constant 1.000000e+00 : f32
    %196 = vector.broadcast %cst_67 : f32 to vector<8x128xf32>
    %197 = arith.addf %196, %195 : vector<8x128xf32>
    %198 = arith.divf %196, %197 : vector<8x128xf32>
    %199 = math.tanh %193 : vector<8x128xf32>
    %c112_i32_68 = arith.constant 112 : i32
    %200 = tpu.dynamic_rotate %198 by %c112_i32_68 dim 1 : vector<8x128xf32>, i32 -> vector<8x128xf32>
    %c96_i32_69 = arith.constant 96 : i32
    %201 = tpu.dynamic_rotate %198 by %c96_i32_69 dim 1 : vector<8x128xf32>, i32 -> vector<8x128xf32>
    %c80_i32_70 = arith.constant 80 : i32
    %202 = tpu.dynamic_rotate %199 by %c80_i32_70 dim 1 : vector<8x128xf32>, i32 -> vector<8x128xf32>
    %203 = arith.mulf %200, %170 : vector<8x128xf32>
    %204 = arith.mulf %198, %202 : vector<8x128xf32>
    %205 = arith.addf %203, %204 : vector<8x128xf32>
    %206 = math.tanh %205 : vector<8x128xf32>
    %207 = arith.mulf %201, %206 : vector<8x128xf32>
    %cst_71 = arith.constant dense<0.000000e+00> : vector<8x128xf32>
    %208 = tpu.matmul %207, %7, %cst_71 {dimension_numbers = #tpu.dot_dimension_numbers<[1], [0], [0], [1], [0, 0, 1, 1], [], []>} : vector<8x128xf32>, vector<128x128xf32>, vector<8x128xf32> -> vector<8x128xf32>
    %cst_72 = arith.constant dense<0.000000e+00> : vector<8x128xf32>
    %209 = tpu.matmul %190, %8, %cst_72 {dimension_numbers = #tpu.dot_dimension_numbers<[1], [0], [0], [1], [0, 0, 1, 1], [], []>} : vector<8x128xf32>, vector<128x128xf32>, vector<8x128xf32> -> vector<8x128xf32>
    %210 = arith.addf %208, %209 : vector<8x128xf32>
    %211 = arith.addf %210, %11 : vector<8x128xf32>
    %212 = arith.negf %211 : vector<8x128xf32>
    %213 = math.exp %212 : vector<8x128xf32>
    %cst_73 = arith.constant 1.000000e+00 : f32
    %214 = vector.broadcast %cst_73 : f32 to vector<8x128xf32>
    %215 = arith.addf %214, %213 : vector<8x128xf32>
    %216 = arith.divf %214, %215 : vector<8x128xf32>
    %217 = math.tanh %211 : vector<8x128xf32>
    %c118_i32_74 = arith.constant 118 : i32
    %218 = tpu.dynamic_rotate %216 by %c118_i32_74 dim 1 : vector<8x128xf32>, i32 -> vector<8x128xf32>
    %c108_i32_75 = arith.constant 108 : i32
    %219 = tpu.dynamic_rotate %216 by %c108_i32_75 dim 1 : vector<8x128xf32>, i32 -> vector<8x128xf32>
    %c98_i32_76 = arith.constant 98 : i32
    %220 = tpu.dynamic_rotate %217 by %c98_i32_76 dim 1 : vector<8x128xf32>, i32 -> vector<8x128xf32>
    %221 = arith.mulf %218, %188 : vector<8x128xf32>
    %222 = arith.mulf %216, %220 : vector<8x128xf32>
    %223 = arith.addf %221, %222 : vector<8x128xf32>
    %224 = math.tanh %223 : vector<8x128xf32>
    %225 = arith.mulf %219, %224 : vector<8x128xf32>
    %226 = vector.extract_strided_slice %5 {offsets = [48, 0], sizes = [8, 128], strides = [1, 1]} : vector<64x128xf32> to vector<8x128xf32>
    %cst_77 = arith.constant dense<0.000000e+00> : vector<8x128xf32>
    %227 = tpu.matmul %207, %6, %cst_77 {dimension_numbers = #tpu.dot_dimension_numbers<[1], [0], [0], [1], [0, 0, 1, 1], [], []>} : vector<8x128xf32>, vector<128x128xf32>, vector<8x128xf32> -> vector<8x128xf32>
    %228 = arith.addf %226, %227 : vector<8x128xf32>
    %229 = arith.negf %228 : vector<8x128xf32>
    %230 = math.exp %229 : vector<8x128xf32>
    %cst_78 = arith.constant 1.000000e+00 : f32
    %231 = vector.broadcast %cst_78 : f32 to vector<8x128xf32>
    %232 = arith.addf %231, %230 : vector<8x128xf32>
    %233 = arith.divf %231, %232 : vector<8x128xf32>
    %234 = math.tanh %228 : vector<8x128xf32>
    %c112_i32_79 = arith.constant 112 : i32
    %235 = tpu.dynamic_rotate %233 by %c112_i32_79 dim 1 : vector<8x128xf32>, i32 -> vector<8x128xf32>
    %c96_i32_80 = arith.constant 96 : i32
    %236 = tpu.dynamic_rotate %233 by %c96_i32_80 dim 1 : vector<8x128xf32>, i32 -> vector<8x128xf32>
    %c80_i32_81 = arith.constant 80 : i32
    %237 = tpu.dynamic_rotate %234 by %c80_i32_81 dim 1 : vector<8x128xf32>, i32 -> vector<8x128xf32>
    %238 = arith.mulf %235, %205 : vector<8x128xf32>
    %239 = arith.mulf %233, %237 : vector<8x128xf32>
    %240 = arith.addf %238, %239 : vector<8x128xf32>
    %241 = math.tanh %240 : vector<8x128xf32>
    %242 = arith.mulf %236, %241 : vector<8x128xf32>
    %cst_82 = arith.constant dense<0.000000e+00> : vector<8x128xf32>
    %243 = tpu.matmul %242, %7, %cst_82 {dimension_numbers = #tpu.dot_dimension_numbers<[1], [0], [0], [1], [0, 0, 1, 1], [], []>} : vector<8x128xf32>, vector<128x128xf32>, vector<8x128xf32> -> vector<8x128xf32>
    %cst_83 = arith.constant dense<0.000000e+00> : vector<8x128xf32>
    %244 = tpu.matmul %225, %8, %cst_83 {dimension_numbers = #tpu.dot_dimension_numbers<[1], [0], [0], [1], [0, 0, 1, 1], [], []>} : vector<8x128xf32>, vector<128x128xf32>, vector<8x128xf32> -> vector<8x128xf32>
    %245 = arith.addf %243, %244 : vector<8x128xf32>
    %246 = arith.addf %245, %11 : vector<8x128xf32>
    %247 = arith.negf %246 : vector<8x128xf32>
    %248 = math.exp %247 : vector<8x128xf32>
    %cst_84 = arith.constant 1.000000e+00 : f32
    %249 = vector.broadcast %cst_84 : f32 to vector<8x128xf32>
    %250 = arith.addf %249, %248 : vector<8x128xf32>
    %251 = arith.divf %249, %250 : vector<8x128xf32>
    %252 = math.tanh %246 : vector<8x128xf32>
    %c118_i32_85 = arith.constant 118 : i32
    %253 = tpu.dynamic_rotate %251 by %c118_i32_85 dim 1 : vector<8x128xf32>, i32 -> vector<8x128xf32>
    %c108_i32_86 = arith.constant 108 : i32
    %254 = tpu.dynamic_rotate %251 by %c108_i32_86 dim 1 : vector<8x128xf32>, i32 -> vector<8x128xf32>
    %c98_i32_87 = arith.constant 98 : i32
    %255 = tpu.dynamic_rotate %252 by %c98_i32_87 dim 1 : vector<8x128xf32>, i32 -> vector<8x128xf32>
    %256 = arith.mulf %253, %223 : vector<8x128xf32>
    %257 = arith.mulf %251, %255 : vector<8x128xf32>
    %258 = arith.addf %256, %257 : vector<8x128xf32>
    %259 = math.tanh %258 : vector<8x128xf32>
    %260 = arith.mulf %254, %259 : vector<8x128xf32>
    %261 = vector.extract_strided_slice %5 {offsets = [56, 0], sizes = [8, 128], strides = [1, 1]} : vector<64x128xf32> to vector<8x128xf32>
    %cst_88 = arith.constant dense<0.000000e+00> : vector<8x128xf32>
    %262 = tpu.matmul %242, %6, %cst_88 {dimension_numbers = #tpu.dot_dimension_numbers<[1], [0], [0], [1], [0, 0, 1, 1], [], []>} : vector<8x128xf32>, vector<128x128xf32>, vector<8x128xf32> -> vector<8x128xf32>
    %263 = arith.addf %261, %262 : vector<8x128xf32>
    %264 = arith.negf %263 : vector<8x128xf32>
    %265 = math.exp %264 : vector<8x128xf32>
    %cst_89 = arith.constant 1.000000e+00 : f32
    %266 = vector.broadcast %cst_89 : f32 to vector<8x128xf32>
    %267 = arith.addf %266, %265 : vector<8x128xf32>
    %268 = arith.divf %266, %267 : vector<8x128xf32>
    %269 = math.tanh %263 : vector<8x128xf32>
    %c112_i32_90 = arith.constant 112 : i32
    %270 = tpu.dynamic_rotate %268 by %c112_i32_90 dim 1 : vector<8x128xf32>, i32 -> vector<8x128xf32>
    %c96_i32_91 = arith.constant 96 : i32
    %271 = tpu.dynamic_rotate %268 by %c96_i32_91 dim 1 : vector<8x128xf32>, i32 -> vector<8x128xf32>
    %c80_i32_92 = arith.constant 80 : i32
    %272 = tpu.dynamic_rotate %269 by %c80_i32_92 dim 1 : vector<8x128xf32>, i32 -> vector<8x128xf32>
    %273 = arith.mulf %270, %240 : vector<8x128xf32>
    %274 = arith.mulf %268, %272 : vector<8x128xf32>
    %275 = arith.addf %273, %274 : vector<8x128xf32>
    %276 = math.tanh %275 : vector<8x128xf32>
    %277 = arith.mulf %271, %276 : vector<8x128xf32>
    %cst_93 = arith.constant dense<0.000000e+00> : vector<8x128xf32>
    %278 = tpu.matmul %277, %7, %cst_93 {dimension_numbers = #tpu.dot_dimension_numbers<[1], [0], [0], [1], [0, 0, 1, 1], [], []>} : vector<8x128xf32>, vector<128x128xf32>, vector<8x128xf32> -> vector<8x128xf32>
    %cst_94 = arith.constant dense<0.000000e+00> : vector<8x128xf32>
    %279 = tpu.matmul %260, %8, %cst_94 {dimension_numbers = #tpu.dot_dimension_numbers<[1], [0], [0], [1], [0, 0, 1, 1], [], []>} : vector<8x128xf32>, vector<128x128xf32>, vector<8x128xf32> -> vector<8x128xf32>
    %280 = arith.addf %278, %279 : vector<8x128xf32>
    %281 = arith.addf %280, %11 : vector<8x128xf32>
    %282 = arith.negf %281 : vector<8x128xf32>
    %283 = math.exp %282 : vector<8x128xf32>
    %cst_95 = arith.constant 1.000000e+00 : f32
    %284 = vector.broadcast %cst_95 : f32 to vector<8x128xf32>
    %285 = arith.addf %284, %283 : vector<8x128xf32>
    %286 = arith.divf %284, %285 : vector<8x128xf32>
    %287 = math.tanh %281 : vector<8x128xf32>
    %c118_i32_96 = arith.constant 118 : i32
    %288 = tpu.dynamic_rotate %286 by %c118_i32_96 dim 1 : vector<8x128xf32>, i32 -> vector<8x128xf32>
    %c108_i32_97 = arith.constant 108 : i32
    %289 = tpu.dynamic_rotate %286 by %c108_i32_97 dim 1 : vector<8x128xf32>, i32 -> vector<8x128xf32>
    %c98_i32_98 = arith.constant 98 : i32
    %290 = tpu.dynamic_rotate %287 by %c98_i32_98 dim 1 : vector<8x128xf32>, i32 -> vector<8x128xf32>
    %291 = arith.mulf %288, %258 : vector<8x128xf32>
    %292 = arith.mulf %286, %290 : vector<8x128xf32>
    %293 = arith.addf %291, %292 : vector<8x128xf32>
    %294 = math.tanh %293 : vector<8x128xf32>
    %295 = arith.mulf %289, %294 : vector<8x128xf32>
    %c0_99 = arith.constant 0 : index
    %c0_100 = arith.constant 0 : index
    %296 = vector.load %arg7[%c0_99, %c0_100] : memref<128x128xf32, #tpu.memory_space<vmem>>, vector<128x128xf32>
    %cst_101 = arith.constant dense<0.000000e+00> : vector<8x128xf32>
    %297 = tpu.matmul %295, %296, %cst_101 {dimension_numbers = #tpu.dot_dimension_numbers<[1], [0], [0], [1], [0, 0, 1, 1], [], []>} : vector<8x128xf32>, vector<128x128xf32>, vector<8x128xf32> -> vector<8x128xf32>
    %c0_102 = arith.constant 0 : index
    %c0_103 = arith.constant 0 : index
    %298 = vector.load %arg8[%c0_102, %c0_103] : memref<1x128xf32, #tpu.memory_space<vmem>>, vector<1x128xf32>
    %299 = vector.broadcast %298 : vector<1x128xf32> to vector<8x128xf32>
    %300 = arith.addf %297, %299 : vector<8x128xf32>
    %cst_104 = arith.constant 0.000000e+00 : f32
    %301 = vector.broadcast %cst_104 : f32 to vector<8x128xf32>
    %302 = arith.maximumf %300, %301 : vector<8x128xf32>
    %c0_105 = arith.constant 0 : index
    %c0_106 = arith.constant 0 : index
    %303 = vector.load %arg9[%c0_105, %c0_106] : memref<128x128xf32, #tpu.memory_space<vmem>>, vector<128x128xf32>
    %cst_107 = arith.constant dense<0.000000e+00> : vector<8x128xf32>
    %304 = tpu.matmul %302, %303, %cst_107 {dimension_numbers = #tpu.dot_dimension_numbers<[1], [0], [0], [1], [0, 0, 1, 1], [], []>} : vector<8x128xf32>, vector<128x128xf32>, vector<8x128xf32> -> vector<8x128xf32>
    %c0_108 = arith.constant 0 : index
    %c0_109 = arith.constant 0 : index
    %305 = vector.load %arg10[%c0_108, %c0_109] : memref<1x128xf32, #tpu.memory_space<vmem>>, vector<1x128xf32>
    %306 = vector.broadcast %305 : vector<1x128xf32> to vector<8x128xf32>
    %307 = arith.addf %304, %306 : vector<8x128xf32>
    %308 = arith.negf %307 : vector<8x128xf32>
    %309 = math.exp %308 : vector<8x128xf32>
    %cst_110 = arith.constant 1.000000e+00 : f32
    %310 = vector.broadcast %cst_110 : f32 to vector<8x128xf32>
    %311 = arith.addf %310, %309 : vector<8x128xf32>
    %312 = arith.divf %310, %311 : vector<8x128xf32>
    %c0_111 = arith.constant 0 : index
    %c0_112 = arith.constant 0 : index
    %313 = vector.load %arg11[%c0_111, %c0_112] : memref<8x128xf32, #tpu.memory_space<vmem>>, vector<8x128xf32>
    tpu.vector_store %arg11[%c0_111, %c0_112], %312 {strides = array<i32>} : memref<8x128xf32, #tpu.memory_space<vmem>>, vector<8x128xf32>,
    return
  }
}

</mosaic_0001>

<llo_original>
// kernel: tpu_custom_call.1
$region0: #{tpu_custom_call.1}
  #allocation0 [shape = 'u32[]', space=smem, size = 0x4, offset = 0x4, fixed_abs, tag = 'smem constant byte address 0x4 - core index']
  #allocation1 [shape = 'u32[144,128]{1,0:T(1,128)}', space=vmem, size = 0x12000, scoped, tag = 'internal scratch']
  %s0 = inlined_call_operand.vmem [shape: f32[64,32], index: 0, kind: input, shape index: {}]
  %s1 = inlined_call_operand.hbm [shape: f32[32,128], index: 1, kind: input, shape index: {}]
  %s2 = inlined_call_operand.vmem [shape: f32[1,128], index: 2, kind: input, shape index: {}]
  %s3 = inlined_call_operand.hbm [shape: f32[128,128], index: 3, kind: input, shape index: {}]
  %s4 = inlined_call_operand.hbm [shape: f32[128,128], index: 4, kind: input, shape index: {}]
  %s5 = inlined_call_operand.hbm [shape: f32[128,128], index: 5, kind: input, shape index: {}]
  %s6 = inlined_call_operand.vmem [shape: f32[1,128], index: 6, kind: input, shape index: {}]
  %s7 = inlined_call_operand.hbm [shape: f32[128,128], index: 7, kind: input, shape index: {}]
  %s8 = inlined_call_operand.hbm [shape: f32[1,128], index: 8, kind: input, shape index: {}]
  %s9 = inlined_call_operand.vmem [shape: f32[128,128], index: 9, kind: input, shape index: {}]
  %s10 = inlined_call_operand.vmem [shape: f32[1,128], index: 10, kind: input, shape index: {}]
  %s11 = inlined_call_operand.hbm [shape: f32[8,128], index: 11, kind: output, shape index: {}]
  %s12 = sld [smem:[#allocation0]]
  $region78: #{tpu_custom_call.1} parent=0
    _
  %s14 = ssub.s32 1, %s12
  %s15 = scalar_select 0, %s14, %s12
  $region1: #{tpu_custom_call.1} parent=0
    #allocation2 [shape = 'u8[16384]{0}', space=vmem, size = 0x4000, scoped, tag = 'input window, operand 1, single buffered']
    #allocation3 [shape = 's32[1]{0}', space=sflag, size = 0x4, scoped, tag = 'scoped memory for tpu_custom_call.1']
    #allocation4 [shape = 's32[1]{0}', space=sflag, size = 0x4, scoped, tag = 'scoped memory for tpu_custom_call.1']
    #allocation5 [shape = 'u8[65536]{0}', space=vmem, size = 0x10000, scoped, tag = 'input window, operand 3, single buffered']
    #allocation6 [shape = 's32[1]{0}', space=sflag, size = 0x4, scoped, tag = 'scoped memory for tpu_custom_call.1']
    #allocation7 [shape = 'u8[65536]{0}', space=vmem, size = 0x10000, scoped, tag = 'input window, operand 4, single buffered']
    #allocation8 [shape = 'u8[65536]{0}', space=vmem, size = 0x10000, scoped, tag = 'input window, operand 5, single buffered']
    #allocation9 [shape = 's32[1]{0}', space=sflag, size = 0x4, scoped, tag = 'scoped memory for tpu_custom_call.1']
    #allocation10 [shape = 'u8[65536]{0}', space=vmem, size = 0x10000, scoped, tag = 'input window, operand 7, single buffered']
    #allocation11 [shape = 'u8[512]{0}', space=vmem, size = 0x400, scoped, tag = 'input window, operand 8, single buffered']
    #allocation12 [shape = 's32[1]{0}', space=sflag, size = 0x4, scoped, tag = 'scoped memory for tpu_custom_call.1']
    #allocation13 [shape = 'u8[4096]{0}', space=vmem, size = 0x1000, scoped, tag = 'output window, operand 0, single buffered']
    %16 = vsyncpa [#allocation3], 0
    %17 = vsyncpa [#allocation6], 0
    %18 = vsyncpa [#allocation9], 0
    %19 = vsyncpa [#allocation12], 0
    %20 = vsyncpa [#allocation4], 0
    // Predicated region
    $region2: #{tpu_custom_call.1} parent=1 // pred_check
      _
    $region3: #{tpu_custom_call.1} parent=1 // pred_check_branch
      %22 = sbr.rel (0) target = $region5
    $region4: #{tpu_custom_call.1} parent=1 // pred_region
      _
    $region5: #{tpu_custom_call.1} parent=1 // pred_fallthru
      _
    // Predicated region
    $region6: #{tpu_custom_call.1} parent=1 // pred_check
      _
    $region7: #{tpu_custom_call.1} parent=1 // pred_check_branch
      %24 = sbr.rel (0) target = $region9
    $region8: #{tpu_custom_call.1} parent=1 // pred_region
      %s26 = ssub.s32 512, 512
      %27 = vsyncadd [#allocation3], %s26
      %s28 = sshll.u32 [#allocation2], 4
      %s29 = int_to_ptr.vmem [resolvable:$true] %s28
      %34 = dma.hbm_to_vmem [thread:$0]  %s1, 512, %s29, [#allocation3], 128, 128, 8
    $region9: #{tpu_custom_call.1} parent=1 // pred_fallthru
      _
    // Predicated region
    $region10: #{tpu_custom_call.1} parent=1 // pred_check
      _
    $region11: #{tpu_custom_call.1} parent=1 // pred_check_branch
      %36 = sbr.rel (0) target = $region13
    $region12: #{tpu_custom_call.1} parent=1 // pred_region
      _
    $region13: #{tpu_custom_call.1} parent=1 // pred_fallthru
      _
    // Predicated region
    $region14: #{tpu_custom_call.1} parent=1 // pred_check
      _
    $region15: #{tpu_custom_call.1} parent=1 // pred_check_branch
      %38 = sbr.rel (0) target = $region17
    $region16: #{tpu_custom_call.1} parent=1 // pred_region
      %s40 = ssub.s32 2048, 2048
      %41 = vsyncadd [#allocation6], %s40
      %s42 = sshll.u32 [#allocation5], 4
      %s43 = int_to_ptr.vmem [resolvable:$true] %s42
      %48 = dma.hbm_to_vmem [thread:$0]  %s3, 2048, %s43, [#allocation6], 128, 128, 8
    $region17: #{tpu_custom_call.1} parent=1 // pred_fallthru
      _
    // Predicated region
    $region18: #{tpu_custom_call.1} parent=1 // pred_check
      _
    $region19: #{tpu_custom_call.1} parent=1 // pred_check_branch
      %50 = sbr.rel (0) target = $region21
    $region20: #{tpu_custom_call.1} parent=1 // pred_region
      %s52 = ssub.s32 2048, 2048
      %53 = vsyncadd [#allocation6], %s52
      %s54 = sshll.u32 [#allocation7], 4
      %s55 = int_to_ptr.vmem [resolvable:$true] %s54
      %60 = dma.hbm_to_vmem [thread:$0]  %s4, 2048, %s55, [#allocation6], 128, 128, 8
    $region21: #{tpu_custom_call.1} parent=1 // pred_fallthru
      _
    // Predicated region
    $region22: #{tpu_custom_call.1} parent=1 // pred_check
      _
    $region23: #{tpu_custom_call.1} parent=1 // pred_check_branch
      %62 = sbr.rel (0) target = $region25
    $region24: #{tpu_custom_call.1} parent=1 // pred_region
      %s64 = ssub.s32 2048, 2048
      %65 = vsyncadd [#allocation9], %s64
      %s66 = sshll.u32 [#allocation8], 4
      %s67 = int_to_ptr.vmem [resolvable:$true] %s66
      %72 = dma.hbm_to_vmem [thread:$0]  %s5, 2048, %s67, [#allocation9], 128, 128, 8
    $region25: #{tpu_custom_call.1} parent=1 // pred_fallthru
      _
    // Predicated region
    $region26: #{tpu_custom_call.1} parent=1 // pred_check
      _
    $region27: #{tpu_custom_call.1} parent=1 // pred_check_branch
      %74 = sbr.rel (0) target = $region29
    $region28: #{tpu_custom_call.1} parent=1 // pred_region
      _
    $region29: #{tpu_custom_call.1} parent=1 // pred_fallthru
      _
    // Predicated region
    $region30: #{tpu_custom_call.1} parent=1 // pred_check
      _
    $region31: #{tpu_custom_call.1} parent=1 // pred_check_branch
      %76 = sbr.rel (0) target = $region33
    $region32: #{tpu_custom_call.1} parent=1 // pred_region
      %s78 = ssub.s32 2048, 2048
      %79 = vsyncadd [#allocation9], %s78
      %s80 = sshll.u32 [#allocation10], 4
      %s81 = int_to_ptr.vmem [resolvable:$true] %s80
      %86 = dma.hbm_to_vmem [thread:$0]  %s7, 2048, %s81, [#allocation9], 128, 128, 8
    $region33: #{tpu_custom_call.1} parent=1 // pred_fallthru
      _
    // Predicated region
    $region34: #{tpu_custom_call.1} parent=1 // pred_check
      _
    $region35: #{tpu_custom_call.1} parent=1 // pred_check_branch
      %88 = sbr.rel (0) target = $region37
    $region36: #{tpu_custom_call.1} parent=1 // pred_region
      %s90 = ssub.s32 16, 16
      %91 = vsyncadd [#allocation12], %s90
      %s93 = sshll.u32 [#allocation11], 4
      %s94 = int_to_ptr.vmem [resolvable:$true] %s93
      %96 = dma.hbm_to_vmem [thread:$0]  %s8, 16, %s94, [#allocation12]
    $region37: #{tpu_custom_call.1} parent=1 // pred_fallthru
      _
    // Predicated region
    $region38: #{tpu_custom_call.1} parent=1 // pred_check
      _
    $region39: #{tpu_custom_call.1} parent=1 // pred_check_branch
      %98 = sbr.rel (0) target = $region41
    $region40: #{tpu_custom_call.1} parent=1 // pred_region
      _
    $region41: #{tpu_custom_call.1} parent=1 // pred_fallthru
      _
    // Predicated region
    $region42: #{tpu_custom_call.1} parent=1 // pred_check
      _
    $region43: #{tpu_custom_call.1} parent=1 // pred_check_branch
      %100 = sbr.rel (0) target = $region45
    $region44: #{tpu_custom_call.1} parent=1 // pred_region
      _
    $region45: #{tpu_custom_call.1} parent=1 // pred_fallthru
      _
    // Predicated region
    $region46: #{tpu_custom_call.1} parent=1 // pred_check
      _
    $region47: #{tpu_custom_call.1} parent=1 // pred_check_branch
      %102 = sbr.rel (0) target = $region49
    $region48: #{tpu_custom_call.1} parent=1 // pred_region
      %103 = dma.done [#allocation3], 512
    $region49: #{tpu_custom_call.1} parent=1 // pred_fallthru
      _
    // Predicated region
    $region50: #{tpu_custom_call.1} parent=1 // pred_check
      _
    $region51: #{tpu_custom_call.1} parent=1 // pred_check_branch
      %105 = sbr.rel (0) target = $region53
    $region52: #{tpu_custom_call.1} parent=1 // pred_region
      %106 = dma.done [#allocation6], 2048
    $region53: #{tpu_custom_call.1} parent=1 // pred_fallthru
      _
    // Predicated region
    $region54: #{tpu_custom_call.1} parent=1 // pred_check
      _
    $region55: #{tpu_custom_call.1} parent=1 // pred_check_branch
      %108 = sbr.rel (0) target = $region57
    $region56: #{tpu_custom_call.1} parent=1 // pred_region
      %109 = dma.done [#allocation6], 2048
    $region57: #{tpu_custom_call.1} parent=1 // pred_fallthru
      _
    // Predicated region
    $region58: #{tpu_custom_call.1} parent=1 // pred_check
      _
    $region59: #{tpu_custom_call.1} parent=1 // pred_check_branch
      %111 = sbr.rel (0) target = $region61
    $region60: #{tpu_custom_call.1} parent=1 // pred_region
      %112 = dma.done [#allocation9], 2048
    $region61: #{tpu_custom_call.1} parent=1 // pred_fallthru
      _
    // Predicated region
    $region62: #{tpu_custom_call.1} parent=1 // pred_check
      _
    $region63: #{tpu_custom_call.1} parent=1 // pred_check_branch
      %114 = sbr.rel (0) target = $region65
    $region64: #{tpu_custom_call.1} parent=1 // pred_region
      %115 = dma.done [#allocation9], 2048
    $region65: #{tpu_custom_call.1} parent=1 // pred_fallthru
      _
    // Predicated region
    $region66: #{tpu_custom_call.1} parent=1 // pred_check
      _
    $region67: #{tpu_custom_call.1} parent=1 // pred_check_branch
      %117 = sbr.rel (0) target = $region69
    $region68: #{tpu_custom_call.1} parent=1 // pred_region
      %118 = dma.done [#allocation12], 16
    $region69: #{tpu_custom_call.1} parent=1 // pred_fallthru
      _
    %v119 = vld [vmem:[%s0] sm:$0xff]
    %v120 = vld [vmem:[%s0 + $0x8] sm:$0xff]
    %v121 = vld [vmem:[%s0 + $0x10] sm:$0xff]
    %v122 = vld [vmem:[%s0 + $0x18] sm:$0xff]
    %v123 = vld [vmem:[%s0 + $0x20] sm:$0xff]
    %v124 = vld [vmem:[%s0 + $0x28] sm:$0xff]
    %v125 = vld [vmem:[%s0 + $0x30] sm:$0xff]
    %v126 = vld [vmem:[%s0 + $0x38] sm:$0xff]
    %v127 = vld [vmem:[#allocation2] sm:$0xff]
    %v128 = vld [vmem:[#allocation2 + $0x8] sm:$0xff]
    %v129 = vld [vmem:[#allocation2 + $0x10] sm:$0xff]
    %v130 = vld [vmem:[#allocation2 + $0x18] sm:$0xff]
    %v131 = vld [vmem:[%s2] sm:$0x1]
    %v133 = vlaneseq
    %v134 = vshrl.u32 %v133, 7
    %v135 = vsub.s32 0, %v134
    %v136 = vrot.slane %v131, %v135
    %vm138 = vcmask 261120
    %v140 = vsel %vm138, %v119, 0
    %v143 = vsel %vm138, %v120, 0
    %v146 = vsel %vm138, %v121, 0
    %v149 = vsel %vm138, %v122, 0
    %v152 = vsel %vm138, %v123, 0
    %v155 = vsel %vm138, %v124, 0
    %v158 = vsel %vm138, %v125, 0
    %v161 = vsel %vm138, %v126, 0
    %163 = vmatprep.subr.mxu0 0.0
    %164 = vmatpush1.msra.mxu0 %v127
    %165 = vmatprep.subr.mxu0 0.0
    %166 = vmatpush1.msra.mxu0 %v128
    %167 = vmatprep.subr.mxu0 0.0
    %168 = vmatpush1.msra.mxu0 %v129
    %169 = vmatprep.subr.mxu0 0.0
    %170 = vmatpush1.msra.mxu0 %v130
    %171 = vmatprep.subr.mxu0 0.0
    %172 = vmatpush1.msra.mxu0 0.0
    %173 = vmatprep.subr.mxu0 0.0
    %174 = vmatpush1.msra.mxu0 0.0
    %175 = vmatprep.subr.mxu0 0.0
    %176 = vmatpush1.msra.mxu0 0.0
    %177 = vmatprep.subr.mxu0 0.0
    %178 = vmatpush1.msra.mxu0 0.0
    %179 = vmatprep.subr.mxu0 0.0
    %180 = vmatpush1.msra.mxu0 0.0
    %181 = vmatprep.subr.mxu0 0.0
    %182 = vmatpush1.msra.mxu0 0.0
    %183 = vmatprep.subr.mxu0 0.0
    %184 = vmatpush1.msra.mxu0 0.0
    %185 = vmatprep.subr.mxu0 0.0
    %186 = vmatpush1.msra.mxu0 0.0
    %187 = vmatprep.subr.mxu0 0.0
    %188 = vmatpush1.msra.mxu0 0.0
    %189 = vmatprep.subr.mxu0 0.0
    %190 = vmatpush1.msra.mxu0 0.0
    %191 = vmatprep.subr.mxu0 0.0
    %192 = vmatpush1.msra.mxu0 0.0
    %193 = vmatprep.subr.mxu0 0.0
    %194 = vmatpush1.msra.mxu0 0.0
    %195 = vmatprep.subr.mxu0 0.0
    %196 = vmatpush1.msra.mxu0 0.0
    %197 = vmatprep.subr.mxu0 0.0
    %198 = vmatpush1.msra.mxu0 0.0
    %199 = vmatprep.subr.mxu0 0.0
    %200 = vmatpush1.msra.mxu0 0.0
    %201 = vmatprep.subr.mxu0 0.0
    %202 = vmatpush1.msra.mxu0 0.0
    %203 = vmatprep.subr.mxu0 0.0
    %204 = vmatpush1.msra.mxu0 0.0
    %205 = vmatprep.subr.mxu0 0.0
    %206 = vmatpush1.msra.mxu0 0.0
    %207 = vmatprep.subr.mxu0 0.0
    %208 = vmatpush1.msra.mxu0 0.0
    %209 = vmatprep.subr.mxu0 0.0
    %210 = vmatpush1.msra.mxu0 0.0
    %211 = vmatprep.subr.mxu0 0.0
    %212 = vmatpush1.msra.mxu0 0.0
    %213 = vmatprep.subr.mxu0 0.0
    %214 = vmatpush1.msra.mxu0 0.0
    %215 = vmatprep.subr.mxu0 0.0
    %216 = vmatpush1.msra.mxu0 0.0
    %217 = vmatprep.subr.mxu0 0.0
    %218 = vmatpush1.msra.mxu0 0.0
    %219 = vmatprep.subr.mxu0 0.0
    %220 = vmatpush1.msra.mxu0 0.0
    %221 = vmatprep.subr.mxu0 0.0
    %222 = vmatpush1.msra.mxu0 0.0
    %223 = vmatprep.subr.mxu0 0.0
    %224 = vmatpush1.msra.mxu0 0.0
    %225 = vmatprep.subr.mxu0 0.0
    %226 = vmatpush1.msra.mxu0 0.0
    %227 = vmatprep.mubr.f32.mxu0 0.0
    %228 = vmatmul.mubr.f32.gmra.mrb[0].mxu0 %v140
    %v229 = vpop.f32.mrb[0].mxu0
    %v230 = vadd.f32 %v136, %v229
    %v231 = vpop.f32.mrb[0].mxu0
    %232 = vmatprep.mubr.f32.mxu0 0.0
    %233 = vmatmul.mubr.f32.gmra.mrb[0].mxu0 %v143
    %v234 = vpop.f32.mrb[0].mxu0
    %v235 = vadd.f32 %v136, %v234
    %v236 = vpop.f32.mrb[0].mxu0
    %237 = vmatprep.mubr.f32.mxu0 0.0
    %238 = vmatmul.mubr.f32.gmra.mrb[0].mxu0 %v146
    %v239 = vpop.f32.mrb[0].mxu0
    %v240 = vadd.f32 %v136, %v239
    %v241 = vpop.f32.mrb[0].mxu0
    %242 = vmatprep.mubr.f32.mxu0 0.0
    %243 = vmatmul.mubr.f32.gmra.mrb[0].mxu0 %v149
    %v244 = vpop.f32.mrb[0].mxu0
    %v245 = vadd.f32 %v136, %v244
    %v246 = vpop.f32.mrb[0].mxu0
    %247 = vmatprep.mubr.f32.mxu0 0.0
    %248 = vmatmul.mubr.f32.gmra.mrb[0].mxu0 %v152
    %v249 = vpop.f32.mrb[0].mxu0
    %v250 = vadd.f32 %v136, %v249
    %v251 = vpop.f32.mrb[0].mxu0
    %252 = vmatprep.mubr.f32.mxu0 0.0
    %253 = vmatmul.mubr.f32.gmra.mrb[0].mxu0 %v155
    %v254 = vpop.f32.mrb[0].mxu0
    %v255 = vadd.f32 %v136, %v254
    %v256 = vpop.f32.mrb[0].mxu0
    %257 = vmatprep.mubr.f32.mxu0 0.0
    %258 = vmatmul.mubr.f32.gmra.mrb[0].mxu0 %v158
    %v259 = vpop.f32.mrb[0].mxu0
    %v260 = vadd.f32 %v136, %v259
    %v261 = vpop.f32.mrb[0].mxu0
    %262 = vmatprep.mubr.f32.mxu0 0.0
    %263 = vmatmul.mubr.f32.gmra.mrb[0].mxu0 %v161
    %v264 = vpop.f32.mrb[0].mxu0
    %v265 = vadd.f32 %v136, %v264
    %v266 = vpop.f32.mrb[0].mxu0
    %267 = vdwg.mxu0
    %v268 = vld [vmem:[#allocation5] sm:$0xff]
    %v269 = vld [vmem:[#allocation5 + $0x8] sm:$0xff]
    %v270 = vld [vmem:[#allocation5 + $0x10] sm:$0xff]
    %v271 = vld [vmem:[#allocation5 + $0x18] sm:$0xff]
    %v272 = vld [vmem:[#allocation5 + $0x20] sm:$0xff]
    %v273 = vld [vmem:[#allocation5 + $0x28] sm:$0xff]
    %v274 = vld [vmem:[#allocation5 + $0x30] sm:$0xff]
    %v275 = vld [vmem:[#allocation5 + $0x38] sm:$0xff]
    %v276 = vld [vmem:[#allocation5 + $0x40] sm:$0xff]
    %v277 = vld [vmem:[#allocation5 + $0x48] sm:$0xff]
    %v278 = vld [vmem:[#allocation5 + $0x50] sm:$0xff]
    %v279 = vld [vmem:[#allocation5 + $0x58] sm:$0xff]
    %v280 = vld [vmem:[#allocation5 + $0x60] sm:$0xff]
    %v281 = vld [vmem:[#allocation5 + $0x68] sm:$0xff]
    %v282 = vld [vmem:[#allocation5 + $0x70] sm:$0xff]
    %v283 = vld [vmem:[#allocation5 + $0x78] sm:$0xff]
    %v284 = vld [vmem:[#allocation7] sm:$0xff]
    %v285 = vld [vmem:[#allocation7 + $0x8] sm:$0xff]
    %v286 = vld [vmem:[#allocation7 + $0x10] sm:$0xff]
    %v287 = vld [vmem:[#allocation7 + $0x18] sm:$0xff]
    %v288 = vld [vmem:[#allocation7 + $0x20] sm:$0xff]
    %v289 = vld [vmem:[#allocation7 + $0x28] sm:$0xff]
    %v290 = vld [vmem:[#allocation7 + $0x30] sm:$0xff]
    %v291 = vld [vmem:[#allocation7 + $0x38] sm:$0xff]
    %v292 = vld [vmem:[#allocation7 + $0x40] sm:$0xff]
    %v293 = vld [vmem:[#allocation7 + $0x48] sm:$0xff]
    %v294 = vld [vmem:[#allocation7 + $0x50] sm:$0xff]
    %v295 = vld [vmem:[#allocation7 + $0x58] sm:$0xff]
    %v296 = vld [vmem:[#allocation7 + $0x60] sm:$0xff]
    %v297 = vld [vmem:[#allocation7 + $0x68] sm:$0xff]
    %v298 = vld [vmem:[#allocation7 + $0x70] sm:$0xff]
    %v299 = vld [vmem:[#allocation7 + $0x78] sm:$0xff]
    %v300 = vld [vmem:[#allocation8] sm:$0xff]
    %v301 = vld [vmem:[#allocation8 + $0x8] sm:$0xff]
    %v302 = vld [vmem:[#allocation8 + $0x10] sm:$0xff]
    %v303 = vld [vmem:[#allocation8 + $0x18] sm:$0xff]
    %v304 = vld [vmem:[#allocation8 + $0x20] sm:$0xff]
    %v305 = vld [vmem:[#allocation8 + $0x28] sm:$0xff]
    %v306 = vld [vmem:[#allocation8 + $0x30] sm:$0xff]
    %v307 = vld [vmem:[#allocation8 + $0x38] sm:$0xff]
    %v308 = vld [vmem:[#allocation8 + $0x40] sm:$0xff]
    %v309 = vld [vmem:[#allocation8 + $0x48] sm:$0xff]
    %v310 = vld [vmem:[#allocation8 + $0x50] sm:$0xff]
    %v311 = vld [vmem:[#allocation8 + $0x58] sm:$0xff]
    %v312 = vld [vmem:[#allocation8 + $0x60] sm:$0xff]
    %v313 = vld [vmem:[#allocation8 + $0x68] sm:$0xff]
    %v314 = vld [vmem:[#allocation8 + $0x70] sm:$0xff]
    %v315 = vld [vmem:[#allocation8 + $0x78] sm:$0xff]
    %v316 = vld [vmem:[%s6] sm:$0x1]
    %v318 = vlaneseq
    %v319 = vshrl.u32 %v318, 7
    %v320 = vsub.s32 0, %v319
    %v321 = vrot.slane %v316, %v320
    %323 = vmatprep.subr.mxu0 0.0
    %324 = vmatpush1.msra.mxu0 %v268
    %325 = vmatprep.subr.mxu0 0.0
    %326 = vmatpush1.msra.mxu0 %v269
    %327 = vmatprep.subr.mxu0 0.0
    %328 = vmatpush1.msra.mxu0 %v270
    %329 = vmatprep.subr.mxu0 0.0
    %330 = vmatpush1.msra.mxu0 %v271
    %331 = vmatprep.subr.mxu0 0.0
    %332 = vmatpush1.msra.mxu0 %v272
    %333 = vmatprep.subr.mxu0 0.0
    %334 = vmatpush1.msra.mxu0 %v273
    %335 = vmatprep.subr.mxu0 0.0
    %336 = vmatpush1.msra.mxu0 %v274
    %337 = vmatprep.subr.mxu0 0.0
    %338 = vmatpush1.msra.mxu0 %v275
    %339 = vmatprep.subr.mxu0 0.0
    %340 = vmatpush1.msra.mxu0 %v276
    %341 = vmatprep.subr.mxu0 0.0
    %342 = vmatpush1.msra.mxu0 %v277
    %343 = vmatprep.subr.mxu0 0.0
    %344 = vmatpush1.msra.mxu0 %v278
    %345 = vmatprep.subr.mxu0 0.0
    %346 = vmatpush1.msra.mxu0 %v279
    %347 = vmatprep.subr.mxu0 0.0
    %348 = vmatpush1.msra.mxu0 %v280
    %349 = vmatprep.subr.mxu0 0.0
    %350 = vmatpush1.msra.mxu0 %v281
    %351 = vmatprep.subr.mxu0 0.0
    %352 = vmatpush1.msra.mxu0 %v282
    %353 = vmatprep.subr.mxu0 0.0
    %354 = vmatpush1.msra.mxu0 %v283
    %355 = vmatprep.subr.mxu0 0.0
    %356 = vmatpush1.msra.mxu0 0.0
    %357 = vmatprep.subr.mxu0 0.0
    %358 = vmatpush1.msra.mxu0 0.0
    %359 = vmatprep.subr.mxu0 0.0
    %360 = vmatpush1.msra.mxu0 0.0
    %361 = vmatprep.subr.mxu0 0.0
    %362 = vmatpush1.msra.mxu0 0.0
    %363 = vmatprep.subr.mxu0 0.0
    %364 = vmatpush1.msra.mxu0 0.0
    %365 = vmatprep.subr.mxu0 0.0
    %366 = vmatpush1.msra.mxu0 0.0
    %367 = vmatprep.subr.mxu0 0.0
    %368 = vmatpush1.msra.mxu0 0.0
    %369 = vmatprep.subr.mxu0 0.0
    %370 = vmatpush1.msra.mxu0 0.0
    %371 = vmatprep.subr.mxu0 0.0
    %372 = vmatpush1.msra.mxu0 0.0
    %373 = vmatprep.subr.mxu0 0.0
    %374 = vmatpush1.msra.mxu0 0.0
    %375 = vmatprep.subr.mxu0 0.0
    %376 = vmatpush1.msra.mxu0 0.0
    %377 = vmatprep.subr.mxu0 0.0
    %378 = vmatpush1.msra.mxu0 0.0
    %379 = vmatprep.subr.mxu0 0.0
    %380 = vmatpush1.msra.mxu0 0.0
    %381 = vmatprep.subr.mxu0 0.0
    %382 = vmatpush1.msra.mxu0 0.0
    %383 = vmatprep.subr.mxu0 0.0
    %384 = vmatpush1.msra.mxu0 0.0
    %385 = vmatprep.subr.mxu0 0.0
    %386 = vmatpush1.msra.mxu0 0.0
    %387 = vmatprep.mubr.f32.mxu0 0.0
    %388 = vmatmul.mubr.f32.gmra.mrb[0].mxu0 0.0
    %v389 = vpop.f32.mrb[0].mxu0
    %v390 = vadd.f32 0.0, %v389
    %v391 = vpop.f32.mrb[0].mxu0
    %392 = vdwg.mxu0
    %v393 = vadd.f32 %v230, %v390
    %v394 = vxor.u32 %v393, 2147483648
    %v395 = vmul.f32 %v394, 1.442695
    %v396 = vpow.pop %v395
    %v397 = vadd.f32 %v396, 1.0
    %v398 = vrcp.pop %v397
    %v399 = vmul.f32 1.0, %v398
    %v400 = vtanh.pop %v393
    %401 = vrot.lane.b32.xlu0 %v399, 112
    %v402 = vpop.permute.xlu0 %401
    %403 = vrot.lane.b32.xlu0 %v399, 96
    %v404 = vpop.permute.xlu0 %403
    %405 = vrot.lane.b32.xlu0 %v400, 80
    %v406 = vpop.permute.xlu0 %405
    %v407 = vmul.f32 %v402, 0.0
    %v408 = vmul.f32 %v399, %v406
    %v409 = vadd.f32 %v407, %v408
    %v410 = vtanh.pop %v409
    %v411 = vmul.f32 %v404, %v410
    %412 = vmatprep.subr.mxu0 0.0
    %413 = vmatpush1.msra.mxu0 %v300
    %414 = vmatprep.subr.mxu0 0.0
    %415 = vmatpush1.msra.mxu0 %v301
    %416 = vmatprep.subr.mxu0 0.0
    %417 = vmatpush1.msra.mxu0 %v302
    %418 = vmatprep.subr.mxu0 0.0
    %419 = vmatpush1.msra.mxu0 %v303
    %420 = vmatprep.subr.mxu0 0.0
    %421 = vmatpush1.msra.mxu0 %v304
    %422 = vmatprep.subr.mxu0 0.0
    %423 = vmatpush1.msra.mxu0 %v305
    %424 = vmatprep.subr.mxu0 0.0
    %425 = vmatpush1.msra.mxu0 %v306
    %426 = vmatprep.subr.mxu0 0.0
    %427 = vmatpush1.msra.mxu0 %v307
    %428 = vmatprep.subr.mxu0 0.0
    %429 = vmatpush1.msra.mxu0 %v308
    %430 = vmatprep.subr.mxu0 0.0
    %431 = vmatpush1.msra.mxu0 %v309
    %432 = vmatprep.subr.mxu0 0.0
    %433 = vmatpush1.msra.mxu0 %v310
    %434 = vmatprep.subr.mxu0 0.0
    %435 = vmatpush1.msra.mxu0 %v311
    %436 = vmatprep.subr.mxu0 0.0
    %437 = vmatpush1.msra.mxu0 %v312
    %438 = vmatprep.subr.mxu0 0.0
    %439 = vmatpush1.msra.mxu0 %v313
    %440 = vmatprep.subr.mxu0 0.0
    %441 = vmatpush1.msra.mxu0 %v314
    %442 = vmatprep.subr.mxu0 0.0
    %443 = vmatpush1.msra.mxu0 %v315
    %444 = vmatprep.subr.mxu0 0.0
    %445 = vmatpush1.msra.mxu0 0.0
    %446 = vmatprep.subr.mxu0 0.0
    %447 = vmatpush1.msra.mxu0 0.0
    %448 = vmatprep.subr.mxu0 0.0
    %449 = vmatpush1.msra.mxu0 0.0
    %450 = vmatprep.subr.mxu0 0.0
    %451 = vmatpush1.msra.mxu0 0.0
    %452 = vmatprep.subr.mxu0 0.0
    %453 = vmatpush1.msra.mxu0 0.0
    %454 = vmatprep.subr.mxu0 0.0
    %455 = vmatpush1.msra.mxu0 0.0
    %456 = vmatprep.subr.mxu0 0.0
    %457 = vmatpush1.msra.mxu0 0.0
    %458 = vmatprep.subr.mxu0 0.0
    %459 = vmatpush1.msra.mxu0 0.0
    %460 = vmatprep.subr.mxu0 0.0
    %461 = vmatpush1.msra.mxu0 0.0
    %462 = vmatprep.subr.mxu0 0.0
    %463 = vmatpush1.msra.mxu0 0.0
    %464 = vmatprep.subr.mxu0 0.0
    %465 = vmatpush1.msra.mxu0 0.0
    %466 = vmatprep.subr.mxu0 0.0
    %467 = vmatpush1.msra.mxu0 0.0
    %468 = vmatprep.subr.mxu0 0.0
    %469 = vmatpush1.msra.mxu0 0.0
    %470 = vmatprep.subr.mxu0 0.0
    %471 = vmatpush1.msra.mxu0 0.0
    %472 = vmatprep.subr.mxu0 0.0
    %473 = vmatpush1.msra.mxu0 0.0
    %474 = vmatprep.subr.mxu0 0.0
    %475 = vmatpush1.msra.mxu0 0.0
    %476 = vmatprep.mubr.f32.mxu0 0.0
    %477 = vmatmul.mubr.f32.gmra.mrb[0].mxu0 0.0
    %v478 = vpop.f32.mrb[0].mxu0
    %v479 = vadd.f32 0.0, %v478
    %v480 = vpop.f32.mrb[0].mxu0
    %481 = vdwg.mxu0
    %482 = vmatprep.subr.mxu0 0.0
    %483 = vmatpush1.msra.mxu0 %v284
    %484 = vmatprep.subr.mxu0 0.0
    %485 = vmatpush1.msra.mxu0 %v285
    %486 = vmatprep.subr.mxu0 0.0
    %487 = vmatpush1.msra.mxu0 %v286
    %488 = vmatprep.subr.mxu0 0.0
    %489 = vmatpush1.msra.mxu0 %v287
    %490 = vmatprep.subr.mxu0 0.0
    %491 = vmatpush1.msra.mxu0 %v288
    %492 = vmatprep.subr.mxu0 0.0
    %493 = vmatpush1.msra.mxu0 %v289
    %494 = vmatprep.subr.mxu0 0.0
    %495 = vmatpush1.msra.mxu0 %v290
    %496 = vmatprep.subr.mxu0 0.0
    %497 = vmatpush1.msra.mxu0 %v291
    %498 = vmatprep.subr.mxu0 0.0
    %499 = vmatpush1.msra.mxu0 %v292
    %500 = vmatprep.subr.mxu0 0.0
    %501 = vmatpush1.msra.mxu0 %v293
    %502 = vmatprep.subr.mxu0 0.0
    %503 = vmatpush1.msra.mxu0 %v294
    %504 = vmatprep.subr.mxu0 0.0
    %505 = vmatpush1.msra.mxu0 %v295
    %506 = vmatprep.subr.mxu0 0.0
    %507 = vmatpush1.msra.mxu0 %v296
    %508 = vmatprep.subr.mxu0 0.0
    %509 = vmatpush1.msra.mxu0 %v297
    %510 = vmatprep.subr.mxu0 0.0
    %511 = vmatpush1.msra.mxu0 %v298
    %512 = vmatprep.subr.mxu0 0.0
    %513 = vmatpush1.msra.mxu0 %v299
    %514 = vmatprep.subr.mxu0 0.0
    %515 = vmatpush1.msra.mxu0 0.0
    %516 = vmatprep.subr.mxu0 0.0
    %517 = vmatpush1.msra.mxu0 0.0
    %518 = vmatprep.subr.mxu0 0.0
    %519 = vmatpush1.msra.mxu0 0.0
    %520 = vmatprep.subr.mxu0 0.0
    %521 = vmatpush1.msra.mxu0 0.0
    %522 = vmatprep.subr.mxu0 0.0
    %523 = vmatpush1.msra.mxu0 0.0
    %524 = vmatprep.subr.mxu0 0.0
    %525 = vmatpush1.msra.mxu0 0.0
    %526 = vmatprep.subr.mxu0 0.0
    %527 = vmatpush1.msra.mxu0 0.0
    %528 = vmatprep.subr.mxu0 0.0
    %529 = vmatpush1.msra.mxu0 0.0
    %530 = vmatprep.subr.mxu0 0.0
    %531 = vmatpush1.msra.mxu0 0.0
    %532 = vmatprep.subr.mxu0 0.0
    %533 = vmatpush1.msra.mxu0 0.0
    %534 = vmatprep.subr.mxu0 0.0
    %535 = vmatpush1.msra.mxu0 0.0
    %536 = vmatprep.subr.mxu0 0.0
    %537 = vmatpush1.msra.mxu0 0.0
    %538 = vmatprep.subr.mxu0 0.0
    %539 = vmatpush1.msra.mxu0 0.0
    %540 = vmatprep.subr.mxu0 0.0
    %541 = vmatpush1.msra.mxu0 0.0
    %542 = vmatprep.subr.mxu0 0.0
    %543 = vmatpush1.msra.mxu0 0.0
    %544 = vmatprep.subr.mxu0 0.0
    %545 = vmatpush1.msra.mxu0 0.0
    %546 = vmatprep.mubr.f32.mxu0 0.0
    %547 = vmatmul.mubr.f32.gmra.mrb[0].mxu0 %v411
    %v548 = vpop.f32.mrb[0].mxu0
    %v549 = vadd.f32 %v479, %v548
    %v550 = vpop.f32.mrb[0].mxu0
    %551 = vdwg.mxu0
    %v552 = vadd.f32 %v549, %v321
    %v553 = vxor.u32 %v552, 2147483648
    %v554 = vmul.f32 %v553, 1.442695
    %v555 = vpow.pop %v554
    %v556 = vadd.f32 %v555, 1.0
    %v557 = vrcp.pop %v556
    %v558 = vmul.f32 1.0, %v557
    %v559 = vtanh.pop %v552
    %560 = vrot.lane.b32.xlu0 %v558, 118
    %v561 = vpop.permute.xlu0 %560
    %562 = vrot.lane.b32.xlu0 %v558, 108
    %v563 = vpop.permute.xlu0 %562
    %564 = vrot.lane.b32.xlu0 %v559, 98
    %v565 = vpop.permute.xlu0 %564
    %v566 = vmul.f32 %v561, 0.0
    %v567 = vmul.f32 %v558, %v565
    %v568 = vadd.f32 %v566, %v567
    %v569 = vtanh.pop %v568
    %v570 = vmul.f32 %v563, %v569
    %571 = vmatprep.subr.mxu0 0.0
    %572 = vmatpush1.msra.mxu0 %v268
    %573 = vmatprep.subr.mxu0 0.0
    %574 = vmatpush1.msra.mxu0 %v269
    %575 = vmatprep.subr.mxu0 0.0
    %576 = vmatpush1.msra.mxu0 %v270
    %577 = vmatprep.subr.mxu0 0.0
    %578 = vmatpush1.msra.mxu0 %v271
    %579 = vmatprep.subr.mxu0 0.0
    %580 = vmatpush1.msra.mxu0 %v272
    %581 = vmatprep.subr.mxu0 0.0
    %582 = vmatpush1.msra.mxu0 %v273
    %583 = vmatprep.subr.mxu0 0.0
    %584 = vmatpush1.msra.mxu0 %v274
    %585 = vmatprep.subr.mxu0 0.0
    %586 = vmatpush1.msra.mxu0 %v275
    %587 = vmatprep.subr.mxu0 0.0
    %588 = vmatpush1.msra.mxu0 %v276
    %589 = vmatprep.subr.mxu0 0.0
    %590 = vmatpush1.msra.mxu0 %v277
    %591 = vmatprep.subr.mxu0 0.0
    %592 = vmatpush1.msra.mxu0 %v278
    %593 = vmatprep.subr.mxu0 0.0
    %594 = vmatpush1.msra.mxu0 %v279
    %595 = vmatprep.subr.mxu0 0.0
    %596 = vmatpush1.msra.mxu0 %v280
    %597 = vmatprep.subr.mxu0 0.0
    %598 = vmatpush1.msra.mxu0 %v281
    %599 = vmatprep.subr.mxu0 0.0
    %600 = vmatpush1.msra.mxu0 %v282
    %601 = vmatprep.subr.mxu0 0.0
    %602 = vmatpush1.msra.mxu0 %v283
    %603 = vmatprep.subr.mxu0 0.0
    %604 = vmatpush1.msra.mxu0 0.0
    %605 = vmatprep.subr.mxu0 0.0
    %606 = vmatpush1.msra.mxu0 0.0
    %607 = vmatprep.subr.mxu0 0.0
    %608 = vmatpush1.msra.mxu0 0.0
    %609 = vmatprep.subr.mxu0 0.0
    %610 = vmatpush1.msra.mxu0 0.0
    %611 = vmatprep.subr.mxu0 0.0
    %612 = vmatpush1.msra.mxu0 0.0
    %613 = vmatprep.subr.mxu0 0.0
    %614 = vmatpush1.msra.mxu0 0.0
    %615 = vmatprep.subr.mxu0 0.0
    %616 = vmatpush1.msra.mxu0 0.0
    %617 = vmatprep.subr.mxu0 0.0
    %618 = vmatpush1.msra.mxu0 0.0
    %619 = vmatprep.subr.mxu0 0.0
    %620 = vmatpush1.msra.mxu0 0.0
    %621 = vmatprep.subr.mxu0 0.0
    %622 = vmatpush1.msra.mxu0 0.0
    %623 = vmatprep.subr.mxu0 0.0
    %624 = vmatpush1.msra.mxu0 0.0
    %625 = vmatprep.subr.mxu0 0.0
    %626 = vmatpush1.msra.mxu0 0.0
    %627 = vmatprep.subr.mxu0 0.0
    %628 = vmatpush1.msra.mxu0 0.0
    %629 = vmatprep.subr.mxu0 0.0
    %630 = vmatpush1.msra.mxu0 0.0
    %631 = vmatprep.subr.mxu0 0.0
    %632 = vmatpush1.msra.mxu0 0.0
    %633 = vmatprep.subr.mxu0 0.0
    %634 = vmatpush1.msra.mxu0 0.0
    %635 = vmatprep.mubr.f32.mxu0 0.0
    %636 = vmatmul.mubr.f32.gmra.mrb[0].mxu0 %v411
    %v637 = vpop.f32.mrb[0].mxu0
    %v638 = vadd.f32 0.0, %v637
    %v639 = vpop.f32.mrb[0].mxu0
    %640 = vdwg.mxu0
    %v641 = vadd.f32 %v235, %v638
    %v642 = vxor.u32 %v641, 2147483648
    %v643 = vmul.f32 %v642, 1.442695
    %v644 = vpow.pop %v643
    %v645 = vadd.f32 %v644, 1.0
    %v646 = vrcp.pop %v645
    %v647 = vmul.f32 1.0, %v646
    %v648 = vtanh.pop %v641
    %649 = vrot.lane.b32.xlu0 %v647, 112
    %v650 = vpop.permute.xlu0 %649
    %651 = vrot.lane.b32.xlu0 %v647, 96
    %v652 = vpop.permute.xlu0 %651
    %653 = vrot.lane.b32.xlu0 %v648, 80
    %v654 = vpop.permute.xlu0 %653
    %v655 = vmul.f32 %v650, %v409
    %v656 = vmul.f32 %v647, %v654
    %v657 = vadd.f32 %v655, %v656
    %v658 = vtanh.pop %v657
    %v659 = vmul.f32 %v652, %v658
    %660 = vmatprep.subr.mxu0 0.0
    %661 = vmatpush1.msra.mxu0 %v300
    %662 = vmatprep.subr.mxu0 0.0
    %663 = vmatpush1.msra.mxu0 %v301
    %664 = vmatprep.subr.mxu0 0.0
    %665 = vmatpush1.msra.mxu0 %v302
    %666 = vmatprep.subr.mxu0 0.0
    %667 = vmatpush1.msra.mxu0 %v303
    %668 = vmatprep.subr.mxu0 0.0
    %669 = vmatpush1.msra.mxu0 %v304
    %670 = vmatprep.subr.mxu0 0.0
    %671 = vmatpush1.msra.mxu0 %v305
    %672 = vmatprep.subr.mxu0 0.0
    %673 = vmatpush1.msra.mxu0 %v306
    %674 = vmatprep.subr.mxu0 0.0
    %675 = vmatpush1.msra.mxu0 %v307
    %676 = vmatprep.subr.mxu0 0.0
    %677 = vmatpush1.msra.mxu0 %v308
    %678 = vmatprep.subr.mxu0 0.0
    %679 = vmatpush1.msra.mxu0 %v309
    %680 = vmatprep.subr.mxu0 0.0
    %681 = vmatpush1.msra.mxu0 %v310
    %682 = vmatprep.subr.mxu0 0.0
    %683 = vmatpush1.msra.mxu0 %v311
    %684 = vmatprep.subr.mxu0 0.0
    %685 = vmatpush1.msra.mxu0 %v312
    %686 = vmatprep.subr.mxu0 0.0
    %687 = vmatpush1.msra.mxu0 %v313
    %688 = vmatprep.subr.mxu0 0.0
    %689 = vmatpush1.msra.mxu0 %v314
    %690 = vmatprep.subr.mxu0 0.0
    %691 = vmatpush1.msra.mxu0 %v315
    %692 = vmatprep.subr.mxu0 0.0
    %693 = vmatpush1.msra.mxu0 0.0
    %694 = vmatprep.subr.mxu0 0.0
    %695 = vmatpush1.msra.mxu0 0.0
    %696 = vmatprep.subr.mxu0 0.0
    %697 = vmatpush1.msra.mxu0 0.0
    %698 = vmatprep.subr.mxu0 0.0
    %699 = vmatpush1.msra.mxu0 0.0
    %700 = vmatprep.subr.mxu0 0.0
    %701 = vmatpush1.msra.mxu0 0.0
    %702 = vmatprep.subr.mxu0 0.0
    %703 = vmatpush1.msra.mxu0 0.0
    %704 = vmatprep.subr.mxu0 0.0
    %705 = vmatpush1.msra.mxu0 0.0
    %706 = vmatprep.subr.mxu0 0.0
    %707 = vmatpush1.msra.mxu0 0.0
    %708 = vmatprep.subr.mxu0 0.0
    %709 = vmatpush1.msra.mxu0 0.0
    %710 = vmatprep.subr.mxu0 0.0
    %711 = vmatpush1.msra.mxu0 0.0
    %712 = vmatprep.subr.mxu0 0.0
    %713 = vmatpush1.msra.mxu0 0.0
    %714 = vmatprep.subr.mxu0 0.0
    %715 = vmatpush1.msra.mxu0 0.0
    %716 = vmatprep.subr.mxu0 0.0
    %717 = vmatpush1.msra.mxu0 0.0
    %718 = vmatprep.subr.mxu0 0.0
    %719 = vmatpush1.msra.mxu0 0.0
    %720 = vmatprep.subr.mxu0 0.0
    %721 = vmatpush1.msra.mxu0 0.0
    %722 = vmatprep.subr.mxu0 0.0
    %723 = vmatpush1.msra.mxu0 0.0
    %724 = vmatprep.mubr.f32.mxu0 0.0
    %725 = vmatmul.mubr.f32.gmra.mrb[0].mxu0 %v570
    %v726 = vpop.f32.mrb[0].mxu0
    %v727 = vadd.f32 0.0, %v726
    %v728 = vpop.f32.mrb[0].mxu0
    %729 = vdwg.mxu0
    %730 = vmatprep.subr.mxu0 0.0
    %731 = vmatpush1.msra.mxu0 %v284
    %732 = vmatprep.subr.mxu0 0.0
    %733 = vmatpush1.msra.mxu0 %v285
    %734 = vmatprep.subr.mxu0 0.0
    %735 = vmatpush1.msra.mxu0 %v286
    %736 = vmatprep.subr.mxu0 0.0
    %737 = vmatpush1.msra.mxu0 %v287
    %738 = vmatprep.subr.mxu0 0.0
    %739 = vmatpush1.msra.mxu0 %v288
    %740 = vmatprep.subr.mxu0 0.0
    %741 = vmatpush1.msra.mxu0 %v289
    %742 = vmatprep.subr.mxu0 0.0
    %743 = vmatpush1.msra.mxu0 %v290
    %744 = vmatprep.subr.mxu0 0.0
    %745 = vmatpush1.msra.mxu0 %v291
    %746 = vmatprep.subr.mxu0 0.0
    %747 = vmatpush1.msra.mxu0 %v292
    %748 = vmatprep.subr.mxu0 0.0
    %749 = vmatpush1.msra.mxu0 %v293
    %750 = vmatprep.subr.mxu0 0.0
    %751 = vmatpush1.msra.mxu0 %v294
    %752 = vmatprep.subr.mxu0 0.0
    %753 = vmatpush1.msra.mxu0 %v295
    %754 = vmatprep.subr.mxu0 0.0
    %755 = vmatpush1.msra.mxu0 %v296
    %756 = vmatprep.subr.mxu0 0.0
    %757 = vmatpush1.msra.mxu0 %v297
    %758 = vmatprep.subr.mxu0 0.0
    %759 = vmatpush1.msra.mxu0 %v298
    %760 = vmatprep.subr.mxu0 0.0
    %761 = vmatpush1.msra.mxu0 %v299
    %762 = vmatprep.subr.mxu0 0.0
    %763 = vmatpush1.msra.mxu0 0.0
    %764 = vmatprep.subr.mxu0 0.0
    %765 = vmatpush1.msra.mxu0 0.0
    %766 = vmatprep.subr.mxu0 0.0
    %767 = vmatpush1.msra.mxu0 0.0
    %768 = vmatprep.subr.mxu0 0.0
    %769 = vmatpush1.msra.mxu0 0.0
    %770 = vmatprep.subr.mxu0 0.0
    %771 = vmatpush1.msra.mxu0 0.0
    %772 = vmatprep.subr.mxu0 0.0
    %773 = vmatpush1.msra.mxu0 0.0
    %774 = vmatprep.subr.mxu0 0.0
    %775 = vmatpush1.msra.mxu0 0.0
    %776 = vmatprep.subr.mxu0 0.0
    %777 = vmatpush1.msra.mxu0 0.0
    %778 = vmatprep.subr.mxu0 0.0
    %779 = vmatpush1.msra.mxu0 0.0
    %780 = vmatprep.subr.mxu0 0.0
    %781 = vmatpush1.msra.mxu0 0.0
    %782 = vmatprep.subr.mxu0 0.0
    %783 = vmatpush1.msra.mxu0 0.0
    %784 = vmatprep.subr.mxu0 0.0
    %785 = vmatpush1.msra.mxu0 0.0
    %786 = vmatprep.subr.mxu0 0.0
    %787 = vmatpush1.msra.mxu0 0.0
    %788 = vmatprep.subr.mxu0 0.0
    %789 = vmatpush1.msra.mxu0 0.0
    %790 = vmatprep.subr.mxu0 0.0
    %791 = vmatpush1.msra.mxu0 0.0
    %792 = vmatprep.subr.mxu0 0.0
    %793 = vmatpush1.msra.mxu0 0.0
    %794 = vmatprep.mubr.f32.mxu0 0.0
    %795 = vmatmul.mubr.f32.gmra.mrb[0].mxu0 %v659
    %v796 = vpop.f32.mrb[0].mxu0
    %v797 = vadd.f32 %v727, %v796
    %v798 = vpop.f32.mrb[0].mxu0
    %799 = vdwg.mxu0
    %v800 = vadd.f32 %v797, %v321
    %v801 = vxor.u32 %v800, 2147483648
    %v802 = vmul.f32 %v801, 1.442695
    %v803 = vpow.pop %v802
    %v804 = vadd.f32 %v803, 1.0
    %v805 = vrcp.pop %v804
    %v806 = vmul.f32 1.0, %v805
    %v807 = vtanh.pop %v800
    %808 = vrot.lane.b32.xlu0 %v806, 118
    %v809 = vpop.permute.xlu0 %808
    %810 = vrot.lane.b32.xlu0 %v806, 108
    %v811 = vpop.permute.xlu0 %810
    %812 = vrot.lane.b32.xlu0 %v807, 98
    %v813 = vpop.permute.xlu0 %812
    %v814 = vmul.f32 %v809, %v568
    %v815 = vmul.f32 %v806, %v813
    %v816 = vadd.f32 %v814, %v815
    %v817 = vtanh.pop %v816
    %v818 = vmul.f32 %v811, %v817
    %819 = vmatprep.subr.mxu0 0.0
    %820 = vmatpush1.msra.mxu0 %v268
    %821 = vmatprep.subr.mxu0 0.0
    %822 = vmatpush1.msra.mxu0 %v269
    %823 = vmatprep.subr.mxu0 0.0
    %824 = vmatpush1.msra.mxu0 %v270
    %825 = vmatprep.subr.mxu0 0.0
    %826 = vmatpush1.msra.mxu0 %v271
    %827 = vmatprep.subr.mxu0 0.0
    %828 = vmatpush1.msra.mxu0 %v272
    %829 = vmatprep.subr.mxu0 0.0
    %830 = vmatpush1.msra.mxu0 %v273
    %831 = vmatprep.subr.mxu0 0.0
    %832 = vmatpush1.msra.mxu0 %v274
    %833 = vmatprep.subr.mxu0 0.0
    %834 = vmatpush1.msra.mxu0 %v275
    %835 = vmatprep.subr.mxu0 0.0
    %836 = vmatpush1.msra.mxu0 %v276
    %837 = vmatprep.subr.mxu0 0.0
    %838 = vmatpush1.msra.mxu0 %v277
    %839 = vmatprep.subr.mxu0 0.0
    %840 = vmatpush1.msra.mxu0 %v278
    %841 = vmatprep.subr.mxu0 0.0
    %842 = vmatpush1.msra.mxu0 %v279
    %843 = vmatprep.subr.mxu0 0.0
    %844 = vmatpush1.msra.mxu0 %v280
    %845 = vmatprep.subr.mxu0 0.0
    %846 = vmatpush1.msra.mxu0 %v281
    %847 = vmatprep.subr.mxu0 0.0
    %848 = vmatpush1.msra.mxu0 %v282
    %849 = vmatprep.subr.mxu0 0.0
    %850 = vmatpush1.msra.mxu0 %v283
    %851 = vmatprep.subr.mxu0 0.0
    %852 = vmatpush1.msra.mxu0 0.0
    %853 = vmatprep.subr.mxu0 0.0
    %854 = vmatpush1.msra.mxu0 0.0
    %855 = vmatprep.subr.mxu0 0.0
    %856 = vmatpush1.msra.mxu0 0.0
    %857 = vmatprep.subr.mxu0 0.0
    %858 = vmatpush1.msra.mxu0 0.0
    %859 = vmatprep.subr.mxu0 0.0
    %860 = vmatpush1.msra.mxu0 0.0
    %861 = vmatprep.subr.mxu0 0.0
    %862 = vmatpush1.msra.mxu0 0.0
    %863 = vmatprep.subr.mxu0 0.0
    %864 = vmatpush1.msra.mxu0 0.0
    %865 = vmatprep.subr.mxu0 0.0
    %866 = vmatpush1.msra.mxu0 0.0
    %867 = vmatprep.subr.mxu0 0.0
    %868 = vmatpush1.msra.mxu0 0.0
    %869 = vmatprep.subr.mxu0 0.0
    %870 = vmatpush1.msra.mxu0 0.0
    %871 = vmatprep.subr.mxu0 0.0
    %872 = vmatpush1.msra.mxu0 0.0
    %873 = vmatprep.subr.mxu0 0.0
    %874 = vmatpush1.msra.mxu0 0.0
    %875 = vmatprep.subr.mxu0 0.0
    %876 = vmatpush1.msra.mxu0 0.0
    %877 = vmatprep.subr.mxu0 0.0
    %878 = vmatpush1.msra.mxu0 0.0
    %879 = vmatprep.subr.mxu0 0.0
    %880 = vmatpush1.msra.mxu0 0.0
    %881 = vmatprep.subr.mxu0 0.0
    %882 = vmatpush1.msra.mxu0 0.0
    %883 = vmatprep.mubr.f32.mxu0 0.0
    %884 = vmatmul.mubr.f32.gmra.mrb[0].mxu0 %v659
    %v885 = vpop.f32.mrb[0].mxu0
    %v886 = vadd.f32 0.0, %v885
    %v887 = vpop.f32.mrb[0].mxu0
    %888 = vdwg.mxu0
    %v889 = vadd.f32 %v240, %v886
    %v890 = vxor.u32 %v889, 2147483648
    %v891 = vmul.f32 %v890, 1.442695
    %v892 = vpow.pop %v891
    %v893 = vadd.f32 %v892, 1.0
    %v894 = vrcp.pop %v893
    %v895 = vmul.f32 1.0, %v894
    %v896 = vtanh.pop %v889
    %897 = vrot.lane.b32.xlu0 %v895, 112
    %v898 = vpop.permute.xlu0 %897
    %899 = vrot.lane.b32.xlu0 %v895, 96
    %v900 = vpop.permute.xlu0 %899
    %901 = vrot.lane.b32.xlu0 %v896, 80
    %v902 = vpop.permute.xlu0 %901
    %v903 = vmul.f32 %v898, %v657
    %v904 = vmul.f32 %v895, %v902
    %v905 = vadd.f32 %v903, %v904
    %v906 = vtanh.pop %v905
    %v907 = vmul.f32 %v900, %v906
    %908 = vmatprep.subr.mxu0 0.0
    %909 = vmatpush1.msra.mxu0 %v300
    %910 = vmatprep.subr.mxu0 0.0
    %911 = vmatpush1.msra.mxu0 %v301
    %912 = vmatprep.subr.mxu0 0.0
    %913 = vmatpush1.msra.mxu0 %v302
    %914 = vmatprep.subr.mxu0 0.0
    %915 = vmatpush1.msra.mxu0 %v303
    %916 = vmatprep.subr.mxu0 0.0
    %917 = vmatpush1.msra.mxu0 %v304
    %918 = vmatprep.subr.mxu0 0.0
    %919 = vmatpush1.msra.mxu0 %v305
    %920 = vmatprep.subr.mxu0 0.0
    %921 = vmatpush1.msra.mxu0 %v306
    %922 = vmatprep.subr.mxu0 0.0
    %923 = vmatpush1.msra.mxu0 %v307
    %924 = vmatprep.subr.mxu0 0.0
    %925 = vmatpush1.msra.mxu0 %v308
    %926 = vmatprep.subr.mxu0 0.0
    %927 = vmatpush1.msra.mxu0 %v309
    %928 = vmatprep.subr.mxu0 0.0
    %929 = vmatpush1.msra.mxu0 %v310
    %930 = vmatprep.subr.mxu0 0.0
    %931 = vmatpush1.msra.mxu0 %v311
    %932 = vmatprep.subr.mxu0 0.0
    %933 = vmatpush1.msra.mxu0 %v312
    %934 = vmatprep.subr.mxu0 0.0
    %935 = vmatpush1.msra.mxu0 %v313
    %936 = vmatprep.subr.mxu0 0.0
    %937 = vmatpush1.msra.mxu0 %v314
    %938 = vmatprep.subr.mxu0 0.0
    %939 = vmatpush1.msra.mxu0 %v315
    %940 = vmatprep.subr.mxu0 0.0
    %941 = vmatpush1.msra.mxu0 0.0
    %942 = vmatprep.subr.mxu0 0.0
    %943 = vmatpush1.msra.mxu0 0.0
    %944 = vmatprep.subr.mxu0 0.0
    %945 = vmatpush1.msra.mxu0 0.0
    %946 = vmatprep.subr.mxu0 0.0
    %947 = vmatpush1.msra.mxu0 0.0
    %948 = vmatprep.subr.mxu0 0.0
    %949 = vmatpush1.msra.mxu0 0.0
    %950 = vmatprep.subr.mxu0 0.0
    %951 = vmatpush1.msra.mxu0 0.0
    %952 = vmatprep.subr.mxu0 0.0
    %953 = vmatpush1.msra.mxu0 0.0
    %954 = vmatprep.subr.mxu0 0.0
    %955 = vmatpush1.msra.mxu0 0.0
    %956 = vmatprep.subr.mxu0 0.0
    %957 = vmatpush1.msra.mxu0 0.0
    %958 = vmatprep.subr.mxu0 0.0
    %959 = vmatpush1.msra.mxu0 0.0
    %960 = vmatprep.subr.mxu0 0.0
    %961 = vmatpush1.msra.mxu0 0.0
    %962 = vmatprep.subr.mxu0 0.0
    %963 = vmatpush1.msra.mxu0 0.0
    %964 = vmatprep.subr.mxu0 0.0
    %965 = vmatpush1.msra.mxu0 0.0
    %966 = vmatprep.subr.mxu0 0.0
    %967 = vmatpush1.msra.mxu0 0.0
    %968 = vmatprep.subr.mxu0 0.0
    %969 = vmatpush1.msra.mxu0 0.0
    %970 = vmatprep.subr.mxu0 0.0
    %971 = vmatpush1.msra.mxu0 0.0
    %972 = vmatprep.mubr.f32.mxu0 0.0
    %973 = vmatmul.mubr.f32.gmra.mrb[0].mxu0 %v818
    %v974 = vpop.f32.mrb[0].mxu0
    %v975 = vadd.f32 0.0, %v974
    %v976 = vpop.f32.mrb[0].mxu0
    %977 = vdwg.mxu0
    %978 = vmatprep.subr.mxu0 0.0
    %979 = vmatpush1.msra.mxu0 %v284
    %980 = vmatprep.subr.mxu0 0.0
    %981 = vmatpush1.msra.mxu0 %v285
    %982 = vmatprep.subr.mxu0 0.0
    %983 = vmatpush1.msra.mxu0 %v286
    %984 = vmatprep.subr.mxu0 0.0
    %985 = vmatpush1.msra.mxu0 %v287
    %986 = vmatprep.subr.mxu0 0.0
    %987 = vmatpush1.msra.mxu0 %v288
    %988 = vmatprep.subr.mxu0 0.0
    %989 = vmatpush1.msra.mxu0 %v289
    %990 = vmatprep.subr.mxu0 0.0
    %991 = vmatpush1.msra.mxu0 %v290
    %992 = vmatprep.subr.mxu0 0.0
    %993 = vmatpush1.msra.mxu0 %v291
    %994 = vmatprep.subr.mxu0 0.0
    %995 = vmatpush1.msra.mxu0 %v292
    %996 = vmatprep.subr.mxu0 0.0
    %997 = vmatpush1.msra.mxu0 %v293
    %998 = vmatprep.subr.mxu0 0.0
    %999 = vmatpush1.msra.mxu0 %v294
    %1000 = vmatprep.subr.mxu0 0.0
    %1001 = vmatpush1.msra.mxu0 %v295
    %1002 = vmatprep.subr.mxu0 0.0
    %1003 = vmatpush1.msra.mxu0 %v296
    %1004 = vmatprep.subr.mxu0 0.0
    %1005 = vmatpush1.msra.mxu0 %v297
    %1006 = vmatprep.subr.mxu0 0.0
    %1007 = vmatpush1.msra.mxu0 %v298
    %1008 = vmatprep.subr.mxu0 0.0
    %1009 = vmatpush1.msra.mxu0 %v299
    %1010 = vmatprep.subr.mxu0 0.0
    %1011 = vmatpush1.msra.mxu0 0.0
    %1012 = vmatprep.subr.mxu0 0.0
    %1013 = vmatpush1.msra.mxu0 0.0
    %1014 = vmatprep.subr.mxu0 0.0
    %1015 = vmatpush1.msra.mxu0 0.0
    %1016 = vmatprep.subr.mxu0 0.0
    %1017 = vmatpush1.msra.mxu0 0.0
    %1018 = vmatprep.subr.mxu0 0.0
    %1019 = vmatpush1.msra.mxu0 0.0
    %1020 = vmatprep.subr.mxu0 0.0
    %1021 = vmatpush1.msra.mxu0 0.0
    %1022 = vmatprep.subr.mxu0 0.0
    %1023 = vmatpush1.msra.mxu0 0.0
    %1024 = vmatprep.subr.mxu0 0.0
    %1025 = vmatpush1.msra.mxu0 0.0
    %1026 = vmatprep.subr.mxu0 0.0
    %1027 = vmatpush1.msra.mxu0 0.0
    %1028 = vmatprep.subr.mxu0 0.0
    %1029 = vmatpush1.msra.mxu0 0.0
    %1030 = vmatprep.subr.mxu0 0.0
    %1031 = vmatpush1.msra.mxu0 0.0
    %1032 = vmatprep.subr.mxu0 0.0
    %1033 = vmatpush1.msra.mxu0 0.0
    %1034 = vmatprep.subr.mxu0 0.0
    %1035 = vmatpush1.msra.mxu0 0.0
    %1036 = vmatprep.subr.mxu0 0.0
    %1037 = vmatpush1.msra.mxu0 0.0
    %1038 = vmatprep.subr.mxu0 0.0
    %1039 = vmatpush1.msra.mxu0 0.0
    %1040 = vmatprep.subr.mxu0 0.0
    %1041 = vmatpush1.msra.mxu0 0.0
    %1042 = vmatprep.mubr.f32.mxu0 0.0
    %1043 = vmatmul.mubr.f32.gmra.mrb[0].mxu0 %v907
    %v1044 = vpop.f32.mrb[0].mxu0
    %v1045 = vadd.f32 %v975, %v1044
    %v1046 = vpop.f32.mrb[0].mxu0
    %1047 = vdwg.mxu0
    %v1048 = vadd.f32 %v1045, %v321
    %v1049 = vxor.u32 %v1048, 2147483648
    %v1050 = vmul.f32 %v1049, 1.442695
    %v1051 = vpow.pop %v1050
    %v1052 = vadd.f32 %v1051, 1.0
    %v1053 = vrcp.pop %v1052
    %v1054 = vmul.f32 1.0, %v1053
    %v1055 = vtanh.pop %v1048
    %1056 = vrot.lane.b32.xlu0 %v1054, 118
    %v1057 = vpop.permute.xlu0 %1056
    %1058 = vrot.lane.b32.xlu0 %v1054, 108
    %v1059 = vpop.permute.xlu0 %1058
    %1060 = vrot.lane.b32.xlu0 %v1055, 98
    %v1061 = vpop.permute.xlu0 %1060
    %v1062 = vmul.f32 %v1057, %v816
    %v1063 = vmul.f32 %v1054, %v1061
    %v1064 = vadd.f32 %v1062, %v1063
    %v1065 = vtanh.pop %v1064
    %v1066 = vmul.f32 %v1059, %v1065
    %1067 = vmatprep.subr.mxu0 0.0
    %1068 = vmatpush1.msra.mxu0 %v268
    %1069 = vmatprep.subr.mxu0 0.0
    %1070 = vmatpush1.msra.mxu0 %v269
    %1071 = vmatprep.subr.mxu0 0.0
    %1072 = vmatpush1.msra.mxu0 %v270
    %1073 = vmatprep.subr.mxu0 0.0
    %1074 = vmatpush1.msra.mxu0 %v271
    %1075 = vmatprep.subr.mxu0 0.0
    %1076 = vmatpush1.msra.mxu0 %v272
    %1077 = vmatprep.subr.mxu0 0.0
    %1078 = vmatpush1.msra.mxu0 %v273
    %1079 = vmatprep.subr.mxu0 0.0
    %1080 = vmatpush1.msra.mxu0 %v274
    %1081 = vmatprep.subr.mxu0 0.0
    %1082 = vmatpush1.msra.mxu0 %v275
    %1083 = vmatprep.subr.mxu0 0.0
    %1084 = vmatpush1.msra.mxu0 %v276
    %1085 = vmatprep.subr.mxu0 0.0
    %1086 = vmatpush1.msra.mxu0 %v277
    %1087 = vmatprep.subr.mxu0 0.0
    %1088 = vmatpush1.msra.mxu0 %v278
    %1089 = vmatprep.subr.mxu0 0.0
    %1090 = vmatpush1.msra.mxu0 %v279
    %1091 = vmatprep.subr.mxu0 0.0
    %1092 = vmatpush1.msra.mxu0 %v280
    %1093 = vmatprep.subr.mxu0 0.0
    %1094 = vmatpush1.msra.mxu0 %v281
    %1095 = vmatprep.subr.mxu0 0.0
    %1096 = vmatpush1.msra.mxu0 %v282
    %1097 = vmatprep.subr.mxu0 0.0
    %1098 = vmatpush1.msra.mxu0 %v283
    %1099 = vmatprep.subr.mxu0 0.0
    %1100 = vmatpush1.msra.mxu0 0.0
    %1101 = vmatprep.subr.mxu0 0.0
    %1102 = vmatpush1.msra.mxu0 0.0
    %1103 = vmatprep.subr.mxu0 0.0
    %1104 = vmatpush1.msra.mxu0 0.0
    %1105 = vmatprep.subr.mxu0 0.0
    %1106 = vmatpush1.msra.mxu0 0.0
    %1107 = vmatprep.subr.mxu0 0.0
    %1108 = vmatpush1.msra.mxu0 0.0
    %1109 = vmatprep.subr.mxu0 0.0
    %1110 = vmatpush1.msra.mxu0 0.0
    %1111 = vmatprep.subr.mxu0 0.0
    %1112 = vmatpush1.msra.mxu0 0.0
    %1113 = vmatprep.subr.mxu0 0.0
    %1114 = vmatpush1.msra.mxu0 0.0
    %1115 = vmatprep.subr.mxu0 0.0
    %1116 = vmatpush1.msra.mxu0 0.0
    %1117 = vmatprep.subr.mxu0 0.0
    %1118 = vmatpush1.msra.mxu0 0.0
    %1119 = vmatprep.subr.mxu0 0.0
    %1120 = vmatpush1.msra.mxu0 0.0
    %1121 = vmatprep.subr.mxu0 0.0
    %1122 = vmatpush1.msra.mxu0 0.0
    %1123 = vmatprep.subr.mxu0 0.0
    %1124 = vmatpush1.msra.mxu0 0.0
    %1125 = vmatprep.subr.mxu0 0.0
    %1126 = vmatpush1.msra.mxu0 0.0
    %1127 = vmatprep.subr.mxu0 0.0
    %1128 = vmatpush1.msra.mxu0 0.0
    %1129 = vmatprep.subr.mxu0 0.0
    %1130 = vmatpush1.msra.mxu0 0.0
    %1131 = vmatprep.mubr.f32.mxu0 0.0
    %1132 = vmatmul.mubr.f32.gmra.mrb[0].mxu0 %v907
    %v1133 = vpop.f32.mrb[0].mxu0
    %v1134 = vadd.f32 0.0, %v1133
    %v1135 = vpop.f32.mrb[0].mxu0
    %1136 = vdwg.mxu0
    %v1137 = vadd.f32 %v245, %v1134
    %v1138 = vxor.u32 %v1137, 2147483648
    %v1139 = vmul.f32 %v1138, 1.442695
    %v1140 = vpow.pop %v1139
    %v1141 = vadd.f32 %v1140, 1.0
    %v1142 = vrcp.pop %v1141
    %v1143 = vmul.f32 1.0, %v1142
    %v1144 = vtanh.pop %v1137
    %1145 = vrot.lane.b32.xlu0 %v1143, 112
    %v1146 = vpop.permute.xlu0 %1145
    %1147 = vrot.lane.b32.xlu0 %v1143, 96
    %v1148 = vpop.permute.xlu0 %1147
    %1149 = vrot.lane.b32.xlu0 %v1144, 80
    %v1150 = vpop.permute.xlu0 %1149
    %v1151 = vmul.f32 %v1146, %v905
    %v1152 = vmul.f32 %v1143, %v1150
    %v1153 = vadd.f32 %v1151, %v1152
    %v1154 = vtanh.pop %v1153
    %v1155 = vmul.f32 %v1148, %v1154
    %1156 = vmatprep.subr.mxu0 0.0
    %1157 = vmatpush1.msra.mxu0 %v300
    %1158 = vmatprep.subr.mxu0 0.0
    %1159 = vmatpush1.msra.mxu0 %v301
    %1160 = vmatprep.subr.mxu0 0.0
    %1161 = vmatpush1.msra.mxu0 %v302
    %1162 = vmatprep.subr.mxu0 0.0
    %1163 = vmatpush1.msra.mxu0 %v303
    %1164 = vmatprep.subr.mxu0 0.0
    %1165 = vmatpush1.msra.mxu0 %v304
    %1166 = vmatprep.subr.mxu0 0.0
    %1167 = vmatpush1.msra.mxu0 %v305
    %1168 = vmatprep.subr.mxu0 0.0
    %1169 = vmatpush1.msra.mxu0 %v306
    %1170 = vmatprep.subr.mxu0 0.0
    %1171 = vmatpush1.msra.mxu0 %v307
    %1172 = vmatprep.subr.mxu0 0.0
    %1173 = vmatpush1.msra.mxu0 %v308
    %1174 = vmatprep.subr.mxu0 0.0
    %1175 = vmatpush1.msra.mxu0 %v309
    %1176 = vmatprep.subr.mxu0 0.0
    %1177 = vmatpush1.msra.mxu0 %v310
    %1178 = vmatprep.subr.mxu0 0.0
    %1179 = vmatpush1.msra.mxu0 %v311
    %1180 = vmatprep.subr.mxu0 0.0
    %1181 = vmatpush1.msra.mxu0 %v312
    %1182 = vmatprep.subr.mxu0 0.0
    %1183 = vmatpush1.msra.mxu0 %v313
    %1184 = vmatprep.subr.mxu0 0.0
    %1185 = vmatpush1.msra.mxu0 %v314
    %1186 = vmatprep.subr.mxu0 0.0
    %1187 = vmatpush1.msra.mxu0 %v315
    %1188 = vmatprep.subr.mxu0 0.0
    %1189 = vmatpush1.msra.mxu0 0.0
    %1190 = vmatprep.subr.mxu0 0.0
    %1191 = vmatpush1.msra.mxu0 0.0
    %1192 = vmatprep.subr.mxu0 0.0
    %1193 = vmatpush1.msra.mxu0 0.0
    %1194 = vmatprep.subr.mxu0 0.0
    %1195 = vmatpush1.msra.mxu0 0.0
    %1196 = vmatprep.subr.mxu0 0.0
    %1197 = vmatpush1.msra.mxu0 0.0
    %1198 = vmatprep.subr.mxu0 0.0
    %1199 = vmatpush1.msra.mxu0 0.0
    %1200 = vmatprep.subr.mxu0 0.0
    %1201 = vmatpush1.msra.mxu0 0.0
    %1202 = vmatprep.subr.mxu0 0.0
    %1203 = vmatpush1.msra.mxu0 0.0
    %1204 = vmatprep.subr.mxu0 0.0
    %1205 = vmatpush1.msra.mxu0 0.0
    %1206 = vmatprep.subr.mxu0 0.0
    %1207 = vmatpush1.msra.mxu0 0.0
    %1208 = vmatprep.subr.mxu0 0.0
    %1209 = vmatpush1.msra.mxu0 0.0
    %1210 = vmatprep.subr.mxu0 0.0
    %1211 = vmatpush1.msra.mxu0 0.0
    %1212 = vmatprep.subr.mxu0 0.0
    %1213 = vmatpush1.msra.mxu0 0.0
    %1214 = vmatprep.subr.mxu0 0.0
    %1215 = vmatpush1.msra.mxu0 0.0
    %1216 = vmatprep.subr.mxu0 0.0
    %1217 = vmatpush1.msra.mxu0 0.0
    %1218 = vmatprep.subr.mxu0 0.0
    %1219 = vmatpush1.msra.mxu0 0.0
    %1220 = vmatprep.mubr.f32.mxu0 0.0
    %1221 = vmatmul.mubr.f32.gmra.mrb[0].mxu0 %v1066
    %v1222 = vpop.f32.mrb[0].mxu0
    %v1223 = vadd.f32 0.0, %v1222
    %v1224 = vpop.f32.mrb[0].mxu0
    %1225 = vdwg.mxu0
    %1226 = vmatprep.subr.mxu0 0.0
    %1227 = vmatpush1.msra.mxu0 %v284
    %1228 = vmatprep.subr.mxu0 0.0
    %1229 = vmatpush1.msra.mxu0 %v285
    %1230 = vmatprep.subr.mxu0 0.0
    %1231 = vmatpush1.msra.mxu0 %v286
    %1232 = vmatprep.subr.mxu0 0.0
    %1233 = vmatpush1.msra.mxu0 %v287
    %1234 = vmatprep.subr.mxu0 0.0
    %1235 = vmatpush1.msra.mxu0 %v288
    %1236 = vmatprep.subr.mxu0 0.0
    %1237 = vmatpush1.msra.mxu0 %v289
    %1238 = vmatprep.subr.mxu0 0.0
    %1239 = vmatpush1.msra.mxu0 %v290
    %1240 = vmatprep.subr.mxu0 0.0
    %1241 = vmatpush1.msra.mxu0 %v291
    %1242 = vmatprep.subr.mxu0 0.0
    %1243 = vmatpush1.msra.mxu0 %v292
    %1244 = vmatprep.subr.mxu0 0.0
    %1245 = vmatpush1.msra.mxu0 %v293
    %1246 = vmatprep.subr.mxu0 0.0
    %1247 = vmatpush1.msra.mxu0 %v294
    %1248 = vmatprep.subr.mxu0 0.0
    %1249 = vmatpush1.msra.mxu0 %v295
    %1250 = vmatprep.subr.mxu0 0.0
    %1251 = vmatpush1.msra.mxu0 %v296
    %1252 = vmatprep.subr.mxu0 0.0
    %1253 = vmatpush1.msra.mxu0 %v297
    %1254 = vmatprep.subr.mxu0 0.0
    %1255 = vmatpush1.msra.mxu0 %v298
    %1256 = vmatprep.subr.mxu0 0.0
    %1257 = vmatpush1.msra.mxu0 %v299
    %1258 = vmatprep.subr.mxu0 0.0
    %1259 = vmatpush1.msra.mxu0 0.0
    %1260 = vmatprep.subr.mxu0 0.0
    %1261 = vmatpush1.msra.mxu0 0.0
    %1262 = vmatprep.subr.mxu0 0.0
    %1263 = vmatpush1.msra.mxu0 0.0
    %1264 = vmatprep.subr.mxu0 0.0
    %1265 = vmatpush1.msra.mxu0 0.0
    %1266 = vmatprep.subr.mxu0 0.0
    %1267 = vmatpush1.msra.mxu0 0.0
    %1268 = vmatprep.subr.mxu0 0.0
    %1269 = vmatpush1.msra.mxu0 0.0
    %1270 = vmatprep.subr.mxu0 0.0
    %1271 = vmatpush1.msra.mxu0 0.0
    %1272 = vmatprep.subr.mxu0 0.0
    %1273 = vmatpush1.msra.mxu0 0.0
    %1274 = vmatprep.subr.mxu0 0.0
    %1275 = vmatpush1.msra.mxu0 0.0
    %1276 = vmatprep.subr.mxu0 0.0
    %1277 = vmatpush1.msra.mxu0 0.0
    %1278 = vmatprep.subr.mxu0 0.0
    %1279 = vmatpush1.msra.mxu0 0.0
    %1280 = vmatprep.subr.mxu0 0.0
    %1281 = vmatpush1.msra.mxu0 0.0
    %1282 = vmatprep.subr.mxu0 0.0
    %1283 = vmatpush1.msra.mxu0 0.0
    %1284 = vmatprep.subr.mxu0 0.0
    %1285 = vmatpush1.msra.mxu0 0.0
    %1286 = vmatprep.subr.mxu0 0.0
    %1287 = vmatpush1.msra.mxu0 0.0
    %1288 = vmatprep.subr.mxu0 0.0
    %1289 = vmatpush1.msra.mxu0 0.0
    %1290 = vmatprep.mubr.f32.mxu0 0.0
    %1291 = vmatmul.mubr.f32.gmra.mrb[0].mxu0 %v1155
    %v1292 = vpop.f32.mrb[0].mxu0
    %v1293 = vadd.f32 %v1223, %v1292
    %v1294 = vpop.f32.mrb[0].mxu0
    %1295 = vdwg.mxu0
    %v1296 = vadd.f32 %v1293, %v321
    %v1297 = vxor.u32 %v1296, 2147483648
    %v1298 = vmul.f32 %v1297, 1.442695
    %v1299 = vpow.pop %v1298
    %v1300 = vadd.f32 %v1299, 1.0
    %v1301 = vrcp.pop %v1300
    %v1302 = vmul.f32 1.0, %v1301
    %v1303 = vtanh.pop %v1296
    %1304 = vrot.lane.b32.xlu0 %v1302, 118
    %v1305 = vpop.permute.xlu0 %1304
    %1306 = vrot.lane.b32.xlu0 %v1302, 108
    %v1307 = vpop.permute.xlu0 %1306
    %1308 = vrot.lane.b32.xlu0 %v1303, 98
    %v1309 = vpop.permute.xlu0 %1308
    %v1310 = vmul.f32 %v1305, %v1064
    %v1311 = vmul.f32 %v1302, %v1309
    %v1312 = vadd.f32 %v1310, %v1311
    %v1313 = vtanh.pop %v1312
    %v1314 = vmul.f32 %v1307, %v1313
    %1315 = vmatprep.subr.mxu0 0.0
    %1316 = vmatpush1.msra.mxu0 %v268
    %1317 = vmatprep.subr.mxu0 0.0
    %1318 = vmatpush1.msra.mxu0 %v269
    %1319 = vmatprep.subr.mxu0 0.0
    %1320 = vmatpush1.msra.mxu0 %v270
    %1321 = vmatprep.subr.mxu0 0.0
    %1322 = vmatpush1.msra.mxu0 %v271
    %1323 = vmatprep.subr.mxu0 0.0
    %1324 = vmatpush1.msra.mxu0 %v272
    %1325 = vmatprep.subr.mxu0 0.0
    %1326 = vmatpush1.msra.mxu0 %v273
    %1327 = vmatprep.subr.mxu0 0.0
    %1328 = vmatpush1.msra.mxu0 %v274
    %1329 = vmatprep.subr.mxu0 0.0
    %1330 = vmatpush1.msra.mxu0 %v275
    %1331 = vmatprep.subr.mxu0 0.0
    %1332 = vmatpush1.msra.mxu0 %v276
    %1333 = vmatprep.subr.mxu0 0.0
    %1334 = vmatpush1.msra.mxu0 %v277
    %1335 = vmatprep.subr.mxu0 0.0
    %1336 = vmatpush1.msra.mxu0 %v278
    %1337 = vmatprep.subr.mxu0 0.0
    %1338 = vmatpush1.msra.mxu0 %v279
    %1339 = vmatprep.subr.mxu0 0.0
    %1340 = vmatpush1.msra.mxu0 %v280
    %1341 = vmatprep.subr.mxu0 0.0
    %1342 = vmatpush1.msra.mxu0 %v281
    %1343 = vmatprep.subr.mxu0 0.0
    %1344 = vmatpush1.msra.mxu0 %v282
    %1345 = vmatprep.subr.mxu0 0.0
    %1346 = vmatpush1.msra.mxu0 %v283
    %1347 = vmatprep.subr.mxu0 0.0
    %1348 = vmatpush1.msra.mxu0 0.0
    %1349 = vmatprep.subr.mxu0 0.0
    %1350 = vmatpush1.msra.mxu0 0.0
    %1351 = vmatprep.subr.mxu0 0.0
    %1352 = vmatpush1.msra.mxu0 0.0
    %1353 = vmatprep.subr.mxu0 0.0
    %1354 = vmatpush1.msra.mxu0 0.0
    %1355 = vmatprep.subr.mxu0 0.0
    %1356 = vmatpush1.msra.mxu0 0.0
    %1357 = vmatprep.subr.mxu0 0.0
    %1358 = vmatpush1.msra.mxu0 0.0
    %1359 = vmatprep.subr.mxu0 0.0
    %1360 = vmatpush1.msra.mxu0 0.0
    %1361 = vmatprep.subr.mxu0 0.0
    %1362 = vmatpush1.msra.mxu0 0.0
    %1363 = vmatprep.subr.mxu0 0.0
    %1364 = vmatpush1.msra.mxu0 0.0
    %1365 = vmatprep.subr.mxu0 0.0
    %1366 = vmatpush1.msra.mxu0 0.0
    %1367 = vmatprep.subr.mxu0 0.0
    %1368 = vmatpush1.msra.mxu0 0.0
    %1369 = vmatprep.subr.mxu0 0.0
    %1370 = vmatpush1.msra.mxu0 0.0
    %1371 = vmatprep.subr.mxu0 0.0
    %1372 = vmatpush1.msra.mxu0 0.0
    %1373 = vmatprep.subr.mxu0 0.0
    %1374 = vmatpush1.msra.mxu0 0.0
    %1375 = vmatprep.subr.mxu0 0.0
    %1376 = vmatpush1.msra.mxu0 0.0
    %1377 = vmatprep.subr.mxu0 0.0
    %1378 = vmatpush1.msra.mxu0 0.0
    %1379 = vmatprep.mubr.f32.mxu0 0.0
    %1380 = vmatmul.mubr.f32.gmra.mrb[0].mxu0 %v1155
    %v1381 = vpop.f32.mrb[0].mxu0
    %v1382 = vadd.f32 0.0, %v1381
    %v1383 = vpop.f32.mrb[0].mxu0
    %1384 = vdwg.mxu0
    %v1385 = vadd.f32 %v250, %v1382
    %v1386 = vxor.u32 %v1385, 2147483648
    %v1387 = vmul.f32 %v1386, 1.442695
    %v1388 = vpow.pop %v1387
    %v1389 = vadd.f32 %v1388, 1.0
    %v1390 = vrcp.pop %v1389
    %v1391 = vmul.f32 1.0, %v1390
    %v1392 = vtanh.pop %v1385
    %1393 = vrot.lane.b32.xlu0 %v1391, 112
    %v1394 = vpop.permute.xlu0 %1393
    %1395 = vrot.lane.b32.xlu0 %v1391, 96
    %v1396 = vpop.permute.xlu0 %1395
    %1397 = vrot.lane.b32.xlu0 %v1392, 80
    %v1398 = vpop.permute.xlu0 %1397
    %v1399 = vmul.f32 %v1394, %v1153
    %v1400 = vmul.f32 %v1391, %v1398
    %v1401 = vadd.f32 %v1399, %v1400
    %v1402 = vtanh.pop %v1401
    %v1403 = vmul.f32 %v1396, %v1402
    %1404 = vmatprep.subr.mxu0 0.0
    %1405 = vmatpush1.msra.mxu0 %v300
    %1406 = vmatprep.subr.mxu0 0.0
    %1407 = vmatpush1.msra.mxu0 %v301
    %1408 = vmatprep.subr.mxu0 0.0
    %1409 = vmatpush1.msra.mxu0 %v302
    %1410 = vmatprep.subr.mxu0 0.0
    %1411 = vmatpush1.msra.mxu0 %v303
    %1412 = vmatprep.subr.mxu0 0.0
    %1413 = vmatpush1.msra.mxu0 %v304
    %1414 = vmatprep.subr.mxu0 0.0
    %1415 = vmatpush1.msra.mxu0 %v305
    %1416 = vmatprep.subr.mxu0 0.0
    %1417 = vmatpush1.msra.mxu0 %v306
    %1418 = vmatprep.subr.mxu0 0.0
    %1419 = vmatpush1.msra.mxu0 %v307
    %1420 = vmatprep.subr.mxu0 0.0
    %1421 = vmatpush1.msra.mxu0 %v308
    %1422 = vmatprep.subr.mxu0 0.0
    %1423 = vmatpush1.msra.mxu0 %v309
    %1424 = vmatprep.subr.mxu0 0.0
    %1425 = vmatpush1.msra.mxu0 %v310
    %1426 = vmatprep.subr.mxu0 0.0
    %1427 = vmatpush1.msra.mxu0 %v311
    %1428 = vmatprep.subr.mxu0 0.0
    %1429 = vmatpush1.msra.mxu0 %v312
    %1430 = vmatprep.subr.mxu0 0.0
    %1431 = vmatpush1.msra.mxu0 %v313
    %1432 = vmatprep.subr.mxu0 0.0
    %1433 = vmatpush1.msra.mxu0 %v314
    %1434 = vmatprep.subr.mxu0 0.0
    %1435 = vmatpush1.msra.mxu0 %v315
    %1436 = vmatprep.subr.mxu0 0.0
    %1437 = vmatpush1.msra.mxu0 0.0
    %1438 = vmatprep.subr.mxu0 0.0
    %1439 = vmatpush1.msra.mxu0 0.0
    %1440 = vmatprep.subr.mxu0 0.0
    %1441 = vmatpush1.msra.mxu0 0.0
    %1442 = vmatprep.subr.mxu0 0.0
    %1443 = vmatpush1.msra.mxu0 0.0
    %1444 = vmatprep.subr.mxu0 0.0
    %1445 = vmatpush1.msra.mxu0 0.0
    %1446 = vmatprep.subr.mxu0 0.0
    %1447 = vmatpush1.msra.mxu0 0.0
    %1448 = vmatprep.subr.mxu0 0.0
    %1449 = vmatpush1.msra.mxu0 0.0
    %1450 = vmatprep.subr.mxu0 0.0
    %1451 = vmatpush1.msra.mxu0 0.0
    %1452 = vmatprep.subr.mxu0 0.0
    %1453 = vmatpush1.msra.mxu0 0.0
    %1454 = vmatprep.subr.mxu0 0.0
    %1455 = vmatpush1.msra.mxu0 0.0
    %1456 = vmatprep.subr.mxu0 0.0
    %1457 = vmatpush1.msra.mxu0 0.0
    %1458 = vmatprep.subr.mxu0 0.0
    %1459 = vmatpush1.msra.mxu0 0.0
    %1460 = vmatprep.subr.mxu0 0.0
    %1461 = vmatpush1.msra.mxu0 0.0
    %1462 = vmatprep.subr.mxu0 0.0
    %1463 = vmatpush1.msra.mxu0 0.0
    %1464 = vmatprep.subr.mxu0 0.0
    %1465 = vmatpush1.msra.mxu0 0.0
    %1466 = vmatprep.subr.mxu0 0.0
    %1467 = vmatpush1.msra.mxu0 0.0
    %1468 = vmatprep.mubr.f32.mxu0 0.0
    %1469 = vmatmul.mubr.f32.gmra.mrb[0].mxu0 %v1314
    %v1470 = vpop.f32.mrb[0].mxu0
    %v1471 = vadd.f32 0.0, %v1470
    %v1472 = vpop.f32.mrb[0].mxu0
    %1473 = vdwg.mxu0
    %1474 = vmatprep.subr.mxu0 0.0
    %1475 = vmatpush1.msra.mxu0 %v284
    %1476 = vmatprep.subr.mxu0 0.0
    %1477 = vmatpush1.msra.mxu0 %v285
    %1478 = vmatprep.subr.mxu0 0.0
    %1479 = vmatpush1.msra.mxu0 %v286
    %1480 = vmatprep.subr.mxu0 0.0
    %1481 = vmatpush1.msra.mxu0 %v287
    %1482 = vmatprep.subr.mxu0 0.0
    %1483 = vmatpush1.msra.mxu0 %v288
    %1484 = vmatprep.subr.mxu0 0.0
    %1485 = vmatpush1.msra.mxu0 %v289
    %1486 = vmatprep.subr.mxu0 0.0
    %1487 = vmatpush1.msra.mxu0 %v290
    %1488 = vmatprep.subr.mxu0 0.0
    %1489 = vmatpush1.msra.mxu0 %v291
    %1490 = vmatprep.subr.mxu0 0.0
    %1491 = vmatpush1.msra.mxu0 %v292
    %1492 = vmatprep.subr.mxu0 0.0
    %1493 = vmatpush1.msra.mxu0 %v293
    %1494 = vmatprep.subr.mxu0 0.0
    %1495 = vmatpush1.msra.mxu0 %v294
    %1496 = vmatprep.subr.mxu0 0.0
    %1497 = vmatpush1.msra.mxu0 %v295
    %1498 = vmatprep.subr.mxu0 0.0
    %1499 = vmatpush1.msra.mxu0 %v296
    %1500 = vmatprep.subr.mxu0 0.0
    %1501 = vmatpush1.msra.mxu0 %v297
    %1502 = vmatprep.subr.mxu0 0.0
    %1503 = vmatpush1.msra.mxu0 %v298
    %1504 = vmatprep.subr.mxu0 0.0
    %1505 = vmatpush1.msra.mxu0 %v299
    %1506 = vmatprep.subr.mxu0 0.0
    %1507 = vmatpush1.msra.mxu0 0.0
    %1508 = vmatprep.subr.mxu0 0.0
    %1509 = vmatpush1.msra.mxu0 0.0
    %1510 = vmatprep.subr.mxu0 0.0
    %1511 = vmatpush1.msra.mxu0 0.0
    %1512 = vmatprep.subr.mxu0 0.0
    %1513 = vmatpush1.msra.mxu0 0.0
    %1514 = vmatprep.subr.mxu0 0.0
    %1515 = vmatpush1.msra.mxu0 0.0
    %1516 = vmatprep.subr.mxu0 0.0
    %1517 = vmatpush1.msra.mxu0 0.0
    %1518 = vmatprep.subr.mxu0 0.0
    %1519 = vmatpush1.msra.mxu0 0.0
    %1520 = vmatprep.subr.mxu0 0.0
    %1521 = vmatpush1.msra.mxu0 0.0
    %1522 = vmatprep.subr.mxu0 0.0
    %1523 = vmatpush1.msra.mxu0 0.0
    %1524 = vmatprep.subr.mxu0 0.0
    %1525 = vmatpush1.msra.mxu0 0.0
    %1526 = vmatprep.subr.mxu0 0.0
    %1527 = vmatpush1.msra.mxu0 0.0
    %1528 = vmatprep.subr.mxu0 0.0
    %1529 = vmatpush1.msra.mxu0 0.0
    %1530 = vmatprep.subr.mxu0 0.0
    %1531 = vmatpush1.msra.mxu0 0.0
    %1532 = vmatprep.subr.mxu0 0.0
    %1533 = vmatpush1.msra.mxu0 0.0
    %1534 = vmatprep.subr.mxu0 0.0
    %1535 = vmatpush1.msra.mxu0 0.0
    %1536 = vmatprep.subr.mxu0 0.0
    %1537 = vmatpush1.msra.mxu0 0.0
    %1538 = vmatprep.mubr.f32.mxu0 0.0
    %1539 = vmatmul.mubr.f32.gmra.mrb[0].mxu0 %v1403
    %v1540 = vpop.f32.mrb[0].mxu0
    %v1541 = vadd.f32 %v1471, %v1540
    %v1542 = vpop.f32.mrb[0].mxu0
    %1543 = vdwg.mxu0
    %v1544 = vadd.f32 %v1541, %v321
    %v1545 = vxor.u32 %v1544, 2147483648
    %v1546 = vmul.f32 %v1545, 1.442695
    %v1547 = vpow.pop %v1546
    %v1548 = vadd.f32 %v1547, 1.0
    %v1549 = vrcp.pop %v1548
    %v1550 = vmul.f32 1.0, %v1549
    %v1551 = vtanh.pop %v1544
    %1552 = vrot.lane.b32.xlu0 %v1550, 118
    %v1553 = vpop.permute.xlu0 %1552
    %1554 = vrot.lane.b32.xlu0 %v1550, 108
    %v1555 = vpop.permute.xlu0 %1554
    %1556 = vrot.lane.b32.xlu0 %v1551, 98
    %v1557 = vpop.permute.xlu0 %1556
    %v1558 = vmul.f32 %v1553, %v1312
    %v1559 = vmul.f32 %v1550, %v1557
    %v1560 = vadd.f32 %v1558, %v1559
    %v1561 = vtanh.pop %v1560
    %v1562 = vmul.f32 %v1555, %v1561
    %1563 = vmatprep.subr.mxu0 0.0
    %1564 = vmatpush1.msra.mxu0 %v268
    %1565 = vmatprep.subr.mxu0 0.0
    %1566 = vmatpush1.msra.mxu0 %v269
    %1567 = vmatprep.subr.mxu0 0.0
    %1568 = vmatpush1.msra.mxu0 %v270
    %1569 = vmatprep.subr.mxu0 0.0
    %1570 = vmatpush1.msra.mxu0 %v271
    %1571 = vmatprep.subr.mxu0 0.0
    %1572 = vmatpush1.msra.mxu0 %v272
    %1573 = vmatprep.subr.mxu0 0.0
    %1574 = vmatpush1.msra.mxu0 %v273
    %1575 = vmatprep.subr.mxu0 0.0
    %1576 = vmatpush1.msra.mxu0 %v274
    %1577 = vmatprep.subr.mxu0 0.0
    %1578 = vmatpush1.msra.mxu0 %v275
    %1579 = vmatprep.subr.mxu0 0.0
    %1580 = vmatpush1.msra.mxu0 %v276
    %1581 = vmatprep.subr.mxu0 0.0
    %1582 = vmatpush1.msra.mxu0 %v277
    %1583 = vmatprep.subr.mxu0 0.0
    %1584 = vmatpush1.msra.mxu0 %v278
    %1585 = vmatprep.subr.mxu0 0.0
    %1586 = vmatpush1.msra.mxu0 %v279
    %1587 = vmatprep.subr.mxu0 0.0
    %1588 = vmatpush1.msra.mxu0 %v280
    %1589 = vmatprep.subr.mxu0 0.0
    %1590 = vmatpush1.msra.mxu0 %v281
    %1591 = vmatprep.subr.mxu0 0.0
    %1592 = vmatpush1.msra.mxu0 %v282
    %1593 = vmatprep.subr.mxu0 0.0
    %1594 = vmatpush1.msra.mxu0 %v283
    %1595 = vmatprep.subr.mxu0 0.0
    %1596 = vmatpush1.msra.mxu0 0.0
    %1597 = vmatprep.subr.mxu0 0.0
    %1598 = vmatpush1.msra.mxu0 0.0
    %1599 = vmatprep.subr.mxu0 0.0
    %1600 = vmatpush1.msra.mxu0 0.0
    %1601 = vmatprep.subr.mxu0 0.0
    %1602 = vmatpush1.msra.mxu0 0.0
    %1603 = vmatprep.subr.mxu0 0.0
    %1604 = vmatpush1.msra.mxu0 0.0
    %1605 = vmatprep.subr.mxu0 0.0
    %1606 = vmatpush1.msra.mxu0 0.0
    %1607 = vmatprep.subr.mxu0 0.0
    %1608 = vmatpush1.msra.mxu0 0.0
    %1609 = vmatprep.subr.mxu0 0.0
    %1610 = vmatpush1.msra.mxu0 0.0
    %1611 = vmatprep.subr.mxu0 0.0
    %1612 = vmatpush1.msra.mxu0 0.0
    %1613 = vmatprep.subr.mxu0 0.0
    %1614 = vmatpush1.msra.mxu0 0.0
    %1615 = vmatprep.subr.mxu0 0.0
    %1616 = vmatpush1.msra.mxu0 0.0
    %1617 = vmatprep.subr.mxu0 0.0
    %1618 = vmatpush1.msra.mxu0 0.0
    %1619 = vmatprep.subr.mxu0 0.0
    %1620 = vmatpush1.msra.mxu0 0.0
    %1621 = vmatprep.subr.mxu0 0.0
    %1622 = vmatpush1.msra.mxu0 0.0
    %1623 = vmatprep.subr.mxu0 0.0
    %1624 = vmatpush1.msra.mxu0 0.0
    %1625 = vmatprep.subr.mxu0 0.0
    %1626 = vmatpush1.msra.mxu0 0.0
    %1627 = vmatprep.mubr.f32.mxu0 0.0
    %1628 = vmatmul.mubr.f32.gmra.mrb[0].mxu0 %v1403
    %v1629 = vpop.f32.mrb[0].mxu0
    %v1630 = vadd.f32 0.0, %v1629
    %v1631 = vpop.f32.mrb[0].mxu0
    %1632 = vdwg.mxu0
    %v1633 = vadd.f32 %v255, %v1630
    %v1634 = vxor.u32 %v1633, 2147483648
    %v1635 = vmul.f32 %v1634, 1.442695
    %v1636 = vpow.pop %v1635
    %v1637 = vadd.f32 %v1636, 1.0
    %v1638 = vrcp.pop %v1637
    %v1639 = vmul.f32 1.0, %v1638
    %v1640 = vtanh.pop %v1633
    %1641 = vrot.lane.b32.xlu0 %v1639, 112
    %v1642 = vpop.permute.xlu0 %1641
    %1643 = vrot.lane.b32.xlu0 %v1639, 96
    %v1644 = vpop.permute.xlu0 %1643
    %1645 = vrot.lane.b32.xlu0 %v1640, 80
    %v1646 = vpop.permute.xlu0 %1645
    %v1647 = vmul.f32 %v1642, %v1401
    %v1648 = vmul.f32 %v1639, %v1646
    %v1649 = vadd.f32 %v1647, %v1648
    %v1650 = vtanh.pop %v1649
    %v1651 = vmul.f32 %v1644, %v1650
    %1652 = vmatprep.subr.mxu0 0.0
    %1653 = vmatpush1.msra.mxu0 %v300
    %1654 = vmatprep.subr.mxu0 0.0
    %1655 = vmatpush1.msra.mxu0 %v301
    %1656 = vmatprep.subr.mxu0 0.0
    %1657 = vmatpush1.msra.mxu0 %v302
    %1658 = vmatprep.subr.mxu0 0.0
    %1659 = vmatpush1.msra.mxu0 %v303
    %1660 = vmatprep.subr.mxu0 0.0
    %1661 = vmatpush1.msra.mxu0 %v304
    %1662 = vmatprep.subr.mxu0 0.0
    %1663 = vmatpush1.msra.mxu0 %v305
    %1664 = vmatprep.subr.mxu0 0.0
    %1665 = vmatpush1.msra.mxu0 %v306
    %1666 = vmatprep.subr.mxu0 0.0
    %1667 = vmatpush1.msra.mxu0 %v307
    %1668 = vmatprep.subr.mxu0 0.0
    %1669 = vmatpush1.msra.mxu0 %v308
    %1670 = vmatprep.subr.mxu0 0.0
    %1671 = vmatpush1.msra.mxu0 %v309
    %1672 = vmatprep.subr.mxu0 0.0
    %1673 = vmatpush1.msra.mxu0 %v310
    %1674 = vmatprep.subr.mxu0 0.0
    %1675 = vmatpush1.msra.mxu0 %v311
    %1676 = vmatprep.subr.mxu0 0.0
    %1677 = vmatpush1.msra.mxu0 %v312
    %1678 = vmatprep.subr.mxu0 0.0
    %1679 = vmatpush1.msra.mxu0 %v313
    %1680 = vmatprep.subr.mxu0 0.0
    %1681 = vmatpush1.msra.mxu0 %v314
    %1682 = vmatprep.subr.mxu0 0.0
    %1683 = vmatpush1.msra.mxu0 %v315
    %1684 = vmatprep.subr.mxu0 0.0
    %1685 = vmatpush1.msra.mxu0 0.0
    %1686 = vmatprep.subr.mxu0 0.0
    %1687 = vmatpush1.msra.mxu0 0.0
    %1688 = vmatprep.subr.mxu0 0.0
    %1689 = vmatpush1.msra.mxu0 0.0
    %1690 = vmatprep.subr.mxu0 0.0
    %1691 = vmatpush1.msra.mxu0 0.0
    %1692 = vmatprep.subr.mxu0 0.0
    %1693 = vmatpush1.msra.mxu0 0.0
    %1694 = vmatprep.subr.mxu0 0.0
    %1695 = vmatpush1.msra.mxu0 0.0
    %1696 = vmatprep.subr.mxu0 0.0
    %1697 = vmatpush1.msra.mxu0 0.0
    %1698 = vmatprep.subr.mxu0 0.0
    %1699 = vmatpush1.msra.mxu0 0.0
    %1700 = vmatprep.subr.mxu0 0.0
    %1701 = vmatpush1.msra.mxu0 0.0
    %1702 = vmatprep.subr.mxu0 0.0
    %1703 = vmatpush1.msra.mxu0 0.0
    %1704 = vmatprep.subr.mxu0 0.0
    %1705 = vmatpush1.msra.mxu0 0.0
    %1706 = vmatprep.subr.mxu0 0.0
    %1707 = vmatpush1.msra.mxu0 0.0
    %1708 = vmatprep.subr.mxu0 0.0
    %1709 = vmatpush1.msra.mxu0 0.0
    %1710 = vmatprep.subr.mxu0 0.0
    %1711 = vmatpush1.msra.mxu0 0.0
    %1712 = vmatprep.subr.mxu0 0.0
    %1713 = vmatpush1.msra.mxu0 0.0
    %1714 = vmatprep.subr.mxu0 0.0
    %1715 = vmatpush1.msra.mxu0 0.0
    %1716 = vmatprep.mubr.f32.mxu0 0.0
    %1717 = vmatmul.mubr.f32.gmra.mrb[0].mxu0 %v1562
    %v1718 = vpop.f32.mrb[0].mxu0
    %v1719 = vadd.f32 0.0, %v1718
    %v1720 = vpop.f32.mrb[0].mxu0
    %1721 = vdwg.mxu0
    %1722 = vmatprep.subr.mxu0 0.0
    %1723 = vmatpush1.msra.mxu0 %v284
    %1724 = vmatprep.subr.mxu0 0.0
    %1725 = vmatpush1.msra.mxu0 %v285
    %1726 = vmatprep.subr.mxu0 0.0
    %1727 = vmatpush1.msra.mxu0 %v286
    %1728 = vmatprep.subr.mxu0 0.0
    %1729 = vmatpush1.msra.mxu0 %v287
    %1730 = vmatprep.subr.mxu0 0.0
    %1731 = vmatpush1.msra.mxu0 %v288
    %1732 = vmatprep.subr.mxu0 0.0
    %1733 = vmatpush1.msra.mxu0 %v289
    %1734 = vmatprep.subr.mxu0 0.0
    %1735 = vmatpush1.msra.mxu0 %v290
    %1736 = vmatprep.subr.mxu0 0.0
    %1737 = vmatpush1.msra.mxu0 %v291
    %1738 = vmatprep.subr.mxu0 0.0
    %1739 = vmatpush1.msra.mxu0 %v292
    %1740 = vmatprep.subr.mxu0 0.0
    %1741 = vmatpush1.msra.mxu0 %v293
    %1742 = vmatprep.subr.mxu0 0.0
    %1743 = vmatpush1.msra.mxu0 %v294
    %1744 = vmatprep.subr.mxu0 0.0
    %1745 = vmatpush1.msra.mxu0 %v295
    %1746 = vmatprep.subr.mxu0 0.0
    %1747 = vmatpush1.msra.mxu0 %v296
    %1748 = vmatprep.subr.mxu0 0.0
    %1749 = vmatpush1.msra.mxu0 %v297
    %1750 = vmatprep.subr.mxu0 0.0
    %1751 = vmatpush1.msra.mxu0 %v298
    %1752 = vmatprep.subr.mxu0 0.0
    %1753 = vmatpush1.msra.mxu0 %v299
    %1754 = vmatprep.subr.mxu0 0.0
    %1755 = vmatpush1.msra.mxu0 0.0
    %1756 = vmatprep.subr.mxu0 0.0
    %1757 = vmatpush1.msra.mxu0 0.0
    %1758 = vmatprep.subr.mxu0 0.0
    %1759 = vmatpush1.msra.mxu0 0.0
    %1760 = vmatprep.subr.mxu0 0.0
    %1761 = vmatpush1.msra.mxu0 0.0
    %1762 = vmatprep.subr.mxu0 0.0
    %1763 = vmatpush1.msra.mxu0 0.0
    %1764 = vmatprep.subr.mxu0 0.0
    %1765 = vmatpush1.msra.mxu0 0.0
    %1766 = vmatprep.subr.mxu0 0.0
    %1767 = vmatpush1.msra.mxu0 0.0
    %1768 = vmatprep.subr.mxu0 0.0
    %1769 = vmatpush1.msra.mxu0 0.0
    %1770 = vmatprep.subr.mxu0 0.0
    %1771 = vmatpush1.msra.mxu0 0.0
    %1772 = vmatprep.subr.mxu0 0.0
    %1773 = vmatpush1.msra.mxu0 0.0
    %1774 = vmatprep.subr.mxu0 0.0
    %1775 = vmatpush1.msra.mxu0 0.0
    %1776 = vmatprep.subr.mxu0 0.0
    %1777 = vmatpush1.msra.mxu0 0.0
    %1778 = vmatprep.subr.mxu0 0.0
    %1779 = vmatpush1.msra.mxu0 0.0
    %1780 = vmatprep.subr.mxu0 0.0
    %1781 = vmatpush1.msra.mxu0 0.0
    %1782 = vmatprep.subr.mxu0 0.0
    %1783 = vmatpush1.msra.mxu0 0.0
    %1784 = vmatprep.subr.mxu0 0.0
    %1785 = vmatpush1.msra.mxu0 0.0
    %1786 = vmatprep.mubr.f32.mxu0 0.0
    %1787 = vmatmul.mubr.f32.gmra.mrb[0].mxu0 %v1651
    %v1788 = vpop.f32.mrb[0].mxu0
    %v1789 = vadd.f32 %v1719, %v1788
    %v1790 = vpop.f32.mrb[0].mxu0
    %1791 = vdwg.mxu0
    %v1792 = vadd.f32 %v1789, %v321
    %v1793 = vxor.u32 %v1792, 2147483648
    %v1794 = vmul.f32 %v1793, 1.442695
    %v1795 = vpow.pop %v1794
    %v1796 = vadd.f32 %v1795, 1.0
    %v1797 = vrcp.pop %v1796
    %v1798 = vmul.f32 1.0, %v1797
    %v1799 = vtanh.pop %v1792
    %1800 = vrot.lane.b32.xlu0 %v1798, 118
    %v1801 = vpop.permute.xlu0 %1800
    %1802 = vrot.lane.b32.xlu0 %v1798, 108
    %v1803 = vpop.permute.xlu0 %1802
    %1804 = vrot.lane.b32.xlu0 %v1799, 98
    %v1805 = vpop.permute.xlu0 %1804
    %v1806 = vmul.f32 %v1801, %v1560
    %v1807 = vmul.f32 %v1798, %v1805
    %v1808 = vadd.f32 %v1806, %v1807
    %v1809 = vtanh.pop %v1808
    %v1810 = vmul.f32 %v1803, %v1809
    %1811 = vmatprep.subr.mxu0 0.0
    %1812 = vmatpush1.msra.mxu0 %v268
    %1813 = vmatprep.subr.mxu0 0.0
    %1814 = vmatpush1.msra.mxu0 %v269
    %1815 = vmatprep.subr.mxu0 0.0
    %1816 = vmatpush1.msra.mxu0 %v270
    %1817 = vmatprep.subr.mxu0 0.0
    %1818 = vmatpush1.msra.mxu0 %v271
    %1819 = vmatprep.subr.mxu0 0.0
    %1820 = vmatpush1.msra.mxu0 %v272
    %1821 = vmatprep.subr.mxu0 0.0
    %1822 = vmatpush1.msra.mxu0 %v273
    %1823 = vmatprep.subr.mxu0 0.0
    %1824 = vmatpush1.msra.mxu0 %v274
    %1825 = vmatprep.subr.mxu0 0.0
    %1826 = vmatpush1.msra.mxu0 %v275
    %1827 = vmatprep.subr.mxu0 0.0
    %1828 = vmatpush1.msra.mxu0 %v276
    %1829 = vmatprep.subr.mxu0 0.0
    %1830 = vmatpush1.msra.mxu0 %v277
    %1831 = vmatprep.subr.mxu0 0.0
    %1832 = vmatpush1.msra.mxu0 %v278
    %1833 = vmatprep.subr.mxu0 0.0
    %1834 = vmatpush1.msra.mxu0 %v279
    %1835 = vmatprep.subr.mxu0 0.0
    %1836 = vmatpush1.msra.mxu0 %v280
    %1837 = vmatprep.subr.mxu0 0.0
    %1838 = vmatpush1.msra.mxu0 %v281
    %1839 = vmatprep.subr.mxu0 0.0
    %1840 = vmatpush1.msra.mxu0 %v282
    %1841 = vmatprep.subr.mxu0 0.0
    %1842 = vmatpush1.msra.mxu0 %v283
    %1843 = vmatprep.subr.mxu0 0.0
    %1844 = vmatpush1.msra.mxu0 0.0
    %1845 = vmatprep.subr.mxu0 0.0
    %1846 = vmatpush1.msra.mxu0 0.0
    %1847 = vmatprep.subr.mxu0 0.0
    %1848 = vmatpush1.msra.mxu0 0.0
    %1849 = vmatprep.subr.mxu0 0.0
    %1850 = vmatpush1.msra.mxu0 0.0
    %1851 = vmatprep.subr.mxu0 0.0
    %1852 = vmatpush1.msra.mxu0 0.0
    %1853 = vmatprep.subr.mxu0 0.0
    %1854 = vmatpush1.msra.mxu0 0.0
    %1855 = vmatprep.subr.mxu0 0.0
    %1856 = vmatpush1.msra.mxu0 0.0
    %1857 = vmatprep.subr.mxu0 0.0
    %1858 = vmatpush1.msra.mxu0 0.0
    %1859 = vmatprep.subr.mxu0 0.0
    %1860 = vmatpush1.msra.mxu0 0.0
    %1861 = vmatprep.subr.mxu0 0.0
    %1862 = vmatpush1.msra.mxu0 0.0
    %1863 = vmatprep.subr.mxu0 0.0
    %1864 = vmatpush1.msra.mxu0 0.0
    %1865 = vmatprep.subr.mxu0 0.0
    %1866 = vmatpush1.msra.mxu0 0.0
    %1867 = vmatprep.subr.mxu0 0.0
    %1868 = vmatpush1.msra.mxu0 0.0
    %1869 = vmatprep.subr.mxu0 0.0
    %1870 = vmatpush1.msra.mxu0 0.0
    %1871 = vmatprep.subr.mxu0 0.0
    %1872 = vmatpush1.msra.mxu0 0.0
    %1873 = vmatprep.subr.mxu0 0.0
    %1874 = vmatpush1.msra.mxu0 0.0
    %1875 = vmatprep.mubr.f32.mxu0 0.0
    %1876 = vmatmul.mubr.f32.gmra.mrb[0].mxu0 %v1651
    %v1877 = vpop.f32.mrb[0].mxu0
    %v1878 = vadd.f32 0.0, %v1877
    %v1879 = vpop.f32.mrb[0].mxu0
    %1880 = vdwg.mxu0
    %v1881 = vadd.f32 %v260, %v1878
    %v1882 = vxor.u32 %v1881, 2147483648
    %v1883 = vmul.f32 %v1882, 1.442695
    %v1884 = vpow.pop %v1883
    %v1885 = vadd.f32 %v1884, 1.0
    %v1886 = vrcp.pop %v1885
    %v1887 = vmul.f32 1.0, %v1886
    %v1888 = vtanh.pop %v1881
    %1889 = vrot.lane.b32.xlu0 %v1887, 112
    %v1890 = vpop.permute.xlu0 %1889
    %1891 = vrot.lane.b32.xlu0 %v1887, 96
    %v1892 = vpop.permute.xlu0 %1891
    %1893 = vrot.lane.b32.xlu0 %v1888, 80
    %v1894 = vpop.permute.xlu0 %1893
    %v1895 = vmul.f32 %v1890, %v1649
    %v1896 = vmul.f32 %v1887, %v1894
    %v1897 = vadd.f32 %v1895, %v1896
    %v1898 = vtanh.pop %v1897
    %v1899 = vmul.f32 %v1892, %v1898
    %1900 = vmatprep.subr.mxu0 0.0
    %1901 = vmatpush1.msra.mxu0 %v300
    %1902 = vmatprep.subr.mxu0 0.0
    %1903 = vmatpush1.msra.mxu0 %v301
    %1904 = vmatprep.subr.mxu0 0.0
    %1905 = vmatpush1.msra.mxu0 %v302
    %1906 = vmatprep.subr.mxu0 0.0
    %1907 = vmatpush1.msra.mxu0 %v303
    %1908 = vmatprep.subr.mxu0 0.0
    %1909 = vmatpush1.msra.mxu0 %v304
    %1910 = vmatprep.subr.mxu0 0.0
    %1911 = vmatpush1.msra.mxu0 %v305
    %1912 = vmatprep.subr.mxu0 0.0
    %1913 = vmatpush1.msra.mxu0 %v306
    %1914 = vmatprep.subr.mxu0 0.0
    %1915 = vmatpush1.msra.mxu0 %v307
    %1916 = vmatprep.subr.mxu0 0.0
    %1917 = vmatpush1.msra.mxu0 %v308
    %1918 = vmatprep.subr.mxu0 0.0
    %1919 = vmatpush1.msra.mxu0 %v309
    %1920 = vmatprep.subr.mxu0 0.0
    %1921 = vmatpush1.msra.mxu0 %v310
    %1922 = vmatprep.subr.mxu0 0.0
    %1923 = vmatpush1.msra.mxu0 %v311
    %1924 = vmatprep.subr.mxu0 0.0
    %1925 = vmatpush1.msra.mxu0 %v312
    %1926 = vmatprep.subr.mxu0 0.0
    %1927 = vmatpush1.msra.mxu0 %v313
    %1928 = vmatprep.subr.mxu0 0.0
    %1929 = vmatpush1.msra.mxu0 %v314
    %1930 = vmatprep.subr.mxu0 0.0
    %1931 = vmatpush1.msra.mxu0 %v315
    %1932 = vmatprep.subr.mxu0 0.0
    %1933 = vmatpush1.msra.mxu0 0.0
    %1934 = vmatprep.subr.mxu0 0.0
    %1935 = vmatpush1.msra.mxu0 0.0
    %1936 = vmatprep.subr.mxu0 0.0
    %1937 = vmatpush1.msra.mxu0 0.0
    %1938 = vmatprep.subr.mxu0 0.0
    %1939 = vmatpush1.msra.mxu0 0.0
    %1940 = vmatprep.subr.mxu0 0.0
    %1941 = vmatpush1.msra.mxu0 0.0
    %1942 = vmatprep.subr.mxu0 0.0
    %1943 = vmatpush1.msra.mxu0 0.0
    %1944 = vmatprep.subr.mxu0 0.0
    %1945 = vmatpush1.msra.mxu0 0.0
    %1946 = vmatprep.subr.mxu0 0.0
    %1947 = vmatpush1.msra.mxu0 0.0
    %1948 = vmatprep.subr.mxu0 0.0
    %1949 = vmatpush1.msra.mxu0 0.0
    %1950 = vmatprep.subr.mxu0 0.0
    %1951 = vmatpush1.msra.mxu0 0.0
    %1952 = vmatprep.subr.mxu0 0.0
    %1953 = vmatpush1.msra.mxu0 0.0
    %1954 = vmatprep.subr.mxu0 0.0
    %1955 = vmatpush1.msra.mxu0 0.0
    %1956 = vmatprep.subr.mxu0 0.0
    %1957 = vmatpush1.msra.mxu0 0.0
    %1958 = vmatprep.subr.mxu0 0.0
    %1959 = vmatpush1.msra.mxu0 0.0
    %1960 = vmatprep.subr.mxu0 0.0
    %1961 = vmatpush1.msra.mxu0 0.0
    %1962 = vmatprep.subr.mxu0 0.0
    %1963 = vmatpush1.msra.mxu0 0.0
    %1964 = vmatprep.mubr.f32.mxu0 0.0
    %1965 = vmatmul.mubr.f32.gmra.mrb[0].mxu0 %v1810
    %v1966 = vpop.f32.mrb[0].mxu0
    %v1967 = vadd.f32 0.0, %v1966
    %v1968 = vpop.f32.mrb[0].mxu0
    %1969 = vdwg.mxu0
    %1970 = vmatprep.subr.mxu0 0.0
    %1971 = vmatpush1.msra.mxu0 %v284
    %1972 = vmatprep.subr.mxu0 0.0
    %1973 = vmatpush1.msra.mxu0 %v285
    %1974 = vmatprep.subr.mxu0 0.0
    %1975 = vmatpush1.msra.mxu0 %v286
    %1976 = vmatprep.subr.mxu0 0.0
    %1977 = vmatpush1.msra.mxu0 %v287
    %1978 = vmatprep.subr.mxu0 0.0
    %1979 = vmatpush1.msra.mxu0 %v288
    %1980 = vmatprep.subr.mxu0 0.0
    %1981 = vmatpush1.msra.mxu0 %v289
    %1982 = vmatprep.subr.mxu0 0.0
    %1983 = vmatpush1.msra.mxu0 %v290
    %1984 = vmatprep.subr.mxu0 0.0
    %1985 = vmatpush1.msra.mxu0 %v291
    %1986 = vmatprep.subr.mxu0 0.0
    %1987 = vmatpush1.msra.mxu0 %v292
    %1988 = vmatprep.subr.mxu0 0.0
    %1989 = vmatpush1.msra.mxu0 %v293
    %1990 = vmatprep.subr.mxu0 0.0
    %1991 = vmatpush1.msra.mxu0 %v294
    %1992 = vmatprep.subr.mxu0 0.0
    %1993 = vmatpush1.msra.mxu0 %v295
    %1994 = vmatprep.subr.mxu0 0.0
    %1995 = vmatpush1.msra.mxu0 %v296
    %1996 = vmatprep.subr.mxu0 0.0
    %1997 = vmatpush1.msra.mxu0 %v297
    %1998 = vmatprep.subr.mxu0 0.0
    %1999 = vmatpush1.msra.mxu0 %v298
    %2000 = vmatprep.subr.mxu0 0.0
    %2001 = vmatpush1.msra.mxu0 %v299
    %2002 = vmatprep.subr.mxu0 0.0
    %2003 = vmatpush1.msra.mxu0 0.0
    %2004 = vmatprep.subr.mxu0 0.0
    %2005 = vmatpush1.msra.mxu0 0.0
    %2006 = vmatprep.subr.mxu0 0.0
    %2007 = vmatpush1.msra.mxu0 0.0
    %2008 = vmatprep.subr.mxu0 0.0
    %2009 = vmatpush1.msra.mxu0 0.0
    %2010 = vmatprep.subr.mxu0 0.0
    %2011 = vmatpush1.msra.mxu0 0.0
    %2012 = vmatprep.subr.mxu0 0.0
    %2013 = vmatpush1.msra.mxu0 0.0
    %2014 = vmatprep.subr.mxu0 0.0
    %2015 = vmatpush1.msra.mxu0 0.0
    %2016 = vmatprep.subr.mxu0 0.0
    %2017 = vmatpush1.msra.mxu0 0.0
    %2018 = vmatprep.subr.mxu0 0.0
    %2019 = vmatpush1.msra.mxu0 0.0
    %2020 = vmatprep.subr.mxu0 0.0
    %2021 = vmatpush1.msra.mxu0 0.0
    %2022 = vmatprep.subr.mxu0 0.0
    %2023 = vmatpush1.msra.mxu0 0.0
    %2024 = vmatprep.subr.mxu0 0.0
    %2025 = vmatpush1.msra.mxu0 0.0
    %2026 = vmatprep.subr.mxu0 0.0
    %2027 = vmatpush1.msra.mxu0 0.0
    %2028 = vmatprep.subr.mxu0 0.0
    %2029 = vmatpush1.msra.mxu0 0.0
    %2030 = vmatprep.subr.mxu0 0.0
    %2031 = vmatpush1.msra.mxu0 0.0
    %2032 = vmatprep.subr.mxu0 0.0
    %2033 = vmatpush1.msra.mxu0 0.0
    %2034 = vmatprep.mubr.f32.mxu0 0.0
    %2035 = vmatmul.mubr.f32.gmra.mrb[0].mxu0 %v1899
    %v2036 = vpop.f32.mrb[0].mxu0
    %v2037 = vadd.f32 %v1967, %v2036
    %v2038 = vpop.f32.mrb[0].mxu0
    %2039 = vdwg.mxu0
    %v2040 = vadd.f32 %v2037, %v321
    %v2041 = vxor.u32 %v2040, 2147483648
    %v2042 = vmul.f32 %v2041, 1.442695
    %v2043 = vpow.pop %v2042
    %v2044 = vadd.f32 %v2043, 1.0
    %v2045 = vrcp.pop %v2044
    %v2046 = vmul.f32 1.0, %v2045
    %v2047 = vtanh.pop %v2040
    %2048 = vrot.lane.b32.xlu0 %v2046, 118
    %v2049 = vpop.permute.xlu0 %2048
    %2050 = vrot.lane.b32.xlu0 %v2046, 108
    %v2051 = vpop.permute.xlu0 %2050
    %2052 = vrot.lane.b32.xlu0 %v2047, 98
    %v2053 = vpop.permute.xlu0 %2052
    %v2054 = vmul.f32 %v2049, %v1808
    %v2055 = vmul.f32 %v2046, %v2053
    %v2056 = vadd.f32 %v2054, %v2055
    %v2057 = vtanh.pop %v2056
    %v2058 = vmul.f32 %v2051, %v2057
    %2059 = vmatprep.subr.mxu0 0.0
    %2060 = vmatpush1.msra.mxu0 %v268
    %2061 = vmatprep.subr.mxu0 0.0
    %2062 = vmatpush1.msra.mxu0 %v269
    %2063 = vmatprep.subr.mxu0 0.0
    %2064 = vmatpush1.msra.mxu0 %v270
    %2065 = vmatprep.subr.mxu0 0.0
    %2066 = vmatpush1.msra.mxu0 %v271
    %2067 = vmatprep.subr.mxu0 0.0
    %2068 = vmatpush1.msra.mxu0 %v272
    %2069 = vmatprep.subr.mxu0 0.0
    %2070 = vmatpush1.msra.mxu0 %v273
    %2071 = vmatprep.subr.mxu0 0.0
    %2072 = vmatpush1.msra.mxu0 %v274
    %2073 = vmatprep.subr.mxu0 0.0
    %2074 = vmatpush1.msra.mxu0 %v275
    %2075 = vmatprep.subr.mxu0 0.0
    %2076 = vmatpush1.msra.mxu0 %v276
    %2077 = vmatprep.subr.mxu0 0.0
    %2078 = vmatpush1.msra.mxu0 %v277
    %2079 = vmatprep.subr.mxu0 0.0
    %2080 = vmatpush1.msra.mxu0 %v278
    %2081 = vmatprep.subr.mxu0 0.0
    %2082 = vmatpush1.msra.mxu0 %v279
    %2083 = vmatprep.subr.mxu0 0.0
    %2084 = vmatpush1.msra.mxu0 %v280
    %2085 = vmatprep.subr.mxu0 0.0
    %2086 = vmatpush1.msra.mxu0 %v281
    %2087 = vmatprep.subr.mxu0 0.0
    %2088 = vmatpush1.msra.mxu0 %v282
    %2089 = vmatprep.subr.mxu0 0.0
    %2090 = vmatpush1.msra.mxu0 %v283
    %2091 = vmatprep.subr.mxu0 0.0
    %2092 = vmatpush1.msra.mxu0 0.0
    %2093 = vmatprep.subr.mxu0 0.0
    %2094 = vmatpush1.msra.mxu0 0.0
    %2095 = vmatprep.subr.mxu0 0.0
    %2096 = vmatpush1.msra.mxu0 0.0
    %2097 = vmatprep.subr.mxu0 0.0
    %2098 = vmatpush1.msra.mxu0 0.0
    %2099 = vmatprep.subr.mxu0 0.0
    %2100 = vmatpush1.msra.mxu0 0.0
    %2101 = vmatprep.subr.mxu0 0.0
    %2102 = vmatpush1.msra.mxu0 0.0
    %2103 = vmatprep.subr.mxu0 0.0
    %2104 = vmatpush1.msra.mxu0 0.0
    %2105 = vmatprep.subr.mxu0 0.0
    %2106 = vmatpush1.msra.mxu0 0.0
    %2107 = vmatprep.subr.mxu0 0.0
    %2108 = vmatpush1.msra.mxu0 0.0
    %2109 = vmatprep.subr.mxu0 0.0
    %2110 = vmatpush1.msra.mxu0 0.0
    %2111 = vmatprep.subr.mxu0 0.0
    %2112 = vmatpush1.msra.mxu0 0.0
    %2113 = vmatprep.subr.mxu0 0.0
    %2114 = vmatpush1.msra.mxu0 0.0
    %2115 = vmatprep.subr.mxu0 0.0
    %2116 = vmatpush1.msra.mxu0 0.0
    %2117 = vmatprep.subr.mxu0 0.0
    %2118 = vmatpush1.msra.mxu0 0.0
    %2119 = vmatprep.subr.mxu0 0.0
    %2120 = vmatpush1.msra.mxu0 0.0
    %2121 = vmatprep.subr.mxu0 0.0
    %2122 = vmatpush1.msra.mxu0 0.0
    %2123 = vmatprep.mubr.f32.mxu0 0.0
    %2124 = vmatmul.mubr.f32.gmra.mrb[0].mxu0 %v1899
    %v2125 = vpop.f32.mrb[0].mxu0
    %v2126 = vadd.f32 0.0, %v2125
    %v2127 = vpop.f32.mrb[0].mxu0
    %2128 = vdwg.mxu0
    %v2129 = vadd.f32 %v265, %v2126
    %v2130 = vxor.u32 %v2129, 2147483648
    %v2131 = vmul.f32 %v2130, 1.442695
    %v2132 = vpow.pop %v2131
    %v2133 = vadd.f32 %v2132, 1.0
    %v2134 = vrcp.pop %v2133
    %v2135 = vmul.f32 1.0, %v2134
    %v2136 = vtanh.pop %v2129
    %2137 = vrot.lane.b32.xlu0 %v2135, 112
    %v2138 = vpop.permute.xlu0 %2137
    %2139 = vrot.lane.b32.xlu0 %v2135, 96
    %v2140 = vpop.permute.xlu0 %2139
    %2141 = vrot.lane.b32.xlu0 %v2136, 80
    %v2142 = vpop.permute.xlu0 %2141
    %v2143 = vmul.f32 %v2138, %v1897
    %v2144 = vmul.f32 %v2135, %v2142
    %v2145 = vadd.f32 %v2143, %v2144
    %v2146 = vtanh.pop %v2145
    %v2147 = vmul.f32 %v2140, %v2146
    %2148 = vmatprep.subr.mxu0 0.0
    %2149 = vmatpush1.msra.mxu0 %v300
    %2150 = vmatprep.subr.mxu0 0.0
    %2151 = vmatpush1.msra.mxu0 %v301
    %2152 = vmatprep.subr.mxu0 0.0
    %2153 = vmatpush1.msra.mxu0 %v302
    %2154 = vmatprep.subr.mxu0 0.0
    %2155 = vmatpush1.msra.mxu0 %v303
    %2156 = vmatprep.subr.mxu0 0.0
    %2157 = vmatpush1.msra.mxu0 %v304
    %2158 = vmatprep.subr.mxu0 0.0
    %2159 = vmatpush1.msra.mxu0 %v305
    %2160 = vmatprep.subr.mxu0 0.0
    %2161 = vmatpush1.msra.mxu0 %v306
    %2162 = vmatprep.subr.mxu0 0.0
    %2163 = vmatpush1.msra.mxu0 %v307
    %2164 = vmatprep.subr.mxu0 0.0
    %2165 = vmatpush1.msra.mxu0 %v308
    %2166 = vmatprep.subr.mxu0 0.0
    %2167 = vmatpush1.msra.mxu0 %v309
    %2168 = vmatprep.subr.mxu0 0.0
    %2169 = vmatpush1.msra.mxu0 %v310
    %2170 = vmatprep.subr.mxu0 0.0
    %2171 = vmatpush1.msra.mxu0 %v311
    %2172 = vmatprep.subr.mxu0 0.0
    %2173 = vmatpush1.msra.mxu0 %v312
    %2174 = vmatprep.subr.mxu0 0.0
    %2175 = vmatpush1.msra.mxu0 %v313
    %2176 = vmatprep.subr.mxu0 0.0
    %2177 = vmatpush1.msra.mxu0 %v314
    %2178 = vmatprep.subr.mxu0 0.0
    %2179 = vmatpush1.msra.mxu0 %v315
    %2180 = vmatprep.subr.mxu0 0.0
    %2181 = vmatpush1.msra.mxu0 0.0
    %2182 = vmatprep.subr.mxu0 0.0
    %2183 = vmatpush1.msra.mxu0 0.0
    %2184 = vmatprep.subr.mxu0 0.0
    %2185 = vmatpush1.msra.mxu0 0.0
    %2186 = vmatprep.subr.mxu0 0.0
    %2187 = vmatpush1.msra.mxu0 0.0
    %2188 = vmatprep.subr.mxu0 0.0
    %2189 = vmatpush1.msra.mxu0 0.0
    %2190 = vmatprep.subr.mxu0 0.0
    %2191 = vmatpush1.msra.mxu0 0.0
    %2192 = vmatprep.subr.mxu0 0.0
    %2193 = vmatpush1.msra.mxu0 0.0
    %2194 = vmatprep.subr.mxu0 0.0
    %2195 = vmatpush1.msra.mxu0 0.0
    %2196 = vmatprep.subr.mxu0 0.0
    %2197 = vmatpush1.msra.mxu0 0.0
    %2198 = vmatprep.subr.mxu0 0.0
    %2199 = vmatpush1.msra.mxu0 0.0
    %2200 = vmatprep.subr.mxu0 0.0
    %2201 = vmatpush1.msra.mxu0 0.0
    %2202 = vmatprep.subr.mxu0 0.0
    %2203 = vmatpush1.msra.mxu0 0.0
    %2204 = vmatprep.subr.mxu0 0.0
    %2205 = vmatpush1.msra.mxu0 0.0
    %2206 = vmatprep.subr.mxu0 0.0
    %2207 = vmatpush1.msra.mxu0 0.0
    %2208 = vmatprep.subr.mxu0 0.0
    %2209 = vmatpush1.msra.mxu0 0.0
    %2210 = vmatprep.subr.mxu0 0.0
    %2211 = vmatpush1.msra.mxu0 0.0
    %2212 = vmatprep.mubr.f32.mxu0 0.0
    %2213 = vmatmul.mubr.f32.gmra.mrb[0].mxu0 %v2058
    %v2214 = vpop.f32.mrb[0].mxu0
    %v2215 = vadd.f32 0.0, %v2214
    %v2216 = vpop.f32.mrb[0].mxu0
    %2217 = vdwg.mxu0
    %2218 = vmatprep.subr.mxu0 0.0
    %2219 = vmatpush1.msra.mxu0 %v284
    %2220 = vmatprep.subr.mxu0 0.0
    %2221 = vmatpush1.msra.mxu0 %v285
    %2222 = vmatprep.subr.mxu0 0.0
    %2223 = vmatpush1.msra.mxu0 %v286
    %2224 = vmatprep.subr.mxu0 0.0
    %2225 = vmatpush1.msra.mxu0 %v287
    %2226 = vmatprep.subr.mxu0 0.0
    %2227 = vmatpush1.msra.mxu0 %v288
    %2228 = vmatprep.subr.mxu0 0.0
    %2229 = vmatpush1.msra.mxu0 %v289
    %2230 = vmatprep.subr.mxu0 0.0
    %2231 = vmatpush1.msra.mxu0 %v290
    %2232 = vmatprep.subr.mxu0 0.0
    %2233 = vmatpush1.msra.mxu0 %v291
    %2234 = vmatprep.subr.mxu0 0.0
    %2235 = vmatpush1.msra.mxu0 %v292
    %2236 = vmatprep.subr.mxu0 0.0
    %2237 = vmatpush1.msra.mxu0 %v293
    %2238 = vmatprep.subr.mxu0 0.0
    %2239 = vmatpush1.msra.mxu0 %v294
    %2240 = vmatprep.subr.mxu0 0.0
    %2241 = vmatpush1.msra.mxu0 %v295
    %2242 = vmatprep.subr.mxu0 0.0
    %2243 = vmatpush1.msra.mxu0 %v296
    %2244 = vmatprep.subr.mxu0 0.0
    %2245 = vmatpush1.msra.mxu0 %v297
    %2246 = vmatprep.subr.mxu0 0.0
    %2247 = vmatpush1.msra.mxu0 %v298
    %2248 = vmatprep.subr.mxu0 0.0
    %2249 = vmatpush1.msra.mxu0 %v299
    %2250 = vmatprep.subr.mxu0 0.0
    %2251 = vmatpush1.msra.mxu0 0.0
    %2252 = vmatprep.subr.mxu0 0.0
    %2253 = vmatpush1.msra.mxu0 0.0
    %2254 = vmatprep.subr.mxu0 0.0
    %2255 = vmatpush1.msra.mxu0 0.0
    %2256 = vmatprep.subr.mxu0 0.0
    %2257 = vmatpush1.msra.mxu0 0.0
    %2258 = vmatprep.subr.mxu0 0.0
    %2259 = vmatpush1.msra.mxu0 0.0
    %2260 = vmatprep.subr.mxu0 0.0
    %2261 = vmatpush1.msra.mxu0 0.0
    %2262 = vmatprep.subr.mxu0 0.0
    %2263 = vmatpush1.msra.mxu0 0.0
    %2264 = vmatprep.subr.mxu0 0.0
    %2265 = vmatpush1.msra.mxu0 0.0
    %2266 = vmatprep.subr.mxu0 0.0
    %2267 = vmatpush1.msra.mxu0 0.0
    %2268 = vmatprep.subr.mxu0 0.0
    %2269 = vmatpush1.msra.mxu0 0.0
    %2270 = vmatprep.subr.mxu0 0.0
    %2271 = vmatpush1.msra.mxu0 0.0
    %2272 = vmatprep.subr.mxu0 0.0
    %2273 = vmatpush1.msra.mxu0 0.0
    %2274 = vmatprep.subr.mxu0 0.0
    %2275 = vmatpush1.msra.mxu0 0.0
    %2276 = vmatprep.subr.mxu0 0.0
    %2277 = vmatpush1.msra.mxu0 0.0
    %2278 = vmatprep.subr.mxu0 0.0
    %2279 = vmatpush1.msra.mxu0 0.0
    %2280 = vmatprep.subr.mxu0 0.0
    %2281 = vmatpush1.msra.mxu0 0.0
    %2282 = vmatprep.mubr.f32.mxu0 0.0
    %2283 = vmatmul.mubr.f32.gmra.mrb[0].mxu0 %v2147
    %v2284 = vpop.f32.mrb[0].mxu0
    %v2285 = vadd.f32 %v2215, %v2284
    %v2286 = vpop.f32.mrb[0].mxu0
    %2287 = vdwg.mxu0
    %v2288 = vadd.f32 %v2285, %v321
    %v2289 = vxor.u32 %v2288, 2147483648
    %v2290 = vmul.f32 %v2289, 1.442695
    %v2291 = vpow.pop %v2290
    %v2292 = vadd.f32 %v2291, 1.0
    %v2293 = vrcp.pop %v2292
    %v2294 = vmul.f32 1.0, %v2293
    %v2295 = vtanh.pop %v2288
    %2296 = vrot.lane.b32.xlu0 %v2294, 118
    %v2297 = vpop.permute.xlu0 %2296
    %2298 = vrot.lane.b32.xlu0 %v2294, 108
    %v2299 = vpop.permute.xlu0 %2298
    %2300 = vrot.lane.b32.xlu0 %v2295, 98
    %v2301 = vpop.permute.xlu0 %2300
    %v2302 = vmul.f32 %v2297, %v2056
    %v2303 = vmul.f32 %v2294, %v2301
    %v2304 = vadd.f32 %v2302, %v2303
    %v2305 = vtanh.pop %v2304
    %v2306 = vmul.f32 %v2299, %v2305
    %v2307 = vld [vmem:[#allocation10] sm:$0xff]
    %v2308 = vld [vmem:[#allocation10 + $0x8] sm:$0xff]
    %v2309 = vld [vmem:[#allocation10 + $0x10] sm:$0xff]
    %v2310 = vld [vmem:[#allocation10 + $0x18] sm:$0xff]
    %v2311 = vld [vmem:[#allocation10 + $0x20] sm:$0xff]
    %v2312 = vld [vmem:[#allocation10 + $0x28] sm:$0xff]
    %v2313 = vld [vmem:[#allocation10 + $0x30] sm:$0xff]
    %v2314 = vld [vmem:[#allocation10 + $0x38] sm:$0xff]
    %v2315 = vld [vmem:[#allocation10 + $0x40] sm:$0xff]
    %v2316 = vld [vmem:[#allocation10 + $0x48] sm:$0xff]
    %v2317 = vld [vmem:[#allocation10 + $0x50] sm:$0xff]
    %v2318 = vld [vmem:[#allocation10 + $0x58] sm:$0xff]
    %v2319 = vld [vmem:[#allocation10 + $0x60] sm:$0xff]
    %v2320 = vld [vmem:[#allocation10 + $0x68] sm:$0xff]
    %v2321 = vld [vmem:[#allocation10 + $0x70] sm:$0xff]
    %v2322 = vld [vmem:[#allocation10 + $0x78] sm:$0xff]
    %v2323 = vld [vmem:[#allocation11] sm:$0x1]
    %v2325 = vlaneseq
    %v2326 = vshrl.u32 %v2325, 7
    %v2327 = vsub.s32 0, %v2326
    %v2328 = vrot.slane %v2323, %v2327
    %2330 = vmatprep.subr.mxu0 0.0
    %2331 = vmatpush1.msra.mxu0 %v2307
    %2332 = vmatprep.subr.mxu0 0.0
    %2333 = vmatpush1.msra.mxu0 %v2308
    %2334 = vmatprep.subr.mxu0 0.0
    %2335 = vmatpush1.msra.mxu0 %v2309
    %2336 = vmatprep.subr.mxu0 0.0
    %2337 = vmatpush1.msra.mxu0 %v2310
    %2338 = vmatprep.subr.mxu0 0.0
    %2339 = vmatpush1.msra.mxu0 %v2311
    %2340 = vmatprep.subr.mxu0 0.0
    %2341 = vmatpush1.msra.mxu0 %v2312
    %2342 = vmatprep.subr.mxu0 0.0
    %2343 = vmatpush1.msra.mxu0 %v2313
    %2344 = vmatprep.subr.mxu0 0.0
    %2345 = vmatpush1.msra.mxu0 %v2314
    %2346 = vmatprep.subr.mxu0 0.0
    %2347 = vmatpush1.msra.mxu0 %v2315
    %2348 = vmatprep.subr.mxu0 0.0
    %2349 = vmatpush1.msra.mxu0 %v2316
    %2350 = vmatprep.subr.mxu0 0.0
    %2351 = vmatpush1.msra.mxu0 %v2317
    %2352 = vmatprep.subr.mxu0 0.0
    %2353 = vmatpush1.msra.mxu0 %v2318
    %2354 = vmatprep.subr.mxu0 0.0
    %2355 = vmatpush1.msra.mxu0 %v2319
    %2356 = vmatprep.subr.mxu0 0.0
    %2357 = vmatpush1.msra.mxu0 %v2320
    %2358 = vmatprep.subr.mxu0 0.0
    %2359 = vmatpush1.msra.mxu0 %v2321
    %2360 = vmatprep.subr.mxu0 0.0
    %2361 = vmatpush1.msra.mxu0 %v2322
    %2362 = vmatprep.subr.mxu0 0.0
    %2363 = vmatpush1.msra.mxu0 0.0
    %2364 = vmatprep.subr.mxu0 0.0
    %2365 = vmatpush1.msra.mxu0 0.0
    %2366 = vmatprep.subr.mxu0 0.0
    %2367 = vmatpush1.msra.mxu0 0.0
    %2368 = vmatprep.subr.mxu0 0.0
    %2369 = vmatpush1.msra.mxu0 0.0
    %2370 = vmatprep.subr.mxu0 0.0
    %2371 = vmatpush1.msra.mxu0 0.0
    %2372 = vmatprep.subr.mxu0 0.0
    %2373 = vmatpush1.msra.mxu0 0.0
    %2374 = vmatprep.subr.mxu0 0.0
    %2375 = vmatpush1.msra.mxu0 0.0
    %2376 = vmatprep.subr.mxu0 0.0
    %2377 = vmatpush1.msra.mxu0 0.0
    %2378 = vmatprep.subr.mxu0 0.0
    %2379 = vmatpush1.msra.mxu0 0.0
    %2380 = vmatprep.subr.mxu0 0.0
    %2381 = vmatpush1.msra.mxu0 0.0
    %2382 = vmatprep.subr.mxu0 0.0
    %2383 = vmatpush1.msra.mxu0 0.0
    %2384 = vmatprep.subr.mxu0 0.0
    %2385 = vmatpush1.msra.mxu0 0.0
    %2386 = vmatprep.subr.mxu0 0.0
    %2387 = vmatpush1.msra.mxu0 0.0
    %2388 = vmatprep.subr.mxu0 0.0
    %2389 = vmatpush1.msra.mxu0 0.0
    %2390 = vmatprep.subr.mxu0 0.0
    %2391 = vmatpush1.msra.mxu0 0.0
    %2392 = vmatprep.subr.mxu0 0.0
    %2393 = vmatpush1.msra.mxu0 0.0
    %2394 = vmatprep.mubr.f32.mxu0 0.0
    %2395 = vmatmul.mubr.f32.gmra.mrb[0].mxu0 %v2306
    %v2396 = vpop.f32.mrb[0].mxu0
    %v2397 = vadd.f32 %v2328, %v2396
    %v2398 = vpop.f32.mrb[0].mxu0
    %2399 = vdwg.mxu0
    %v2400 = vmax.f32 %v2397, 0.0
    %v2401 = vld [vmem:[%s9] sm:$0xff]
    %v2402 = vld [vmem:[%s9 + $0x8] sm:$0xff]
    %v2403 = vld [vmem:[%s9 + $0x10] sm:$0xff]
    %v2404 = vld [vmem:[%s9 + $0x18] sm:$0xff]
    %v2405 = vld [vmem:[%s9 + $0x20] sm:$0xff]
    %v2406 = vld [vmem:[%s9 + $0x28] sm:$0xff]
    %v2407 = vld [vmem:[%s9 + $0x30] sm:$0xff]
    %v2408 = vld [vmem:[%s9 + $0x38] sm:$0xff]
    %v2409 = vld [vmem:[%s9 + $0x40] sm:$0xff]
    %v2410 = vld [vmem:[%s9 + $0x48] sm:$0xff]
    %v2411 = vld [vmem:[%s9 + $0x50] sm:$0xff]
    %v2412 = vld [vmem:[%s9 + $0x58] sm:$0xff]
    %v2413 = vld [vmem:[%s9 + $0x60] sm:$0xff]
    %v2414 = vld [vmem:[%s9 + $0x68] sm:$0xff]
    %v2415 = vld [vmem:[%s9 + $0x70] sm:$0xff]
    %v2416 = vld [vmem:[%s9 + $0x78] sm:$0xff]
    %v2417 = vld [vmem:[%s10] sm:$0x1]
    %v2419 = vlaneseq
    %v2420 = vshrl.u32 %v2419, 7
    %v2421 = vsub.s32 0, %v2420
    %v2422 = vrot.slane %v2417, %v2421
    %2424 = vmatprep.subr.mxu0 0.0
    %2425 = vmatpush1.msra.mxu0 %v2401
    %2426 = vmatprep.subr.mxu0 0.0
    %2427 = vmatpush1.msra.mxu0 %v2402
    %2428 = vmatprep.subr.mxu0 0.0
    %2429 = vmatpush1.msra.mxu0 %v2403
    %2430 = vmatprep.subr.mxu0 0.0
    %2431 = vmatpush1.msra.mxu0 %v2404
    %2432 = vmatprep.subr.mxu0 0.0
    %2433 = vmatpush1.msra.mxu0 %v2405
    %2434 = vmatprep.subr.mxu0 0.0
    %2435 = vmatpush1.msra.mxu0 %v2406
    %2436 = vmatprep.subr.mxu0 0.0
    %2437 = vmatpush1.msra.mxu0 %v2407
    %2438 = vmatprep.subr.mxu0 0.0
    %2439 = vmatpush1.msra.mxu0 %v2408
    %2440 = vmatprep.subr.mxu0 0.0
    %2441 = vmatpush1.msra.mxu0 %v2409
    %2442 = vmatprep.subr.mxu0 0.0
    %2443 = vmatpush1.msra.mxu0 %v2410
    %2444 = vmatprep.subr.mxu0 0.0
    %2445 = vmatpush1.msra.mxu0 %v2411
    %2446 = vmatprep.subr.mxu0 0.0
    %2447 = vmatpush1.msra.mxu0 %v2412
    %2448 = vmatprep.subr.mxu0 0.0
    %2449 = vmatpush1.msra.mxu0 %v2413
    %2450 = vmatprep.subr.mxu0 0.0
    %2451 = vmatpush1.msra.mxu0 %v2414
    %2452 = vmatprep.subr.mxu0 0.0
    %2453 = vmatpush1.msra.mxu0 %v2415
    %2454 = vmatprep.subr.mxu0 0.0
    %2455 = vmatpush1.msra.mxu0 %v2416
    %2456 = vmatprep.subr.mxu0 0.0
    %2457 = vmatpush1.msra.mxu0 0.0
    %2458 = vmatprep.subr.mxu0 0.0
    %2459 = vmatpush1.msra.mxu0 0.0
    %2460 = vmatprep.subr.mxu0 0.0
    %2461 = vmatpush1.msra.mxu0 0.0
    %2462 = vmatprep.subr.mxu0 0.0
    %2463 = vmatpush1.msra.mxu0 0.0
    %2464 = vmatprep.subr.mxu0 0.0
    %2465 = vmatpush1.msra.mxu0 0.0
    %2466 = vmatprep.subr.mxu0 0.0
    %2467 = vmatpush1.msra.mxu0 0.0
    %2468 = vmatprep.subr.mxu0 0.0
    %2469 = vmatpush1.msra.mxu0 0.0
    %2470 = vmatprep.subr.mxu0 0.0
    %2471 = vmatpush1.msra.mxu0 0.0
    %2472 = vmatprep.subr.mxu0 0.0
    %2473 = vmatpush1.msra.mxu0 0.0
    %2474 = vmatprep.subr.mxu0 0.0
    %2475 = vmatpush1.msra.mxu0 0.0
    %2476 = vmatprep.subr.mxu0 0.0
    %2477 = vmatpush1.msra.mxu0 0.0
    %2478 = vmatprep.subr.mxu0 0.0
    %2479 = vmatpush1.msra.mxu0 0.0
    %2480 = vmatprep.subr.mxu0 0.0
    %2481 = vmatpush1.msra.mxu0 0.0
    %2482 = vmatprep.subr.mxu0 0.0
    %2483 = vmatpush1.msra.mxu0 0.0
    %2484 = vmatprep.subr.mxu0 0.0
    %2485 = vmatpush1.msra.mxu0 0.0
    %2486 = vmatprep.subr.mxu0 0.0
    %2487 = vmatpush1.msra.mxu0 0.0
    %2488 = vmatprep.mubr.f32.mxu0 0.0
    %2489 = vmatmul.mubr.f32.gmra.mrb[0].mxu0 %v2400
    %v2490 = vpop.f32.mrb[0].mxu0
    %v2491 = vadd.f32 %v2422, %v2490
    %v2492 = vpop.f32.mrb[0].mxu0
    %2493 = vdwg.mxu0
    %v2494 = vxor.u32 %v2491, 2147483648
    %v2495 = vmul.f32 %v2494, 1.442695
    %v2496 = vpow.pop %v2495
    %v2497 = vadd.f32 %v2496, 1.0
    %v2498 = vrcp.pop %v2497
    %v2499 = vmul.f32 1.0, %v2498
    %2500 = vst [vmem:[#allocation13] sm:$0xff] %v2499
    // Predicated region
    $region70: #{tpu_custom_call.1} parent=1 // pred_check
      _
    $region71: #{tpu_custom_call.1} parent=1 // pred_check_branch
      %2502 = sbr.rel (0) target = $region73
    $region72: #{tpu_custom_call.1} parent=1 // pred_region
      %s2504 = ssub.s32 128, 128
      %2505 = vsyncadd [#allocation4], %s2504
      %s2507 = sshll.u32 [#allocation13], 4
      %s2508 = int_to_ptr.vmem [resolvable:$true] %s2507
      %2510 = dma.vmem_to_hbm [thread:$0]  %s2508, 128, %s11, [#allocation4]
    $region73: #{tpu_custom_call.1} parent=1 // pred_fallthru
      _
    // Predicated region
    $region74: #{tpu_custom_call.1} parent=1 // pred_check
      _
    $region75: #{tpu_custom_call.1} parent=1 // pred_check_branch
      %2512 = sbr.rel (0) target = $region77
    $region76: #{tpu_custom_call.1} parent=1 // pred_region
      %2513 = dma.done [#allocation4], 128
    $region77: #{tpu_custom_call.1} parent=1 // pred_fallthru
      _
    %2514 = vsyncpa [#allocation3], 1
    %2515 = vsyncpa [#allocation6], 1
    %2516 = vsyncpa [#allocation9], 1
    %2517 = vsyncpa [#allocation12], 1
    %2518 = vsyncpa [#allocation4], 1

</llo_original>
